<compile_context>
chip_gen: v6e
topology: v6e:2x2x1
jax: 0.10.0
libtpu: 0.0.40
codegen_flags: <defaults>
</compile_context>

<pallas_src>
import jax
import jax.numpy as jnp
from jax.experimental import pallas as pl
from jax.experimental.pallas import tpu as pltpu

NUM_FTRS = 256
IN_DIM = NUM_FTRS * 10      # 2560
HID_DIM = NUM_FTRS * 5      # 1280
NUM_CLASSES = 5
N_PAD = 128                 # pad tiny class dim up to one lane tile
TN = 640                    # hidden-dim tile -> 2 independent halves
N_TILES = HID_DIM // TN     # 2


def ecg_classifier_kernel(x_ref, w1_ref, b1_ref, w2_ref, o_ref):
    # Layer 1 for this hidden half: bf16 MXU matmul, f32 accumulation, bias, ReLU.
    h = jnp.dot(x_ref[...], w1_ref[...], preferred_element_type=jnp.float32)
    h = jnp.maximum(h + b1_ref[...], 0.0)

    # TODO(synk): nn.Dropout is identity in eval mode; training-mode dropout
    # (pltpu.prng_random_bits mask) is not implemented here.

    # Layer 2 partial contribution of this hidden half (bias added in the wrapper).
    o_ref[...] = jnp.dot(h.astype(jnp.bfloat16), w2_ref[...],
                         preferred_element_type=jnp.float32)


def prepare_params(w1, b1, w2, b2):
    """One-time parameter prep: bf16 cast + contiguous per-tile layouts + padding."""
    # W1: (2560, 1280) -> (2, 2560, 640) bf16, each tile contiguous for a single DMA.
    w1_t = (w1.astype(jnp.bfloat16)
              .reshape(IN_DIM, N_TILES, TN)
              .transpose(1, 0, 2))                                   # (2, 2560, 640)
    # b1: (1280,) -> (2, 1, 640) f32.
    b1_t = b1.astype(jnp.float32).reshape(N_TILES, TN)[:, None, :]   # (2, 1, 640)
    # W2: (1280, 5) -> zero-pad classes to 128 lanes -> (2, 640, 128) bf16.
    w2_pad = (jnp.zeros((HID_DIM, N_PAD), jnp.bfloat16)
              .at[:, :NUM_CLASSES].set(w2.astype(jnp.bfloat16)))
    w2_t = w2_pad.reshape(N_TILES, TN, N_PAD)                        # (2, 640, 128)
    # b2 stays (5,) f32; added in the wrapper after the partial-sum.
    b2_f = b2.astype(jnp.float32)
    return w1_t, b1_t, w2_t, b2_f


@jax.jit
def ecg_classifier(x, w1_t, b1_t, w2_t, b2_f):
    """x: (B, 2560) f32. Params from prepare_params. Returns logits (B, 5) f32."""
    B = x.shape[0]
    xb = x.astype(jnp.bfloat16)          # cast once, halves x DMA bytes

    cost = pl.CostEstimate(
        flops=2 * B * (IN_DIM * HID_DIM + HID_DIM * N_PAD),
        transcendentals=0,
        bytes_accessed=(xb.size * 2
                        + w1_t.size * 2 + b1_t.size * 4 + w2_t.size * 2
                        + N_TILES * B * N_PAD * 4),
    )

    grid_spec = pltpu.PrefetchScalarGridSpec(
        num_scalar_prefetch=0,
        grid=(N_TILES,),
        in_specs=[
            pl.BlockSpec((B, IN_DIM), lambda j: (0, 0)),          # x: full, resident
            pl.BlockSpec((None, IN_DIM, TN), lambda j: (j, 0, 0)),  # W1 half (contig.)
            pl.BlockSpec((None, 1, TN), lambda j: (j, 0, 0)),       # b1 half
            pl.BlockSpec((None, TN, N_PAD), lambda j: (j, 0, 0)),   # W2 half
        ],
        out_specs=pl.BlockSpec((None, B, N_PAD), lambda j: (j, 0, 0)),  # partial j
    )

    partials = pl.pallas_call(
        ecg_classifier_kernel,
        out_shape=jax.ShapeDtypeStruct((N_TILES, B, N_PAD), jnp.float32),
        grid_spec=grid_spec,
        compiler_params=pltpu.CompilerParams(
            dimension_semantics=("parallel",),   # independent halves -> megacore on v7x
            vmem_limit_bytes=32 << 20,
        ),
        cost_estimate=cost,
    )(xb, w1_t, b1_t, w2_t)

    # Combine partial layer-2 outputs, add the layer-2 bias, drop the lane padding.
    return partials.sum(axis=0)[:, :NUM_CLASSES] + b2_f


def _init_params(key):
    """Deterministic synthetic parameters matching the nn.Linear shapes."""
    k1, k2, k3, k4 = jax.random.split(key, 4)
    w1 = jax.random.normal(k1, (IN_DIM, HID_DIM), jnp.float32) * 0.02
    b1 = jax.random.normal(k2, (HID_DIM,), jnp.float32) * 0.02
    w2 = jax.random.normal(k3, (HID_DIM, NUM_CLASSES), jnp.float32) * 0.02
    b2 = jax.random.normal(k4, (NUM_CLASSES,), jnp.float32) * 0.02
    return w1, b1, w2, b2


def _reference_bf16_weights(x, w1, b1, w2, b2):
    """Same math as the kernel: bf16 weights/activations into the MXU, f32 accum."""
    xq = x.astype(jnp.bfloat16).astype(jnp.float32)
    w1q = w1.astype(jnp.bfloat16).astype(jnp.float32)
    w2q = w2.astype(jnp.bfloat16).astype(jnp.float32)
    h = jnp.maximum(xq @ w1q + b1, 0.0)
    hq = h.astype(jnp.bfloat16).astype(jnp.float32)
    return hq @ w2q + b2


if __name__ == "__main__":
    key = jax.random.PRNGKey(0)
    kx, kp = jax.random.split(key)
    B = 2
    x = jax.random.normal(kx, (B, IN_DIM), jnp.float32)
    w1, b1, w2, b2 = _init_params(kp)

    params = prepare_params(w1, b1, w2, b2)   # one-time prep, hoisted out of the call
    out = ecg_classifier(x, *params)
    out = jax.block_until_ready(out)

    ref = _reference_bf16_weights(x, w1, b1, w2, b2)
    assert out.shape == (B, NUM_CLASSES)
    assert jnp.allclose(out, ref, atol=1e-2, rtol=1e-2)
    print("KERNEL_OK")
</pallas_src>

<mosaic_0001>
module attributes {stable_mosaic.version = 11 : i64} {
  func.func @ecg_classifier_kernel(%arg0: i32, %arg1: memref<2x2560xbf16, #tpu.memory_space<vmem>>, %arg2: memref<1x2560x640xbf16, #tpu.memory_space<vmem>>, %arg3: memref<1x1x640xf32, #tpu.memory_space<vmem>>, %arg4: memref<1x640x128xbf16, #tpu.memory_space<vmem>>, %arg5: memref<1x2x128xf32, #tpu.memory_space<vmem>>) attributes {dimension_semantics = [#tpu.dimension_semantics<parallel>], iteration_bounds = array<i64: 2>, scalar_prefetch = 0 : i64, scratch_operands = 0 : i64, tpu.core_type = #tpu.core_type<tc>, window_params = [{pipeline_mode = #tpu.pipeline_mode<synchronous>, transform_indices = @transform_0, window_bounds = array<i64: 2, 2560>}, {transform_indices = @transform_1, window_bounds = array<i64: 1, 2560, 640>}, {transform_indices = @transform_2, window_bounds = array<i64: 1, 1, 640>}, {transform_indices = @transform_3, window_bounds = array<i64: 1, 640, 128>}, {transform_indices = @transform_4, window_bounds = array<i64: 1, 2, 128>}]} {
    %c0 = arith.constant 0 : index
    %c0_0 = arith.constant 0 : index
    %0 = vector.load %arg1[%c0, %c0_0] : memref<2x2560xbf16, #tpu.memory_space<vmem>>, vector<2x2560xbf16>
    %c0_1 = arith.constant 0 : index
    %c0_2 = arith.constant 0 : index
    %c0_3 = arith.constant 0 : index
    %1 = vector.load %arg2[%c0_1, %c0_2, %c0_3] : memref<1x2560x640xbf16, #tpu.memory_space<vmem>>, vector<1x2560x640xbf16>
    %2 = vector.shape_cast %1 : vector<1x2560x640xbf16> to vector<2560x640xbf16>
    %cst = arith.constant dense<0.000000e+00> : vector<2x640xf32>
    %3 = tpu.matmul %0, %2, %cst {dimension_numbers = #tpu.dot_dimension_numbers<[1], [0], [0], [1], [0, 0, 1, 1], [], []>} : vector<2x2560xbf16>, vector<2560x640xbf16>, vector<2x640xf32> -> vector<2x640xf32>
    %c0_4 = arith.constant 0 : index
    %c0_5 = arith.constant 0 : index
    %c0_6 = arith.constant 0 : index
    %4 = vector.load %arg3[%c0_4, %c0_5, %c0_6] : memref<1x1x640xf32, #tpu.memory_space<vmem>>, vector<1x1x640xf32>
    %5 = vector.shape_cast %4 : vector<1x1x640xf32> to vector<1x640xf32>
    %6 = vector.broadcast %5 : vector<1x640xf32> to vector<2x640xf32>
    %7 = arith.addf %3, %6 : vector<2x640xf32>
    %cst_7 = arith.constant 0.000000e+00 : f32
    %8 = vector.broadcast %cst_7 : f32 to vector<2x640xf32>
    %9 = arith.maximumf %7, %8 : vector<2x640xf32>
    %10 = arith.truncf %9 : vector<2x640xf32> to vector<2x640xbf16>
    %c0_8 = arith.constant 0 : index
    %c0_9 = arith.constant 0 : index
    %c0_10 = arith.constant 0 : index
    %11 = vector.load %arg4[%c0_8, %c0_9, %c0_10] : memref<1x640x128xbf16, #tpu.memory_space<vmem>>, vector<1x640x128xbf16>
    %12 = vector.shape_cast %11 : vector<1x640x128xbf16> to vector<640x128xbf16>
    %cst_11 = arith.constant dense<0.000000e+00> : vector<2x128xf32>
    %13 = tpu.matmul %10, %12, %cst_11 {dimension_numbers = #tpu.dot_dimension_numbers<[1], [0], [0], [1], [0, 0, 1, 1], [], []>} : vector<2x640xbf16>, vector<640x128xbf16>, vector<2x128xf32> -> vector<2x128xf32>
    %c0_12 = arith.constant 0 : index
    %c0_13 = arith.constant 0 : index
    %c0_14 = arith.constant 0 : index
    %14 = vector.load %arg5[%c0_12, %c0_13, %c0_14] : memref<1x2x128xf32, #tpu.memory_space<vmem>>, vector<1x2x128xf32>
    %15 = vector.shape_cast %14 : vector<1x2x128xf32> to vector<2x128xf32>
    %16 = vector.shape_cast %13 : vector<2x128xf32> to vector<1x2x128xf32>
    tpu.vector_store %arg5[%c0_12, %c0_13, %c0_14], %16 {strides = array<i32>} : memref<1x2x128xf32, #tpu.memory_space<vmem>>, vector<1x2x128xf32>,
    return
  }
  func.func @transform_0(%arg0: i32) -> (i32, i32) {
    %c0_i32 = arith.constant 0 : i32
    %c0_i32_0 = arith.constant 0 : i32
    %c0_i32_1 = arith.constant 0 : i32
    return %c0_i32, %c0_i32_0 : i32, i32
  }
  func.func @transform_1(%arg0: i32) -> (i32, i32, i32) {
    %c0_i32 = arith.constant 0 : i32
    %c0_i32_0 = arith.constant 0 : i32
    %c0_i32_1 = arith.constant 0 : i32
    return %arg0, %c0_i32, %c0_i32_0 : i32, i32, i32
  }
  func.func @transform_2(%arg0: i32) -> (i32, i32, i32) {
    %c0_i32 = arith.constant 0 : i32
    %c0_i32_0 = arith.constant 0 : i32
    %c0_i32_1 = arith.constant 0 : i32
    return %arg0, %c0_i32, %c0_i32_0 : i32, i32, i32
  }
  func.func @transform_3(%arg0: i32) -> (i32, i32, i32) {
    %c0_i32 = arith.constant 0 : i32
    %c0_i32_0 = arith.constant 0 : i32
    %c0_i32_1 = arith.constant 0 : i32
    return %arg0, %c0_i32, %c0_i32_0 : i32, i32, i32
  }
  func.func @transform_4(%arg0: i32) -> (i32, i32, i32) {
    %c0_i32 = arith.constant 0 : i32
    %c0_i32_0 = arith.constant 0 : i32
    %c0_i32_1 = arith.constant 0 : i32
    return %arg0, %c0_i32, %c0_i32_0 : i32, i32, i32
  }
}

</mosaic_0001>

<llo_original>
// kernel: ecg_classifier.1
$region0: #{ecg_classifier.1}
  #allocation0 [shape = 'u32[]', space=smem, size = 0x4, offset = 0x4, fixed_abs, tag = 'smem constant byte address 0x4 - core index']
  #allocation1 [shape = 'u32[144,128]{1,0:T(1,128)}', space=vmem, size = 0x12000, scoped, tag = 'internal scratch']
  %s0 = inlined_call_operand.vmem [shape: bf16[2,2560], index: 0, kind: input, shape index: {}]
  %s1 = inlined_call_operand.hbm [shape: bf16[2,2560,640], index: 1, kind: input, shape index: {}]
  %s2 = inlined_call_operand.hbm [shape: f32[2,1,640], index: 2, kind: input, shape index: {}]
  %s3 = inlined_call_operand.hbm [shape: bf16[2,640,128], index: 3, kind: input, shape index: {}]
  %s4 = inlined_call_operand.vmem [shape: f32[2,2,128], index: 4, kind: output, shape index: {}]
  %s5 = sld [smem:[#allocation0]]
  $region61: #{ecg_classifier.1} parent=0
    _
  %s7 = ssub.s32 1, %s5
  %s8 = scalar_select 0, %s7, %s5
  $region1: #{ecg_classifier.1} parent=0
    #allocation2 [shape = 'u8[6553600]{0}', space=vmem, size = 0x640000, scoped, tag = 'input window, operand 1']
    #allocation3 [shape = 's32[2]{0}', space=sflag, size = 0x8, scoped, tag = 'scoped memory for ecg_classifier.1']
    #allocation4 [shape = 'u8[5120]{0}', space=vmem, size = 0x1400, scoped, tag = 'input window, operand 2']
    #allocation5 [shape = 's32[2]{0}', space=sflag, size = 0x8, scoped, tag = 'scoped memory for ecg_classifier.1']
    #allocation6 [shape = 'u8[327680]{0}', space=vmem, size = 0x50000, scoped, tag = 'input window, operand 3']
    %9 = vsyncpa [#allocation3], 0
    %s10 = scalar_lea.sflag [#allocation3], 1
    %11 = vsyncpa %s10, 0
    %12 = vsyncpa [#allocation5], 0
    %s13 = scalar_lea.sflag [#allocation5], 1
    %14 = vsyncpa %s13, 0
    loop: start=0, step=1, limit=4
    $region2: #{ecg_classifier.1} parent=1 // loop_pre_header
      _
    $region3: #{ecg_classifier.1} parent=1 // loop_header
      %s16 = sphi 0, %s20
      %p17 = scmp.ge.s32.totalorder %s16, 4
      %s24 = sphi 0, %s24
      %s26 = sphi 0, %s24
      %s27 = sphi 0, %s26
      %s41 = sphi 0, %s27
      %s47 = sphi 0, %s49
      %s50 = sphi 0, %s47
      %s51 = sphi 0, %s50
      %s67 = sphi 0, %s51
      %s73 = sphi 0, %s75
      %s76 = sphi 0, %s73
      %s77 = sphi 0, %s76
      %s93 = sphi 0, %s77
      %s99 = sphi 0, %s101
      %s102 = sphi 0, %s99
      %s103 = sphi 0, %s102
      %s119 = sphi 0, %s103
      %s125 = sphi 0, %s127
      %s128 = sphi 0, %s125
      %s129 = sphi 0, %s128
      %s145 = sphi 0, %s129
    $region4: #{ecg_classifier.1} parent=1 // loop_header_branch
      %19 = sbr.rel (%p17) target = $region8
    $region5: #{ecg_classifier.1} parent=1 // loop_body
      %s21 = ssub.s32 %s16, 1
      %s22 = ssub.s32 %s16, 2
      %s23 = sadd.s32 %s16, 1
      %s25 = sadd.s32 %s24, 1
      %p28 = scmp.eq.s32.totalorder %s16, 1
      %p29 = scmp.ne.s32.totalorder %s24, %s26
      %p30 = scmp.eq.s32.totalorder %s16, 0
      %p31 = por %p29, %p30
      %p32 = scmp.ne.s32.totalorder %s24, %s26
      %p33 = scmp.eq.s32.totalorder %s21, 1
      %p34 = por %p32, %p33
      %p35 = scmp.ne.s32.totalorder %s26, %s27
      %p36 = scmp.eq.s32.totalorder %s21, 0
      %p37 = por %p35, %p36
      %p38 = scmp.ne.s32.totalorder %s26, %s27
      %p39 = scmp.eq.s32.totalorder %s22, 1
      %p40 = por %p38, %p39
      %p42 = scmp.ne.s32.totalorder %s27, %s41
      %p43 = scmp.eq.s32.totalorder %s22, 0
      %p44 = por %p42, %p43
      %s45 = ssub.s32 %s16, %s23
      %p46 = scmp.eq.s32.totalorder %s45, 0
      %s48 = sadd.s32 %s47, 1
      %s49 = scalar_select %p46, %s47, %s48
      %p52 = pneg %p46
      %p53 = scmp.eq.s32.totalorder %s16, 1
      %p54 = por %p52, %p53
      %p55 = scmp.ne.s32.totalorder %s47, %s50
      %p56 = scmp.eq.s32.totalorder %s16, 0
      %p57 = por %p55, %p56
      %p58 = scmp.ne.s32.totalorder %s47, %s50
      %p59 = scmp.eq.s32.totalorder %s21, 1
      %p60 = por %p58, %p59
      %p61 = scmp.ne.s32.totalorder %s50, %s51
      %p62 = scmp.eq.s32.totalorder %s21, 0
      %p63 = por %p61, %p62
      %p64 = scmp.ne.s32.totalorder %s50, %s51
      %p65 = scmp.eq.s32.totalorder %s22, 1
      %p66 = por %p64, %p65
      %p68 = scmp.ne.s32.totalorder %s51, %s67
      %p69 = scmp.eq.s32.totalorder %s22, 0
      %p70 = por %p68, %p69
      %s71 = ssub.s32 %s16, %s23
      %p72 = scmp.eq.s32.totalorder %s71, 0
      %s74 = sadd.s32 %s73, 1
      %s75 = scalar_select %p72, %s73, %s74
      %p78 = pneg %p72
      %p79 = scmp.eq.s32.totalorder %s16, 1
      %p80 = por %p78, %p79
      %p81 = scmp.ne.s32.totalorder %s73, %s76
      %p82 = scmp.eq.s32.totalorder %s16, 0
      %p83 = por %p81, %p82
      %p84 = scmp.ne.s32.totalorder %s73, %s76
      %p85 = scmp.eq.s32.totalorder %s21, 1
      %p86 = por %p84, %p85
      %p87 = scmp.ne.s32.totalorder %s76, %s77
      %p88 = scmp.eq.s32.totalorder %s21, 0
      %p89 = por %p87, %p88
      %p90 = scmp.ne.s32.totalorder %s76, %s77
      %p91 = scmp.eq.s32.totalorder %s22, 1
      %p92 = por %p90, %p91
      %p94 = scmp.ne.s32.totalorder %s77, %s93
      %p95 = scmp.eq.s32.totalorder %s22, 0
      %p96 = por %p94, %p95
      %s97 = ssub.s32 %s16, %s23
      %p98 = scmp.eq.s32.totalorder %s97, 0
      %s100 = sadd.s32 %s99, 1
      %s101 = scalar_select %p98, %s99, %s100
      %p104 = pneg %p98
      %p105 = scmp.eq.s32.totalorder %s16, 1
      %p106 = por %p104, %p105
      %p107 = scmp.ne.s32.totalorder %s99, %s102
      %p108 = scmp.eq.s32.totalorder %s16, 0
      %p109 = por %p107, %p108
      %p110 = scmp.ne.s32.totalorder %s99, %s102
      %p111 = scmp.eq.s32.totalorder %s21, 1
      %p112 = por %p110, %p111
      %p113 = scmp.ne.s32.totalorder %s102, %s103
      %p114 = scmp.eq.s32.totalorder %s21, 0
      %p115 = por %p113, %p114
      %p116 = scmp.ne.s32.totalorder %s102, %s103
      %p117 = scmp.eq.s32.totalorder %s22, 1
      %p118 = por %p116, %p117
      %p120 = scmp.ne.s32.totalorder %s103, %s119
      %p121 = scmp.eq.s32.totalorder %s22, 0
      %p122 = por %p120, %p121
      %s123 = ssub.s32 %s16, %s23
      %p124 = scmp.eq.s32.totalorder %s123, 0
      %s126 = sadd.s32 %s125, 1
      %s127 = scalar_select %p124, %s125, %s126
      %p130 = pneg %p124
      %p131 = scmp.eq.s32.totalorder %s16, 1
      %p132 = por %p130, %p131
      %p133 = scmp.ne.s32.totalorder %s125, %s128
      %p134 = scmp.eq.s32.totalorder %s16, 0
      %p135 = por %p133, %p134
      %p136 = scmp.ne.s32.totalorder %s125, %s128
      %p137 = scmp.eq.s32.totalorder %s21, 1
      %p138 = por %p136, %p137
      %p139 = scmp.ne.s32.totalorder %s128, %s129
      %p140 = scmp.eq.s32.totalorder %s21, 0
      %p141 = por %p139, %p140
      %p142 = scmp.ne.s32.totalorder %s128, %s129
      %p143 = scmp.eq.s32.totalorder %s22, 1
      %p144 = por %p142, %p143
      %p146 = scmp.ne.s32.totalorder %s129, %s145
      %p147 = scmp.eq.s32.totalorder %s22, 0
      %p148 = por %p146, %p147
      %p149 = scmp.le.s32.totalorder 1, %s16
      %p150 = scmp.lt.s32.totalorder %s16, 3
      %p151 = pnand %p149, %p150
      %p152 = pneg %p151
      // Predicated region
      $region9: #{ecg_classifier.1} parent=5 // pred_check
        _
      $region10: #{ecg_classifier.1} parent=5 // pred_check_branch
        %154 = sbr.rel (%p151) target = $region12
      $region11: #{ecg_classifier.1} parent=5 // pred_region
        %s155 = ssub.s32 %s16, 1
        // Predicated region
        $region13: #{ecg_classifier.1} parent=11 // pred_check
          %p156 = pneg %p37
        $region14: #{ecg_classifier.1} parent=11 // pred_check_branch
          %158 = sbr.rel (%p156) target = $region16
        $region15: #{ecg_classifier.1} parent=11 // pred_region
          _
        $region16: #{ecg_classifier.1} parent=11 // pred_fallthru
          _
      $region12: #{ecg_classifier.1} parent=5 // pred_fallthru
        _
      %p159 = scmp.lt.s32.totalorder %s16, 2
      // Predicated region
      $region17: #{ecg_classifier.1} parent=5 // pred_check
        %p160 = pneg %p159
      $region18: #{ecg_classifier.1} parent=5 // pred_check_branch
        %162 = sbr.rel (%p160) target = $region20
      $region19: #{ecg_classifier.1} parent=5 // pred_region
        // Predicated region
        $region21: #{ecg_classifier.1} parent=19 // pred_check
          %p163 = pneg %p57
        $region22: #{ecg_classifier.1} parent=19 // pred_check_branch
          %165 = sbr.rel (%p163) target = $region24
        $region23: #{ecg_classifier.1} parent=19 // pred_region
          %s166 = sand.u32 %s47, 1
          %s167 = scalar_lea.sflag [#allocation3], %s166
          %s168 = sand.u32 %s47, 1
          %s169 = smul.addr %s168, 6400
          %s170 = scalar_lea.vmem [#allocation2], %s169
          %s172 = ssub.s32 102400, 102400
          %173 = vsyncadd %s167, %s172
          %s174 = smul.addr %s16, 1600
          %s175 = smul.addr %s174, 64
          %s176 = scalar_lea.hbm %s1, %s175
          %s177 = sshll.u32 %s170, 4
          %s178 = int_to_ptr.vmem [resolvable:$true] %s177
          %183 = dma.hbm_to_vmem [thread:$0]  %s176, 102400, %s178, %s167, 320, 320, 20
        $region24: #{ecg_classifier.1} parent=19 // pred_fallthru
          _
        // Predicated region
        $region25: #{ecg_classifier.1} parent=19 // pred_check
          %p184 = pneg %p83
        $region26: #{ecg_classifier.1} parent=19 // pred_check_branch
          %186 = sbr.rel (%p184) target = $region28
        $region27: #{ecg_classifier.1} parent=19 // pred_region
          %s187 = sand.u32 %s16, 1
          %s188 = scalar_lea.sflag [#allocation5], %s187
          %s189 = sand.u32 %s73, 1
          %s190 = smul.addr %s189, 5
          %s191 = scalar_lea.vmem [#allocation4], %s190
          %s193 = ssub.s32 80, 80
          %194 = vsyncadd %s188, %s193
          %s195 = smul.addr %s16, 5
          %s196 = smul.addr %s195, 16
          %s197 = scalar_lea.hbm %s2, %s196
          %s199 = sshll.u32 %s191, 4
          %s200 = int_to_ptr.vmem [resolvable:$true] %s199
          %202 = dma.hbm_to_vmem [thread:$0]  %s197, 80, %s200, %s188
        $region28: #{ecg_classifier.1} parent=19 // pred_fallthru
          _
        // Predicated region
        $region29: #{ecg_classifier.1} parent=19 // pred_check
          %p203 = pneg %p109
        $region30: #{ecg_classifier.1} parent=19 // pred_check_branch
          %205 = sbr.rel (%p203) target = $region32
        $region31: #{ecg_classifier.1} parent=19 // pred_region
          %s206 = sand.u32 %s16, 1
          %s207 = scalar_lea.sflag [#allocation5], %s206
          %s208 = sand.u32 %s99, 1
          %s209 = smul.addr %s208, 320
          %s210 = scalar_lea.vmem [#allocation6], %s209
          %s212 = ssub.s32 5120, 5120
          %213 = vsyncadd %s207, %s212
          %s214 = smul.addr %s16, 80
          %s215 = smul.addr %s214, 64
          %s216 = scalar_lea.hbm %s3, %s215
          %s217 = sshll.u32 %s210, 4
          %s218 = int_to_ptr.vmem [resolvable:$true] %s217
          %223 = dma.hbm_to_vmem [thread:$0]  %s216, 5120, %s218, %s207, 64, 64, 4
        $region32: #{ecg_classifier.1} parent=19 // pred_fallthru
          _
      $region20: #{ecg_classifier.1} parent=5 // pred_fallthru
        _
      %p224 = scmp.le.s32.totalorder 1, %s16
      %p225 = scmp.lt.s32.totalorder %s16, 3
      %p226 = pnand %p224, %p225
      %p227 = pneg %p226
      // Predicated region
      $region33: #{ecg_classifier.1} parent=5 // pred_check
        _
      $region34: #{ecg_classifier.1} parent=5 // pred_check_branch
        %229 = sbr.rel (%p226) target = $region36
      $region35: #{ecg_classifier.1} parent=5 // pred_region
        %s230 = ssub.s32 %s16, 1
        %s231 = sand.u32 %s50, 1
        %s232 = scalar_lea.sflag [#allocation3], %s231
        %s233 = sand.u32 %s50, 1
        %s234 = smul.addr %s233, 6400
        %s235 = scalar_lea.vmem [#allocation2], %s234
        // Predicated region
        $region37: #{ecg_classifier.1} parent=35 // pred_check
          %p236 = pneg %p63
        $region38: #{ecg_classifier.1} parent=35 // pred_check_branch
          %238 = sbr.rel (%p236) target = $region40
        $region39: #{ecg_classifier.1} parent=35 // pred_region
          %239 = dma.done %s232, 102400
        $region40: #{ecg_classifier.1} parent=35 // pred_fallthru
          _
        %s240 = sand.u32 %s21, 1
        %s241 = scalar_lea.sflag [#allocation5], %s240
        %s242 = sand.u32 %s76, 1
        %s243 = smul.addr %s242, 5
        %s244 = scalar_lea.vmem [#allocation4], %s243
        // Predicated region
        $region41: #{ecg_classifier.1} parent=35 // pred_check
          %p245 = pneg %p89
        $region42: #{ecg_classifier.1} parent=35 // pred_check_branch
          %247 = sbr.rel (%p245) target = $region44
        $region43: #{ecg_classifier.1} parent=35 // pred_region
          %248 = dma.done %s241, 80
        $region44: #{ecg_classifier.1} parent=35 // pred_fallthru
          _
        %s249 = sand.u32 %s21, 1
        %s250 = scalar_lea.sflag [#allocation5], %s249
        %s251 = sand.u32 %s102, 1
        %s252 = smul.addr %s251, 320
        %s253 = scalar_lea.vmem [#allocation6], %s252
        // Predicated region
        $region45: #{ecg_classifier.1} parent=35 // pred_check
          %p254 = pneg %p115
        $region46: #{ecg_classifier.1} parent=35 // pred_check_branch
          %256 = sbr.rel (%p254) target = $region48
        $region47: #{ecg_classifier.1} parent=35 // pred_region
          %257 = dma.done %s250, 5120
        $region48: #{ecg_classifier.1} parent=35 // pred_fallthru
          _
        %p258 = pneg %p37
        %p259 = pneg %p34
        %s260 = sand.u32 %s50, 1
        %s261 = scalar_lea.sflag [#allocation3], %s260
        %s262 = sand.u32 %s50, 1
        %s263 = smul.addr %s262, 6400
        %s264 = scalar_lea.vmem [#allocation2], %s263
        %p265 = pneg %p63
        %p266 = pneg %p60
        %s267 = sand.u32 %s21, 1
        %s268 = scalar_lea.sflag [#allocation5], %s267
        %s269 = sand.u32 %s76, 1
        %s270 = smul.addr %s269, 5
        %s271 = scalar_lea.vmem [#allocation4], %s270
        %p272 = pneg %p89
        %p273 = pneg %p86
        %s274 = sand.u32 %s21, 1
        %s275 = scalar_lea.sflag [#allocation5], %s274
        %s276 = sand.u32 %s102, 1
        %s277 = smul.addr %s276, 320
        %s278 = scalar_lea.vmem [#allocation6], %s277
        %p279 = pneg %p115
        %p280 = pneg %p112
        %p281 = pneg %p141
        %p282 = pneg %p138
        %p283 = scmp.lt.s32.totalorder %s21, 1
        %s284 = scalar_select %p283, %s21, 1
        %s285 = smul.addr %s284, 2
        %s286 = scalar_lea.vmem %s4, %s285
        %p287 = scmp.lt.s32.totalorder %s21, 1
        %s288 = scalar_select %p287, %s21, 1
        %s289 = smul.addr %s288, 2
        %s290 = scalar_lea.vmem %s4, %s289
        %v292 = vld [vmem:[%s0] sm:$0xff]
        %v293 = vld [vmem:[%s0 + $0x8] sm:$0xff]
        %v294 = vld [vmem:[%s0 + $0x10] sm:$0xf]
        %v295 = vld [vmem:[%s235] sm:$0xff]
        %v296 = vld [vmem:[%s235 + $0x8] sm:$0xff]
        %v297 = vld [vmem:[%s235 + $0x10] sm:$0xf]
        %v298 = vld [vmem:[%s235 + $0x14] sm:$0xff]
        %v299 = vld [vmem:[%s235 + $0x1c] sm:$0xff]
        %v300 = vld [vmem:[%s235 + $0x24] sm:$0xf]
        %v301 = vld [vmem:[%s235 + $0x28] sm:$0xff]
        %v302 = vld [vmem:[%s235 + $0x30] sm:$0xff]
        %v303 = vld [vmem:[%s235 + $0x38] sm:$0xf]
        %v304 = vld [vmem:[%s235 + $0x3c] sm:$0xff]
        %v305 = vld [vmem:[%s235 + $0x44] sm:$0xff]
        %v306 = vld [vmem:[%s235 + $0x4c] sm:$0xf]
        %v307 = vld [vmem:[%s235 + $0x50] sm:$0xff]
        %v308 = vld [vmem:[%s235 + $0x58] sm:$0xff]
        %v309 = vld [vmem:[%s235 + $0x60] sm:$0xf]
        %v310 = vld [vmem:[%s235 + $0x64] sm:$0xff]
        %v311 = vld [vmem:[%s235 + $0x6c] sm:$0xff]
        %v312 = vld [vmem:[%s235 + $0x74] sm:$0xf]
        %v313 = vld [vmem:[%s235 + $0x78] sm:$0xff]
        %v314 = vld [vmem:[%s235 + $0x80] sm:$0xff]
        %v315 = vld [vmem:[%s235 + $0x88] sm:$0xf]
        %v316 = vld [vmem:[%s235 + $0x8c] sm:$0xff]
        %v317 = vld [vmem:[%s235 + $0x94] sm:$0xff]
        %v318 = vld [vmem:[%s235 + $0x9c] sm:$0xf]
        %v319 = vld [vmem:[%s235 + $0xa0] sm:$0xff]
        %v320 = vld [vmem:[%s235 + $0xa8] sm:$0xff]
        %v321 = vld [vmem:[%s235 + $0xb0] sm:$0xf]
        %v322 = vld [vmem:[%s235 + $0xb4] sm:$0xff]
        %v323 = vld [vmem:[%s235 + $0xbc] sm:$0xff]
        %v324 = vld [vmem:[%s235 + $0xc4] sm:$0xf]
        %v325 = vld [vmem:[%s235 + $0xc8] sm:$0xff]
        %v326 = vld [vmem:[%s235 + $0xd0] sm:$0xff]
        %v327 = vld [vmem:[%s235 + $0xd8] sm:$0xf]
        %v328 = vld [vmem:[%s235 + $0xdc] sm:$0xff]
        %v329 = vld [vmem:[%s235 + $0xe4] sm:$0xff]
        %v330 = vld [vmem:[%s235 + $0xec] sm:$0xf]
        %v331 = vld [vmem:[%s235 + $0xf0] sm:$0xff]
        %v332 = vld [vmem:[%s235 + $0xf8] sm:$0xff]
        %v333 = vld [vmem:[%s235 + $0x100] sm:$0xf]
        %v334 = vld [vmem:[%s235 + $0x104] sm:$0xff]
        %v335 = vld [vmem:[%s235 + $0x10c] sm:$0xff]
        %v336 = vld [vmem:[%s235 + $0x114] sm:$0xf]
        %v337 = vld [vmem:[%s235 + $0x118] sm:$0xff]
        %v338 = vld [vmem:[%s235 + $0x120] sm:$0xff]
        %v339 = vld [vmem:[%s235 + $0x128] sm:$0xf]
        %v340 = vld [vmem:[%s235 + $0x12c] sm:$0xff]
        %v341 = vld [vmem:[%s235 + $0x134] sm:$0xff]
        %v342 = vld [vmem:[%s235 + $0x13c] sm:$0xf]
        %v343 = vld [vmem:[%s235 + $0x140] sm:$0xff]
        %v344 = vld [vmem:[%s235 + $0x148] sm:$0xff]
        %v345 = vld [vmem:[%s235 + $0x150] sm:$0xf]
        %v346 = vld [vmem:[%s235 + $0x154] sm:$0xff]
        %v347 = vld [vmem:[%s235 + $0x15c] sm:$0xff]
        %v348 = vld [vmem:[%s235 + $0x164] sm:$0xf]
        %v349 = vld [vmem:[%s235 + $0x168] sm:$0xff]
        %v350 = vld [vmem:[%s235 + $0x170] sm:$0xff]
        %v351 = vld [vmem:[%s235 + $0x178] sm:$0xf]
        %v352 = vld [vmem:[%s235 + $0x17c] sm:$0xff]
        %v353 = vld [vmem:[%s235 + $0x184] sm:$0xff]
        %v354 = vld [vmem:[%s235 + $0x18c] sm:$0xf]
        %v355 = vld [vmem:[%s235 + $0x190] sm:$0xff]
        %v356 = vld [vmem:[%s235 + $0x198] sm:$0xff]
        %v357 = vld [vmem:[%s235 + $0x1a0] sm:$0xf]
        %v358 = vld [vmem:[%s235 + $0x1a4] sm:$0xff]
        %v359 = vld [vmem:[%s235 + $0x1ac] sm:$0xff]
        %v360 = vld [vmem:[%s235 + $0x1b4] sm:$0xf]
        %v361 = vld [vmem:[%s235 + $0x1b8] sm:$0xff]
        %v362 = vld [vmem:[%s235 + $0x1c0] sm:$0xff]
        %v363 = vld [vmem:[%s235 + $0x1c8] sm:$0xf]
        %v364 = vld [vmem:[%s235 + $0x1cc] sm:$0xff]
        %v365 = vld [vmem:[%s235 + $0x1d4] sm:$0xff]
        %v366 = vld [vmem:[%s235 + $0x1dc] sm:$0xf]
        %v367 = vld [vmem:[%s235 + $0x1e0] sm:$0xff]
        %v368 = vld [vmem:[%s235 + $0x1e8] sm:$0xff]
        %v369 = vld [vmem:[%s235 + $0x1f0] sm:$0xf]
        %v370 = vld [vmem:[%s235 + $0x1f4] sm:$0xff]
        %v371 = vld [vmem:[%s235 + $0x1fc] sm:$0xff]
        %v372 = vld [vmem:[%s235 + $0x204] sm:$0xf]
        %v373 = vld [vmem:[%s235 + $0x208] sm:$0xff]
        %v374 = vld [vmem:[%s235 + $0x210] sm:$0xff]
        %v375 = vld [vmem:[%s235 + $0x218] sm:$0xf]
        %v376 = vld [vmem:[%s235 + $0x21c] sm:$0xff]
        %v377 = vld [vmem:[%s235 + $0x224] sm:$0xff]
        %v378 = vld [vmem:[%s235 + $0x22c] sm:$0xf]
        %v379 = vld [vmem:[%s235 + $0x230] sm:$0xff]
        %v380 = vld [vmem:[%s235 + $0x238] sm:$0xff]
        %v381 = vld [vmem:[%s235 + $0x240] sm:$0xf]
        %v382 = vld [vmem:[%s235 + $0x244] sm:$0xff]
        %v383 = vld [vmem:[%s235 + $0x24c] sm:$0xff]
        %v384 = vld [vmem:[%s235 + $0x254] sm:$0xf]
        %v385 = vld [vmem:[%s235 + $0x258] sm:$0xff]
        %v386 = vld [vmem:[%s235 + $0x260] sm:$0xff]
        %v387 = vld [vmem:[%s235 + $0x268] sm:$0xf]
        %v388 = vld [vmem:[%s235 + $0x26c] sm:$0xff]
        %v389 = vld [vmem:[%s235 + $0x274] sm:$0xff]
        %v390 = vld [vmem:[%s235 + $0x27c] sm:$0xf]
        %v391 = vld [vmem:[%s235 + $0x280] sm:$0xff]
        %v392 = vld [vmem:[%s235 + $0x288] sm:$0xff]
        %v393 = vld [vmem:[%s235 + $0x290] sm:$0xf]
        %v394 = vld [vmem:[%s235 + $0x294] sm:$0xff]
        %v395 = vld [vmem:[%s235 + $0x29c] sm:$0xff]
        %v396 = vld [vmem:[%s235 + $0x2a4] sm:$0xf]
        %v397 = vld [vmem:[%s235 + $0x2a8] sm:$0xff]
        %v398 = vld [vmem:[%s235 + $0x2b0] sm:$0xff]
        %v399 = vld [vmem:[%s235 + $0x2b8] sm:$0xf]
        %v400 = vld [vmem:[%s235 + $0x2bc] sm:$0xff]
        %v401 = vld [vmem:[%s235 + $0x2c4] sm:$0xff]
        %v402 = vld [vmem:[%s235 + $0x2cc] sm:$0xf]
        %v403 = vld [vmem:[%s235 + $0x2d0] sm:$0xff]
        %v404 = vld [vmem:[%s235 + $0x2d8] sm:$0xff]
        %v405 = vld [vmem:[%s235 + $0x2e0] sm:$0xf]
        %v406 = vld [vmem:[%s235 + $0x2e4] sm:$0xff]
        %v407 = vld [vmem:[%s235 + $0x2ec] sm:$0xff]
        %v408 = vld [vmem:[%s235 + $0x2f4] sm:$0xf]
        %v409 = vld [vmem:[%s235 + $0x2f8] sm:$0xff]
        %v410 = vld [vmem:[%s235 + $0x300] sm:$0xff]
        %v411 = vld [vmem:[%s235 + $0x308] sm:$0xf]
        %v412 = vld [vmem:[%s235 + $0x30c] sm:$0xff]
        %v413 = vld [vmem:[%s235 + $0x314] sm:$0xff]
        %v414 = vld [vmem:[%s235 + $0x31c] sm:$0xf]
        %v415 = vld [vmem:[%s235 + $0x320] sm:$0xff]
        %v416 = vld [vmem:[%s235 + $0x328] sm:$0xff]
        %v417 = vld [vmem:[%s235 + $0x330] sm:$0xf]
        %v418 = vld [vmem:[%s235 + $0x334] sm:$0xff]
        %v419 = vld [vmem:[%s235 + $0x33c] sm:$0xff]
        %v420 = vld [vmem:[%s235 + $0x344] sm:$0xf]
        %v421 = vld [vmem:[%s235 + $0x348] sm:$0xff]
        %v422 = vld [vmem:[%s235 + $0x350] sm:$0xff]
        %v423 = vld [vmem:[%s235 + $0x358] sm:$0xf]
        %v424 = vld [vmem:[%s235 + $0x35c] sm:$0xff]
        %v425 = vld [vmem:[%s235 + $0x364] sm:$0xff]
        %v426 = vld [vmem:[%s235 + $0x36c] sm:$0xf]
        %v427 = vld [vmem:[%s235 + $0x370] sm:$0xff]
        %v428 = vld [vmem:[%s235 + $0x378] sm:$0xff]
        %v429 = vld [vmem:[%s235 + $0x380] sm:$0xf]
        %v430 = vld [vmem:[%s235 + $0x384] sm:$0xff]
        %v431 = vld [vmem:[%s235 + $0x38c] sm:$0xff]
        %v432 = vld [vmem:[%s235 + $0x394] sm:$0xf]
        %v433 = vld [vmem:[%s235 + $0x398] sm:$0xff]
        %v434 = vld [vmem:[%s235 + $0x3a0] sm:$0xff]
        %v435 = vld [vmem:[%s235 + $0x3a8] sm:$0xf]
        %v436 = vld [vmem:[%s235 + $0x3ac] sm:$0xff]
        %v437 = vld [vmem:[%s235 + $0x3b4] sm:$0xff]
        %v438 = vld [vmem:[%s235 + $0x3bc] sm:$0xf]
        %v439 = vld [vmem:[%s235 + $0x3c0] sm:$0xff]
        %v440 = vld [vmem:[%s235 + $0x3c8] sm:$0xff]
        %v441 = vld [vmem:[%s235 + $0x3d0] sm:$0xf]
        %v442 = vld [vmem:[%s235 + $0x3d4] sm:$0xff]
        %v443 = vld [vmem:[%s235 + $0x3dc] sm:$0xff]
        %v444 = vld [vmem:[%s235 + $0x3e4] sm:$0xf]
        %v445 = vld [vmem:[%s235 + $0x3e8] sm:$0xff]
        %v446 = vld [vmem:[%s235 + $0x3f0] sm:$0xff]
        %v447 = vld [vmem:[%s235 + $0x3f8] sm:$0xf]
        %v448 = vld [vmem:[%s235 + $0x3fc] sm:$0xff]
        %v449 = vld [vmem:[%s235 + $0x404] sm:$0xff]
        %v450 = vld [vmem:[%s235 + $0x40c] sm:$0xf]
        %v451 = vld [vmem:[%s235 + $0x410] sm:$0xff]
        %v452 = vld [vmem:[%s235 + $0x418] sm:$0xff]
        %v453 = vld [vmem:[%s235 + $0x420] sm:$0xf]
        %v454 = vld [vmem:[%s235 + $0x424] sm:$0xff]
        %v455 = vld [vmem:[%s235 + $0x42c] sm:$0xff]
        %v456 = vld [vmem:[%s235 + $0x434] sm:$0xf]
        %v457 = vld [vmem:[%s235 + $0x438] sm:$0xff]
        %v458 = vld [vmem:[%s235 + $0x440] sm:$0xff]
        %v459 = vld [vmem:[%s235 + $0x448] sm:$0xf]
        %v460 = vld [vmem:[%s235 + $0x44c] sm:$0xff]
        %v461 = vld [vmem:[%s235 + $0x454] sm:$0xff]
        %v462 = vld [vmem:[%s235 + $0x45c] sm:$0xf]
        %v463 = vld [vmem:[%s235 + $0x460] sm:$0xff]
        %v464 = vld [vmem:[%s235 + $0x468] sm:$0xff]
        %v465 = vld [vmem:[%s235 + $0x470] sm:$0xf]
        %v466 = vld [vmem:[%s235 + $0x474] sm:$0xff]
        %v467 = vld [vmem:[%s235 + $0x47c] sm:$0xff]
        %v468 = vld [vmem:[%s235 + $0x484] sm:$0xf]
        %v469 = vld [vmem:[%s235 + $0x488] sm:$0xff]
        %v470 = vld [vmem:[%s235 + $0x490] sm:$0xff]
        %v471 = vld [vmem:[%s235 + $0x498] sm:$0xf]
        %v472 = vld [vmem:[%s235 + $0x49c] sm:$0xff]
        %v473 = vld [vmem:[%s235 + $0x4a4] sm:$0xff]
        %v474 = vld [vmem:[%s235 + $0x4ac] sm:$0xf]
        %v475 = vld [vmem:[%s235 + $0x4b0] sm:$0xff]
        %v476 = vld [vmem:[%s235 + $0x4b8] sm:$0xff]
        %v477 = vld [vmem:[%s235 + $0x4c0] sm:$0xf]
        %v478 = vld [vmem:[%s235 + $0x4c4] sm:$0xff]
        %v479 = vld [vmem:[%s235 + $0x4cc] sm:$0xff]
        %v480 = vld [vmem:[%s235 + $0x4d4] sm:$0xf]
        %v481 = vld [vmem:[%s235 + $0x4d8] sm:$0xff]
        %v482 = vld [vmem:[%s235 + $0x4e0] sm:$0xff]
        %v483 = vld [vmem:[%s235 + $0x4e8] sm:$0xf]
        %v484 = vld [vmem:[%s235 + $0x4ec] sm:$0xff]
        %v485 = vld [vmem:[%s235 + $0x4f4] sm:$0xff]
        %v486 = vld [vmem:[%s235 + $0x4fc] sm:$0xf]
        %v487 = vld [vmem:[%s235 + $0x500] sm:$0xff]
        %v488 = vld [vmem:[%s235 + $0x508] sm:$0xff]
        %v489 = vld [vmem:[%s235 + $0x510] sm:$0xf]
        %v490 = vld [vmem:[%s235 + $0x514] sm:$0xff]
        %v491 = vld [vmem:[%s235 + $0x51c] sm:$0xff]
        %v492 = vld [vmem:[%s235 + $0x524] sm:$0xf]
        %v493 = vld [vmem:[%s235 + $0x528] sm:$0xff]
        %v494 = vld [vmem:[%s235 + $0x530] sm:$0xff]
        %v495 = vld [vmem:[%s235 + $0x538] sm:$0xf]
        %v496 = vld [vmem:[%s235 + $0x53c] sm:$0xff]
        %v497 = vld [vmem:[%s235 + $0x544] sm:$0xff]
        %v498 = vld [vmem:[%s235 + $0x54c] sm:$0xf]
        %v499 = vld [vmem:[%s235 + $0x550] sm:$0xff]
        %v500 = vld [vmem:[%s235 + $0x558] sm:$0xff]
        %v501 = vld [vmem:[%s235 + $0x560] sm:$0xf]
        %v502 = vld [vmem:[%s235 + $0x564] sm:$0xff]
        %v503 = vld [vmem:[%s235 + $0x56c] sm:$0xff]
        %v504 = vld [vmem:[%s235 + $0x574] sm:$0xf]
        %v505 = vld [vmem:[%s235 + $0x578] sm:$0xff]
        %v506 = vld [vmem:[%s235 + $0x580] sm:$0xff]
        %v507 = vld [vmem:[%s235 + $0x588] sm:$0xf]
        %v508 = vld [vmem:[%s235 + $0x58c] sm:$0xff]
        %v509 = vld [vmem:[%s235 + $0x594] sm:$0xff]
        %v510 = vld [vmem:[%s235 + $0x59c] sm:$0xf]
        %v511 = vld [vmem:[%s235 + $0x5a0] sm:$0xff]
        %v512 = vld [vmem:[%s235 + $0x5a8] sm:$0xff]
        %v513 = vld [vmem:[%s235 + $0x5b0] sm:$0xf]
        %v514 = vld [vmem:[%s235 + $0x5b4] sm:$0xff]
        %v515 = vld [vmem:[%s235 + $0x5bc] sm:$0xff]
        %v516 = vld [vmem:[%s235 + $0x5c4] sm:$0xf]
        %v517 = vld [vmem:[%s235 + $0x5c8] sm:$0xff]
        %v518 = vld [vmem:[%s235 + $0x5d0] sm:$0xff]
        %v519 = vld [vmem:[%s235 + $0x5d8] sm:$0xf]
        %v520 = vld [vmem:[%s235 + $0x5dc] sm:$0xff]
        %v521 = vld [vmem:[%s235 + $0x5e4] sm:$0xff]
        %v522 = vld [vmem:[%s235 + $0x5ec] sm:$0xf]
        %v523 = vld [vmem:[%s235 + $0x5f0] sm:$0xff]
        %v524 = vld [vmem:[%s235 + $0x5f8] sm:$0xff]
        %v525 = vld [vmem:[%s235 + $0x600] sm:$0xf]
        %v526 = vld [vmem:[%s235 + $0x604] sm:$0xff]
        %v527 = vld [vmem:[%s235 + $0x60c] sm:$0xff]
        %v528 = vld [vmem:[%s235 + $0x614] sm:$0xf]
        %v529 = vld [vmem:[%s235 + $0x618] sm:$0xff]
        %v530 = vld [vmem:[%s235 + $0x620] sm:$0xff]
        %v531 = vld [vmem:[%s235 + $0x628] sm:$0xf]
        %v532 = vld [vmem:[%s235 + $0x62c] sm:$0xff]
        %v533 = vld [vmem:[%s235 + $0x634] sm:$0xff]
        %v534 = vld [vmem:[%s235 + $0x63c] sm:$0xf]
        %v535 = vld [vmem:[%s235 + $0x640] sm:$0xff]
        %v536 = vld [vmem:[%s235 + $0x648] sm:$0xff]
        %v537 = vld [vmem:[%s235 + $0x650] sm:$0xf]
        %v538 = vld [vmem:[%s235 + $0x654] sm:$0xff]
        %v539 = vld [vmem:[%s235 + $0x65c] sm:$0xff]
        %v540 = vld [vmem:[%s235 + $0x664] sm:$0xf]
        %v541 = vld [vmem:[%s235 + $0x668] sm:$0xff]
        %v542 = vld [vmem:[%s235 + $0x670] sm:$0xff]
        %v543 = vld [vmem:[%s235 + $0x678] sm:$0xf]
        %v544 = vld [vmem:[%s235 + $0x67c] sm:$0xff]
        %v545 = vld [vmem:[%s235 + $0x684] sm:$0xff]
        %v546 = vld [vmem:[%s235 + $0x68c] sm:$0xf]
        %v547 = vld [vmem:[%s235 + $0x690] sm:$0xff]
        %v548 = vld [vmem:[%s235 + $0x698] sm:$0xff]
        %v549 = vld [vmem:[%s235 + $0x6a0] sm:$0xf]
        %v550 = vld [vmem:[%s235 + $0x6a4] sm:$0xff]
        %v551 = vld [vmem:[%s235 + $0x6ac] sm:$0xff]
        %v552 = vld [vmem:[%s235 + $0x6b4] sm:$0xf]
        %v553 = vld [vmem:[%s235 + $0x6b8] sm:$0xff]
        %v554 = vld [vmem:[%s235 + $0x6c0] sm:$0xff]
        %v555 = vld [vmem:[%s235 + $0x6c8] sm:$0xf]
        %v556 = vld [vmem:[%s235 + $0x6cc] sm:$0xff]
        %v557 = vld [vmem:[%s235 + $0x6d4] sm:$0xff]
        %v558 = vld [vmem:[%s235 + $0x6dc] sm:$0xf]
        %v559 = vld [vmem:[%s235 + $0x6e0] sm:$0xff]
        %v560 = vld [vmem:[%s235 + $0x6e8] sm:$0xff]
        %v561 = vld [vmem:[%s235 + $0x6f0] sm:$0xf]
        %v562 = vld [vmem:[%s235 + $0x6f4] sm:$0xff]
        %v563 = vld [vmem:[%s235 + $0x6fc] sm:$0xff]
        %v564 = vld [vmem:[%s235 + $0x704] sm:$0xf]
        %v565 = vld [vmem:[%s235 + $0x708] sm:$0xff]
        %v566 = vld [vmem:[%s235 + $0x710] sm:$0xff]
        %v567 = vld [vmem:[%s235 + $0x718] sm:$0xf]
        %v568 = vld [vmem:[%s235 + $0x71c] sm:$0xff]
        %v569 = vld [vmem:[%s235 + $0x724] sm:$0xff]
        %v570 = vld [vmem:[%s235 + $0x72c] sm:$0xf]
        %v571 = vld [vmem:[%s235 + $0x730] sm:$0xff]
        %v572 = vld [vmem:[%s235 + $0x738] sm:$0xff]
        %v573 = vld [vmem:[%s235 + $0x740] sm:$0xf]
        %v574 = vld [vmem:[%s235 + $0x744] sm:$0xff]
        %v575 = vld [vmem:[%s235 + $0x74c] sm:$0xff]
        %v576 = vld [vmem:[%s235 + $0x754] sm:$0xf]
        %v577 = vld [vmem:[%s235 + $0x758] sm:$0xff]
        %v578 = vld [vmem:[%s235 + $0x760] sm:$0xff]
        %v579 = vld [vmem:[%s235 + $0x768] sm:$0xf]
        %v580 = vld [vmem:[%s235 + $0x76c] sm:$0xff]
        %v581 = vld [vmem:[%s235 + $0x774] sm:$0xff]
        %v582 = vld [vmem:[%s235 + $0x77c] sm:$0xf]
        %v583 = vld [vmem:[%s235 + $0x780] sm:$0xff]
        %v584 = vld [vmem:[%s235 + $0x788] sm:$0xff]
        %v585 = vld [vmem:[%s235 + $0x790] sm:$0xf]
        %v586 = vld [vmem:[%s235 + $0x794] sm:$0xff]
        %v587 = vld [vmem:[%s235 + $0x79c] sm:$0xff]
        %v588 = vld [vmem:[%s235 + $0x7a4] sm:$0xf]
        %v589 = vld [vmem:[%s235 + $0x7a8] sm:$0xff]
        %v590 = vld [vmem:[%s235 + $0x7b0] sm:$0xff]
        %v591 = vld [vmem:[%s235 + $0x7b8] sm:$0xf]
        %v592 = vld [vmem:[%s235 + $0x7bc] sm:$0xff]
        %v593 = vld [vmem:[%s235 + $0x7c4] sm:$0xff]
        %v594 = vld [vmem:[%s235 + $0x7cc] sm:$0xf]
        %v595 = vld [vmem:[%s235 + $0x7d0] sm:$0xff]
        %v596 = vld [vmem:[%s235 + $0x7d8] sm:$0xff]
        %v597 = vld [vmem:[%s235 + $0x7e0] sm:$0xf]
        %v598 = vld [vmem:[%s235 + $0x7e4] sm:$0xff]
        %v599 = vld [vmem:[%s235 + $0x7ec] sm:$0xff]
        %v600 = vld [vmem:[%s235 + $0x7f4] sm:$0xf]
        %v601 = vld [vmem:[%s235 + $0x7f8] sm:$0xff]
        %v602 = vld [vmem:[%s235 + $0x800] sm:$0xff]
        %v603 = vld [vmem:[%s235 + $0x808] sm:$0xf]
        %v604 = vld [vmem:[%s235 + $0x80c] sm:$0xff]
        %v605 = vld [vmem:[%s235 + $0x814] sm:$0xff]
        %v606 = vld [vmem:[%s235 + $0x81c] sm:$0xf]
        %v607 = vld [vmem:[%s235 + $0x820] sm:$0xff]
        %v608 = vld [vmem:[%s235 + $0x828] sm:$0xff]
        %v609 = vld [vmem:[%s235 + $0x830] sm:$0xf]
        %v610 = vld [vmem:[%s235 + $0x834] sm:$0xff]
        %v611 = vld [vmem:[%s235 + $0x83c] sm:$0xff]
        %v612 = vld [vmem:[%s235 + $0x844] sm:$0xf]
        %v613 = vld [vmem:[%s235 + $0x848] sm:$0xff]
        %v614 = vld [vmem:[%s235 + $0x850] sm:$0xff]
        %v615 = vld [vmem:[%s235 + $0x858] sm:$0xf]
        %v616 = vld [vmem:[%s235 + $0x85c] sm:$0xff]
        %v617 = vld [vmem:[%s235 + $0x864] sm:$0xff]
        %v618 = vld [vmem:[%s235 + $0x86c] sm:$0xf]
        %v619 = vld [vmem:[%s235 + $0x870] sm:$0xff]
        %v620 = vld [vmem:[%s235 + $0x878] sm:$0xff]
        %v621 = vld [vmem:[%s235 + $0x880] sm:$0xf]
        %v622 = vld [vmem:[%s235 + $0x884] sm:$0xff]
        %v623 = vld [vmem:[%s235 + $0x88c] sm:$0xff]
        %v624 = vld [vmem:[%s235 + $0x894] sm:$0xf]
        %v625 = vld [vmem:[%s235 + $0x898] sm:$0xff]
        %v626 = vld [vmem:[%s235 + $0x8a0] sm:$0xff]
        %v627 = vld [vmem:[%s235 + $0x8a8] sm:$0xf]
        %v628 = vld [vmem:[%s235 + $0x8ac] sm:$0xff]
        %v629 = vld [vmem:[%s235 + $0x8b4] sm:$0xff]
        %v630 = vld [vmem:[%s235 + $0x8bc] sm:$0xf]
        %v631 = vld [vmem:[%s235 + $0x8c0] sm:$0xff]
        %v632 = vld [vmem:[%s235 + $0x8c8] sm:$0xff]
        %v633 = vld [vmem:[%s235 + $0x8d0] sm:$0xf]
        %v634 = vld [vmem:[%s235 + $0x8d4] sm:$0xff]
        %v635 = vld [vmem:[%s235 + $0x8dc] sm:$0xff]
        %v636 = vld [vmem:[%s235 + $0x8e4] sm:$0xf]
        %v637 = vld [vmem:[%s235 + $0x8e8] sm:$0xff]
        %v638 = vld [vmem:[%s235 + $0x8f0] sm:$0xff]
        %v639 = vld [vmem:[%s235 + $0x8f8] sm:$0xf]
        %v640 = vld [vmem:[%s235 + $0x8fc] sm:$0xff]
        %v641 = vld [vmem:[%s235 + $0x904] sm:$0xff]
        %v642 = vld [vmem:[%s235 + $0x90c] sm:$0xf]
        %v643 = vld [vmem:[%s235 + $0x910] sm:$0xff]
        %v644 = vld [vmem:[%s235 + $0x918] sm:$0xff]
        %v645 = vld [vmem:[%s235 + $0x920] sm:$0xf]
        %v646 = vld [vmem:[%s235 + $0x924] sm:$0xff]
        %v647 = vld [vmem:[%s235 + $0x92c] sm:$0xff]
        %v648 = vld [vmem:[%s235 + $0x934] sm:$0xf]
        %v649 = vld [vmem:[%s235 + $0x938] sm:$0xff]
        %v650 = vld [vmem:[%s235 + $0x940] sm:$0xff]
        %v651 = vld [vmem:[%s235 + $0x948] sm:$0xf]
        %v652 = vld [vmem:[%s235 + $0x94c] sm:$0xff]
        %v653 = vld [vmem:[%s235 + $0x954] sm:$0xff]
        %v654 = vld [vmem:[%s235 + $0x95c] sm:$0xf]
        %v655 = vld [vmem:[%s235 + $0x960] sm:$0xff]
        %v656 = vld [vmem:[%s235 + $0x968] sm:$0xff]
        %v657 = vld [vmem:[%s235 + $0x970] sm:$0xf]
        %v658 = vld [vmem:[%s235 + $0x974] sm:$0xff]
        %v659 = vld [vmem:[%s235 + $0x97c] sm:$0xff]
        %v660 = vld [vmem:[%s235 + $0x984] sm:$0xf]
        %v661 = vld [vmem:[%s235 + $0x988] sm:$0xff]
        %v662 = vld [vmem:[%s235 + $0x990] sm:$0xff]
        %v663 = vld [vmem:[%s235 + $0x998] sm:$0xf]
        %v664 = vld [vmem:[%s235 + $0x99c] sm:$0xff]
        %v665 = vld [vmem:[%s235 + $0x9a4] sm:$0xff]
        %v666 = vld [vmem:[%s235 + $0x9ac] sm:$0xf]
        %v667 = vld [vmem:[%s235 + $0x9b0] sm:$0xff]
        %v668 = vld [vmem:[%s235 + $0x9b8] sm:$0xff]
        %v669 = vld [vmem:[%s235 + $0x9c0] sm:$0xf]
        %v670 = vld [vmem:[%s235 + $0x9c4] sm:$0xff]
        %v671 = vld [vmem:[%s235 + $0x9cc] sm:$0xff]
        %v672 = vld [vmem:[%s235 + $0x9d4] sm:$0xf]
        %v673 = vld [vmem:[%s235 + $0x9d8] sm:$0xff]
        %v674 = vld [vmem:[%s235 + $0x9e0] sm:$0xff]
        %v675 = vld [vmem:[%s235 + $0x9e8] sm:$0xf]
        %v676 = vld [vmem:[%s235 + $0x9ec] sm:$0xff]
        %v677 = vld [vmem:[%s235 + $0x9f4] sm:$0xff]
        %v678 = vld [vmem:[%s235 + $0x9fc] sm:$0xf]
        %v679 = vld [vmem:[%s235 + $0xa00] sm:$0xff]
        %v680 = vld [vmem:[%s235 + $0xa08] sm:$0xff]
        %v681 = vld [vmem:[%s235 + $0xa10] sm:$0xf]
        %v682 = vld [vmem:[%s235 + $0xa14] sm:$0xff]
        %v683 = vld [vmem:[%s235 + $0xa1c] sm:$0xff]
        %v684 = vld [vmem:[%s235 + $0xa24] sm:$0xf]
        %v685 = vld [vmem:[%s235 + $0xa28] sm:$0xff]
        %v686 = vld [vmem:[%s235 + $0xa30] sm:$0xff]
        %v687 = vld [vmem:[%s235 + $0xa38] sm:$0xf]
        %v688 = vld [vmem:[%s235 + $0xa3c] sm:$0xff]
        %v689 = vld [vmem:[%s235 + $0xa44] sm:$0xff]
        %v690 = vld [vmem:[%s235 + $0xa4c] sm:$0xf]
        %v691 = vld [vmem:[%s235 + $0xa50] sm:$0xff]
        %v692 = vld [vmem:[%s235 + $0xa58] sm:$0xff]
        %v693 = vld [vmem:[%s235 + $0xa60] sm:$0xf]
        %v694 = vld [vmem:[%s235 + $0xa64] sm:$0xff]
        %v695 = vld [vmem:[%s235 + $0xa6c] sm:$0xff]
        %v696 = vld [vmem:[%s235 + $0xa74] sm:$0xf]
        %v697 = vld [vmem:[%s235 + $0xa78] sm:$0xff]
        %v698 = vld [vmem:[%s235 + $0xa80] sm:$0xff]
        %v699 = vld [vmem:[%s235 + $0xa88] sm:$0xf]
        %v700 = vld [vmem:[%s235 + $0xa8c] sm:$0xff]
        %v701 = vld [vmem:[%s235 + $0xa94] sm:$0xff]
        %v702 = vld [vmem:[%s235 + $0xa9c] sm:$0xf]
        %v703 = vld [vmem:[%s235 + $0xaa0] sm:$0xff]
        %v704 = vld [vmem:[%s235 + $0xaa8] sm:$0xff]
        %v705 = vld [vmem:[%s235 + $0xab0] sm:$0xf]
        %v706 = vld [vmem:[%s235 + $0xab4] sm:$0xff]
        %v707 = vld [vmem:[%s235 + $0xabc] sm:$0xff]
        %v708 = vld [vmem:[%s235 + $0xac4] sm:$0xf]
        %v709 = vld [vmem:[%s235 + $0xac8] sm:$0xff]
        %v710 = vld [vmem:[%s235 + $0xad0] sm:$0xff]
        %v711 = vld [vmem:[%s235 + $0xad8] sm:$0xf]
        %v712 = vld [vmem:[%s235 + $0xadc] sm:$0xff]
        %v713 = vld [vmem:[%s235 + $0xae4] sm:$0xff]
        %v714 = vld [vmem:[%s235 + $0xaec] sm:$0xf]
        %v715 = vld [vmem:[%s235 + $0xaf0] sm:$0xff]
        %v716 = vld [vmem:[%s235 + $0xaf8] sm:$0xff]
        %v717 = vld [vmem:[%s235 + $0xb00] sm:$0xf]
        %v718 = vld [vmem:[%s235 + $0xb04] sm:$0xff]
        %v719 = vld [vmem:[%s235 + $0xb0c] sm:$0xff]
        %v720 = vld [vmem:[%s235 + $0xb14] sm:$0xf]
        %v721 = vld [vmem:[%s235 + $0xb18] sm:$0xff]
        %v722 = vld [vmem:[%s235 + $0xb20] sm:$0xff]
        %v723 = vld [vmem:[%s235 + $0xb28] sm:$0xf]
        %v724 = vld [vmem:[%s235 + $0xb2c] sm:$0xff]
        %v725 = vld [vmem:[%s235 + $0xb34] sm:$0xff]
        %v726 = vld [vmem:[%s235 + $0xb3c] sm:$0xf]
        %v727 = vld [vmem:[%s235 + $0xb40] sm:$0xff]
        %v728 = vld [vmem:[%s235 + $0xb48] sm:$0xff]
        %v729 = vld [vmem:[%s235 + $0xb50] sm:$0xf]
        %v730 = vld [vmem:[%s235 + $0xb54] sm:$0xff]
        %v731 = vld [vmem:[%s235 + $0xb5c] sm:$0xff]
        %v732 = vld [vmem:[%s235 + $0xb64] sm:$0xf]
        %v733 = vld [vmem:[%s235 + $0xb68] sm:$0xff]
        %v734 = vld [vmem:[%s235 + $0xb70] sm:$0xff]
        %v735 = vld [vmem:[%s235 + $0xb78] sm:$0xf]
        %v736 = vld [vmem:[%s235 + $0xb7c] sm:$0xff]
        %v737 = vld [vmem:[%s235 + $0xb84] sm:$0xff]
        %v738 = vld [vmem:[%s235 + $0xb8c] sm:$0xf]
        %v739 = vld [vmem:[%s235 + $0xb90] sm:$0xff]
        %v740 = vld [vmem:[%s235 + $0xb98] sm:$0xff]
        %v741 = vld [vmem:[%s235 + $0xba0] sm:$0xf]
        %v742 = vld [vmem:[%s235 + $0xba4] sm:$0xff]
        %v743 = vld [vmem:[%s235 + $0xbac] sm:$0xff]
        %v744 = vld [vmem:[%s235 + $0xbb4] sm:$0xf]
        %v745 = vld [vmem:[%s235 + $0xbb8] sm:$0xff]
        %v746 = vld [vmem:[%s235 + $0xbc0] sm:$0xff]
        %v747 = vld [vmem:[%s235 + $0xbc8] sm:$0xf]
        %v748 = vld [vmem:[%s235 + $0xbcc] sm:$0xff]
        %v749 = vld [vmem:[%s235 + $0xbd4] sm:$0xff]
        %v750 = vld [vmem:[%s235 + $0xbdc] sm:$0xf]
        %v751 = vld [vmem:[%s235 + $0xbe0] sm:$0xff]
        %v752 = vld [vmem:[%s235 + $0xbe8] sm:$0xff]
        %v753 = vld [vmem:[%s235 + $0xbf0] sm:$0xf]
        %v754 = vld [vmem:[%s235 + $0xbf4] sm:$0xff]
        %v755 = vld [vmem:[%s235 + $0xbfc] sm:$0xff]
        %v756 = vld [vmem:[%s235 + $0xc04] sm:$0xf]
        %v757 = vld [vmem:[%s235 + $0xc08] sm:$0xff]
        %v758 = vld [vmem:[%s235 + $0xc10] sm:$0xff]
        %v759 = vld [vmem:[%s235 + $0xc18] sm:$0xf]
        %v760 = vld [vmem:[%s235 + $0xc1c] sm:$0xff]
        %v761 = vld [vmem:[%s235 + $0xc24] sm:$0xff]
        %v762 = vld [vmem:[%s235 + $0xc2c] sm:$0xf]
        %v763 = vld [vmem:[%s235 + $0xc30] sm:$0xff]
        %v764 = vld [vmem:[%s235 + $0xc38] sm:$0xff]
        %v765 = vld [vmem:[%s235 + $0xc40] sm:$0xf]
        %v766 = vld [vmem:[%s235 + $0xc44] sm:$0xff]
        %v767 = vld [vmem:[%s235 + $0xc4c] sm:$0xff]
        %v768 = vld [vmem:[%s235 + $0xc54] sm:$0xf]
        %v769 = vld [vmem:[%s235 + $0xc58] sm:$0xff]
        %v770 = vld [vmem:[%s235 + $0xc60] sm:$0xff]
        %v771 = vld [vmem:[%s235 + $0xc68] sm:$0xf]
        %v772 = vld [vmem:[%s235 + $0xc6c] sm:$0xff]
        %v773 = vld [vmem:[%s235 + $0xc74] sm:$0xff]
        %v774 = vld [vmem:[%s235 + $0xc7c] sm:$0xf]
        %v775 = vld [vmem:[%s235 + $0xc80] sm:$0xff]
        %v776 = vld [vmem:[%s235 + $0xc88] sm:$0xff]
        %v777 = vld [vmem:[%s235 + $0xc90] sm:$0xf]
        %v778 = vld [vmem:[%s235 + $0xc94] sm:$0xff]
        %v779 = vld [vmem:[%s235 + $0xc9c] sm:$0xff]
        %v780 = vld [vmem:[%s235 + $0xca4] sm:$0xf]
        %v781 = vld [vmem:[%s235 + $0xca8] sm:$0xff]
        %v782 = vld [vmem:[%s235 + $0xcb0] sm:$0xff]
        %v783 = vld [vmem:[%s235 + $0xcb8] sm:$0xf]
        %v784 = vld [vmem:[%s235 + $0xcbc] sm:$0xff]
        %v785 = vld [vmem:[%s235 + $0xcc4] sm:$0xff]
        %v786 = vld [vmem:[%s235 + $0xccc] sm:$0xf]
        %v787 = vld [vmem:[%s235 + $0xcd0] sm:$0xff]
        %v788 = vld [vmem:[%s235 + $0xcd8] sm:$0xff]
        %v789 = vld [vmem:[%s235 + $0xce0] sm:$0xf]
        %v790 = vld [vmem:[%s235 + $0xce4] sm:$0xff]
        %v791 = vld [vmem:[%s235 + $0xcec] sm:$0xff]
        %v792 = vld [vmem:[%s235 + $0xcf4] sm:$0xf]
        %v793 = vld [vmem:[%s235 + $0xcf8] sm:$0xff]
        %v794 = vld [vmem:[%s235 + $0xd00] sm:$0xff]
        %v795 = vld [vmem:[%s235 + $0xd08] sm:$0xf]
        %v796 = vld [vmem:[%s235 + $0xd0c] sm:$0xff]
        %v797 = vld [vmem:[%s235 + $0xd14] sm:$0xff]
        %v798 = vld [vmem:[%s235 + $0xd1c] sm:$0xf]
        %v799 = vld [vmem:[%s235 + $0xd20] sm:$0xff]
        %v800 = vld [vmem:[%s235 + $0xd28] sm:$0xff]
        %v801 = vld [vmem:[%s235 + $0xd30] sm:$0xf]
        %v802 = vld [vmem:[%s235 + $0xd34] sm:$0xff]
        %v803 = vld [vmem:[%s235 + $0xd3c] sm:$0xff]
        %v804 = vld [vmem:[%s235 + $0xd44] sm:$0xf]
        %v805 = vld [vmem:[%s235 + $0xd48] sm:$0xff]
        %v806 = vld [vmem:[%s235 + $0xd50] sm:$0xff]
        %v807 = vld [vmem:[%s235 + $0xd58] sm:$0xf]
        %v808 = vld [vmem:[%s235 + $0xd5c] sm:$0xff]
        %v809 = vld [vmem:[%s235 + $0xd64] sm:$0xff]
        %v810 = vld [vmem:[%s235 + $0xd6c] sm:$0xf]
        %v811 = vld [vmem:[%s235 + $0xd70] sm:$0xff]
        %v812 = vld [vmem:[%s235 + $0xd78] sm:$0xff]
        %v813 = vld [vmem:[%s235 + $0xd80] sm:$0xf]
        %v814 = vld [vmem:[%s235 + $0xd84] sm:$0xff]
        %v815 = vld [vmem:[%s235 + $0xd8c] sm:$0xff]
        %v816 = vld [vmem:[%s235 + $0xd94] sm:$0xf]
        %v817 = vld [vmem:[%s235 + $0xd98] sm:$0xff]
        %v818 = vld [vmem:[%s235 + $0xda0] sm:$0xff]
        %v819 = vld [vmem:[%s235 + $0xda8] sm:$0xf]
        %v820 = vld [vmem:[%s235 + $0xdac] sm:$0xff]
        %v821 = vld [vmem:[%s235 + $0xdb4] sm:$0xff]
        %v822 = vld [vmem:[%s235 + $0xdbc] sm:$0xf]
        %v823 = vld [vmem:[%s235 + $0xdc0] sm:$0xff]
        %v824 = vld [vmem:[%s235 + $0xdc8] sm:$0xff]
        %v825 = vld [vmem:[%s235 + $0xdd0] sm:$0xf]
        %v826 = vld [vmem:[%s235 + $0xdd4] sm:$0xff]
        %v827 = vld [vmem:[%s235 + $0xddc] sm:$0xff]
        %v828 = vld [vmem:[%s235 + $0xde4] sm:$0xf]
        %v829 = vld [vmem:[%s235 + $0xde8] sm:$0xff]
        %v830 = vld [vmem:[%s235 + $0xdf0] sm:$0xff]
        %v831 = vld [vmem:[%s235 + $0xdf8] sm:$0xf]
        %v832 = vld [vmem:[%s235 + $0xdfc] sm:$0xff]
        %v833 = vld [vmem:[%s235 + $0xe04] sm:$0xff]
        %v834 = vld [vmem:[%s235 + $0xe0c] sm:$0xf]
        %v835 = vld [vmem:[%s235 + $0xe10] sm:$0xff]
        %v836 = vld [vmem:[%s235 + $0xe18] sm:$0xff]
        %v837 = vld [vmem:[%s235 + $0xe20] sm:$0xf]
        %v838 = vld [vmem:[%s235 + $0xe24] sm:$0xff]
        %v839 = vld [vmem:[%s235 + $0xe2c] sm:$0xff]
        %v840 = vld [vmem:[%s235 + $0xe34] sm:$0xf]
        %v841 = vld [vmem:[%s235 + $0xe38] sm:$0xff]
        %v842 = vld [vmem:[%s235 + $0xe40] sm:$0xff]
        %v843 = vld [vmem:[%s235 + $0xe48] sm:$0xf]
        %v844 = vld [vmem:[%s235 + $0xe4c] sm:$0xff]
        %v845 = vld [vmem:[%s235 + $0xe54] sm:$0xff]
        %v846 = vld [vmem:[%s235 + $0xe5c] sm:$0xf]
        %v847 = vld [vmem:[%s235 + $0xe60] sm:$0xff]
        %v848 = vld [vmem:[%s235 + $0xe68] sm:$0xff]
        %v849 = vld [vmem:[%s235 + $0xe70] sm:$0xf]
        %v850 = vld [vmem:[%s235 + $0xe74] sm:$0xff]
        %v851 = vld [vmem:[%s235 + $0xe7c] sm:$0xff]
        %v852 = vld [vmem:[%s235 + $0xe84] sm:$0xf]
        %v853 = vld [vmem:[%s235 + $0xe88] sm:$0xff]
        %v854 = vld [vmem:[%s235 + $0xe90] sm:$0xff]
        %v855 = vld [vmem:[%s235 + $0xe98] sm:$0xf]
        %v856 = vld [vmem:[%s235 + $0xe9c] sm:$0xff]
        %v857 = vld [vmem:[%s235 + $0xea4] sm:$0xff]
        %v858 = vld [vmem:[%s235 + $0xeac] sm:$0xf]
        %v859 = vld [vmem:[%s235 + $0xeb0] sm:$0xff]
        %v860 = vld [vmem:[%s235 + $0xeb8] sm:$0xff]
        %v861 = vld [vmem:[%s235 + $0xec0] sm:$0xf]
        %v862 = vld [vmem:[%s235 + $0xec4] sm:$0xff]
        %v863 = vld [vmem:[%s235 + $0xecc] sm:$0xff]
        %v864 = vld [vmem:[%s235 + $0xed4] sm:$0xf]
        %v865 = vld [vmem:[%s235 + $0xed8] sm:$0xff]
        %v866 = vld [vmem:[%s235 + $0xee0] sm:$0xff]
        %v867 = vld [vmem:[%s235 + $0xee8] sm:$0xf]
        %v868 = vld [vmem:[%s235 + $0xeec] sm:$0xff]
        %v869 = vld [vmem:[%s235 + $0xef4] sm:$0xff]
        %v870 = vld [vmem:[%s235 + $0xefc] sm:$0xf]
        %v871 = vld [vmem:[%s235 + $0xf00] sm:$0xff]
        %v872 = vld [vmem:[%s235 + $0xf08] sm:$0xff]
        %v873 = vld [vmem:[%s235 + $0xf10] sm:$0xf]
        %v874 = vld [vmem:[%s235 + $0xf14] sm:$0xff]
        %v875 = vld [vmem:[%s235 + $0xf1c] sm:$0xff]
        %v876 = vld [vmem:[%s235 + $0xf24] sm:$0xf]
        %v877 = vld [vmem:[%s235 + $0xf28] sm:$0xff]
        %v878 = vld [vmem:[%s235 + $0xf30] sm:$0xff]
        %v879 = vld [vmem:[%s235 + $0xf38] sm:$0xf]
        %v880 = vld [vmem:[%s235 + $0xf3c] sm:$0xff]
        %v881 = vld [vmem:[%s235 + $0xf44] sm:$0xff]
        %v882 = vld [vmem:[%s235 + $0xf4c] sm:$0xf]
        %v883 = vld [vmem:[%s235 + $0xf50] sm:$0xff]
        %v884 = vld [vmem:[%s235 + $0xf58] sm:$0xff]
        %v885 = vld [vmem:[%s235 + $0xf60] sm:$0xf]
        %v886 = vld [vmem:[%s235 + $0xf64] sm:$0xff]
        %v887 = vld [vmem:[%s235 + $0xf6c] sm:$0xff]
        %v888 = vld [vmem:[%s235 + $0xf74] sm:$0xf]
        %v889 = vld [vmem:[%s235 + $0xf78] sm:$0xff]
        %v890 = vld [vmem:[%s235 + $0xf80] sm:$0xff]
        %v891 = vld [vmem:[%s235 + $0xf88] sm:$0xf]
        %v892 = vld [vmem:[%s235 + $0xf8c] sm:$0xff]
        %v893 = vld [vmem:[%s235 + $0xf94] sm:$0xff]
        %v894 = vld [vmem:[%s235 + $0xf9c] sm:$0xf]
        %v895 = vld [vmem:[%s235 + $0xfa0] sm:$0xff]
        %v896 = vld [vmem:[%s235 + $0xfa8] sm:$0xff]
        %v897 = vld [vmem:[%s235 + $0xfb0] sm:$0xf]
        %v898 = vld [vmem:[%s235 + $0xfb4] sm:$0xff]
        %v899 = vld [vmem:[%s235 + $0xfbc] sm:$0xff]
        %v900 = vld [vmem:[%s235 + $0xfc4] sm:$0xf]
        %v901 = vld [vmem:[%s235 + $0xfc8] sm:$0xff]
        %v902 = vld [vmem:[%s235 + $0xfd0] sm:$0xff]
        %v903 = vld [vmem:[%s235 + $0xfd8] sm:$0xf]
        %v904 = vld [vmem:[%s235 + $0xfdc] sm:$0xff]
        %v905 = vld [vmem:[%s235 + $0xfe4] sm:$0xff]
        %v906 = vld [vmem:[%s235 + $0xfec] sm:$0xf]
        %v907 = vld [vmem:[%s235 + $0xff0] sm:$0xff]
        %v908 = vld [vmem:[%s235 + $0xff8] sm:$0xff]
        %v909 = vld [vmem:[%s235 + $0x1000] sm:$0xf]
        %v910 = vld [vmem:[%s235 + $0x1004] sm:$0xff]
        %v911 = vld [vmem:[%s235 + $0x100c] sm:$0xff]
        %v912 = vld [vmem:[%s235 + $0x1014] sm:$0xf]
        %v913 = vld [vmem:[%s235 + $0x1018] sm:$0xff]
        %v914 = vld [vmem:[%s235 + $0x1020] sm:$0xff]
        %v915 = vld [vmem:[%s235 + $0x1028] sm:$0xf]
        %v916 = vld [vmem:[%s235 + $0x102c] sm:$0xff]
        %v917 = vld [vmem:[%s235 + $0x1034] sm:$0xff]
        %v918 = vld [vmem:[%s235 + $0x103c] sm:$0xf]
        %v919 = vld [vmem:[%s235 + $0x1040] sm:$0xff]
        %v920 = vld [vmem:[%s235 + $0x1048] sm:$0xff]
        %v921 = vld [vmem:[%s235 + $0x1050] sm:$0xf]
        %v922 = vld [vmem:[%s235 + $0x1054] sm:$0xff]
        %v923 = vld [vmem:[%s235 + $0x105c] sm:$0xff]
        %v924 = vld [vmem:[%s235 + $0x1064] sm:$0xf]
        %v925 = vld [vmem:[%s235 + $0x1068] sm:$0xff]
        %v926 = vld [vmem:[%s235 + $0x1070] sm:$0xff]
        %v927 = vld [vmem:[%s235 + $0x1078] sm:$0xf]
        %v928 = vld [vmem:[%s235 + $0x107c] sm:$0xff]
        %v929 = vld [vmem:[%s235 + $0x1084] sm:$0xff]
        %v930 = vld [vmem:[%s235 + $0x108c] sm:$0xf]
        %v931 = vld [vmem:[%s235 + $0x1090] sm:$0xff]
        %v932 = vld [vmem:[%s235 + $0x1098] sm:$0xff]
        %v933 = vld [vmem:[%s235 + $0x10a0] sm:$0xf]
        %v934 = vld [vmem:[%s235 + $0x10a4] sm:$0xff]
        %v935 = vld [vmem:[%s235 + $0x10ac] sm:$0xff]
        %v936 = vld [vmem:[%s235 + $0x10b4] sm:$0xf]
        %v937 = vld [vmem:[%s235 + $0x10b8] sm:$0xff]
        %v938 = vld [vmem:[%s235 + $0x10c0] sm:$0xff]
        %v939 = vld [vmem:[%s235 + $0x10c8] sm:$0xf]
        %v940 = vld [vmem:[%s235 + $0x10cc] sm:$0xff]
        %v941 = vld [vmem:[%s235 + $0x10d4] sm:$0xff]
        %v942 = vld [vmem:[%s235 + $0x10dc] sm:$0xf]
        %v943 = vld [vmem:[%s235 + $0x10e0] sm:$0xff]
        %v944 = vld [vmem:[%s235 + $0x10e8] sm:$0xff]
        %v945 = vld [vmem:[%s235 + $0x10f0] sm:$0xf]
        %v946 = vld [vmem:[%s235 + $0x10f4] sm:$0xff]
        %v947 = vld [vmem:[%s235 + $0x10fc] sm:$0xff]
        %v948 = vld [vmem:[%s235 + $0x1104] sm:$0xf]
        %v949 = vld [vmem:[%s235 + $0x1108] sm:$0xff]
        %v950 = vld [vmem:[%s235 + $0x1110] sm:$0xff]
        %v951 = vld [vmem:[%s235 + $0x1118] sm:$0xf]
        %v952 = vld [vmem:[%s235 + $0x111c] sm:$0xff]
        %v953 = vld [vmem:[%s235 + $0x1124] sm:$0xff]
        %v954 = vld [vmem:[%s235 + $0x112c] sm:$0xf]
        %v955 = vld [vmem:[%s235 + $0x1130] sm:$0xff]
        %v956 = vld [vmem:[%s235 + $0x1138] sm:$0xff]
        %v957 = vld [vmem:[%s235 + $0x1140] sm:$0xf]
        %v958 = vld [vmem:[%s235 + $0x1144] sm:$0xff]
        %v959 = vld [vmem:[%s235 + $0x114c] sm:$0xff]
        %v960 = vld [vmem:[%s235 + $0x1154] sm:$0xf]
        %v961 = vld [vmem:[%s235 + $0x1158] sm:$0xff]
        %v962 = vld [vmem:[%s235 + $0x1160] sm:$0xff]
        %v963 = vld [vmem:[%s235 + $0x1168] sm:$0xf]
        %v964 = vld [vmem:[%s235 + $0x116c] sm:$0xff]
        %v965 = vld [vmem:[%s235 + $0x1174] sm:$0xff]
        %v966 = vld [vmem:[%s235 + $0x117c] sm:$0xf]
        %v967 = vld [vmem:[%s235 + $0x1180] sm:$0xff]
        %v968 = vld [vmem:[%s235 + $0x1188] sm:$0xff]
        %v969 = vld [vmem:[%s235 + $0x1190] sm:$0xf]
        %v970 = vld [vmem:[%s235 + $0x1194] sm:$0xff]
        %v971 = vld [vmem:[%s235 + $0x119c] sm:$0xff]
        %v972 = vld [vmem:[%s235 + $0x11a4] sm:$0xf]
        %v973 = vld [vmem:[%s235 + $0x11a8] sm:$0xff]
        %v974 = vld [vmem:[%s235 + $0x11b0] sm:$0xff]
        %v975 = vld [vmem:[%s235 + $0x11b8] sm:$0xf]
        %v976 = vld [vmem:[%s235 + $0x11bc] sm:$0xff]
        %v977 = vld [vmem:[%s235 + $0x11c4] sm:$0xff]
        %v978 = vld [vmem:[%s235 + $0x11cc] sm:$0xf]
        %v979 = vld [vmem:[%s235 + $0x11d0] sm:$0xff]
        %v980 = vld [vmem:[%s235 + $0x11d8] sm:$0xff]
        %v981 = vld [vmem:[%s235 + $0x11e0] sm:$0xf]
        %v982 = vld [vmem:[%s235 + $0x11e4] sm:$0xff]
        %v983 = vld [vmem:[%s235 + $0x11ec] sm:$0xff]
        %v984 = vld [vmem:[%s235 + $0x11f4] sm:$0xf]
        %v985 = vld [vmem:[%s235 + $0x11f8] sm:$0xff]
        %v986 = vld [vmem:[%s235 + $0x1200] sm:$0xff]
        %v987 = vld [vmem:[%s235 + $0x1208] sm:$0xf]
        %v988 = vld [vmem:[%s235 + $0x120c] sm:$0xff]
        %v989 = vld [vmem:[%s235 + $0x1214] sm:$0xff]
        %v990 = vld [vmem:[%s235 + $0x121c] sm:$0xf]
        %v991 = vld [vmem:[%s235 + $0x1220] sm:$0xff]
        %v992 = vld [vmem:[%s235 + $0x1228] sm:$0xff]
        %v993 = vld [vmem:[%s235 + $0x1230] sm:$0xf]
        %v994 = vld [vmem:[%s235 + $0x1234] sm:$0xff]
        %v995 = vld [vmem:[%s235 + $0x123c] sm:$0xff]
        %v996 = vld [vmem:[%s235 + $0x1244] sm:$0xf]
        %v997 = vld [vmem:[%s235 + $0x1248] sm:$0xff]
        %v998 = vld [vmem:[%s235 + $0x1250] sm:$0xff]
        %v999 = vld [vmem:[%s235 + $0x1258] sm:$0xf]
        %v1000 = vld [vmem:[%s235 + $0x125c] sm:$0xff]
        %v1001 = vld [vmem:[%s235 + $0x1264] sm:$0xff]
        %v1002 = vld [vmem:[%s235 + $0x126c] sm:$0xf]
        %v1003 = vld [vmem:[%s235 + $0x1270] sm:$0xff]
        %v1004 = vld [vmem:[%s235 + $0x1278] sm:$0xff]
        %v1005 = vld [vmem:[%s235 + $0x1280] sm:$0xf]
        %v1006 = vld [vmem:[%s235 + $0x1284] sm:$0xff]
        %v1007 = vld [vmem:[%s235 + $0x128c] sm:$0xff]
        %v1008 = vld [vmem:[%s235 + $0x1294] sm:$0xf]
        %v1009 = vld [vmem:[%s235 + $0x1298] sm:$0xff]
        %v1010 = vld [vmem:[%s235 + $0x12a0] sm:$0xff]
        %v1011 = vld [vmem:[%s235 + $0x12a8] sm:$0xf]
        %v1012 = vld [vmem:[%s235 + $0x12ac] sm:$0xff]
        %v1013 = vld [vmem:[%s235 + $0x12b4] sm:$0xff]
        %v1014 = vld [vmem:[%s235 + $0x12bc] sm:$0xf]
        %v1015 = vld [vmem:[%s235 + $0x12c0] sm:$0xff]
        %v1016 = vld [vmem:[%s235 + $0x12c8] sm:$0xff]
        %v1017 = vld [vmem:[%s235 + $0x12d0] sm:$0xf]
        %v1018 = vld [vmem:[%s235 + $0x12d4] sm:$0xff]
        %v1019 = vld [vmem:[%s235 + $0x12dc] sm:$0xff]
        %v1020 = vld [vmem:[%s235 + $0x12e4] sm:$0xf]
        %v1021 = vld [vmem:[%s235 + $0x12e8] sm:$0xff]
        %v1022 = vld [vmem:[%s235 + $0x12f0] sm:$0xff]
        %v1023 = vld [vmem:[%s235 + $0x12f8] sm:$0xf]
        %v1024 = vld [vmem:[%s235 + $0x12fc] sm:$0xff]
        %v1025 = vld [vmem:[%s235 + $0x1304] sm:$0xff]
        %v1026 = vld [vmem:[%s235 + $0x130c] sm:$0xf]
        %v1027 = vld [vmem:[%s235 + $0x1310] sm:$0xff]
        %v1028 = vld [vmem:[%s235 + $0x1318] sm:$0xff]
        %v1029 = vld [vmem:[%s235 + $0x1320] sm:$0xf]
        %v1030 = vld [vmem:[%s235 + $0x1324] sm:$0xff]
        %v1031 = vld [vmem:[%s235 + $0x132c] sm:$0xff]
        %v1032 = vld [vmem:[%s235 + $0x1334] sm:$0xf]
        %v1033 = vld [vmem:[%s235 + $0x1338] sm:$0xff]
        %v1034 = vld [vmem:[%s235 + $0x1340] sm:$0xff]
        %v1035 = vld [vmem:[%s235 + $0x1348] sm:$0xf]
        %v1036 = vld [vmem:[%s235 + $0x134c] sm:$0xff]
        %v1037 = vld [vmem:[%s235 + $0x1354] sm:$0xff]
        %v1038 = vld [vmem:[%s235 + $0x135c] sm:$0xf]
        %v1039 = vld [vmem:[%s235 + $0x1360] sm:$0xff]
        %v1040 = vld [vmem:[%s235 + $0x1368] sm:$0xff]
        %v1041 = vld [vmem:[%s235 + $0x1370] sm:$0xf]
        %v1042 = vld [vmem:[%s235 + $0x1374] sm:$0xff]
        %v1043 = vld [vmem:[%s235 + $0x137c] sm:$0xff]
        %v1044 = vld [vmem:[%s235 + $0x1384] sm:$0xf]
        %v1045 = vld [vmem:[%s235 + $0x1388] sm:$0xff]
        %v1046 = vld [vmem:[%s235 + $0x1390] sm:$0xff]
        %v1047 = vld [vmem:[%s235 + $0x1398] sm:$0xf]
        %v1048 = vld [vmem:[%s235 + $0x139c] sm:$0xff]
        %v1049 = vld [vmem:[%s235 + $0x13a4] sm:$0xff]
        %v1050 = vld [vmem:[%s235 + $0x13ac] sm:$0xf]
        %v1051 = vld [vmem:[%s235 + $0x13b0] sm:$0xff]
        %v1052 = vld [vmem:[%s235 + $0x13b8] sm:$0xff]
        %v1053 = vld [vmem:[%s235 + $0x13c0] sm:$0xf]
        %v1054 = vld [vmem:[%s235 + $0x13c4] sm:$0xff]
        %v1055 = vld [vmem:[%s235 + $0x13cc] sm:$0xff]
        %v1056 = vld [vmem:[%s235 + $0x13d4] sm:$0xf]
        %v1057 = vld [vmem:[%s235 + $0x13d8] sm:$0xff]
        %v1058 = vld [vmem:[%s235 + $0x13e0] sm:$0xff]
        %v1059 = vld [vmem:[%s235 + $0x13e8] sm:$0xf]
        %v1060 = vld [vmem:[%s235 + $0x13ec] sm:$0xff]
        %v1061 = vld [vmem:[%s235 + $0x13f4] sm:$0xff]
        %v1062 = vld [vmem:[%s235 + $0x13fc] sm:$0xf]
        %v1063 = vld [vmem:[%s235 + $0x1400] sm:$0xff]
        %v1064 = vld [vmem:[%s235 + $0x1408] sm:$0xff]
        %v1065 = vld [vmem:[%s235 + $0x1410] sm:$0xf]
        %v1066 = vld [vmem:[%s235 + $0x1414] sm:$0xff]
        %v1067 = vld [vmem:[%s235 + $0x141c] sm:$0xff]
        %v1068 = vld [vmem:[%s235 + $0x1424] sm:$0xf]
        %v1069 = vld [vmem:[%s235 + $0x1428] sm:$0xff]
        %v1070 = vld [vmem:[%s235 + $0x1430] sm:$0xff]
        %v1071 = vld [vmem:[%s235 + $0x1438] sm:$0xf]
        %v1072 = vld [vmem:[%s235 + $0x143c] sm:$0xff]
        %v1073 = vld [vmem:[%s235 + $0x1444] sm:$0xff]
        %v1074 = vld [vmem:[%s235 + $0x144c] sm:$0xf]
        %v1075 = vld [vmem:[%s235 + $0x1450] sm:$0xff]
        %v1076 = vld [vmem:[%s235 + $0x1458] sm:$0xff]
        %v1077 = vld [vmem:[%s235 + $0x1460] sm:$0xf]
        %v1078 = vld [vmem:[%s235 + $0x1464] sm:$0xff]
        %v1079 = vld [vmem:[%s235 + $0x146c] sm:$0xff]
        %v1080 = vld [vmem:[%s235 + $0x1474] sm:$0xf]
        %v1081 = vld [vmem:[%s235 + $0x1478] sm:$0xff]
        %v1082 = vld [vmem:[%s235 + $0x1480] sm:$0xff]
        %v1083 = vld [vmem:[%s235 + $0x1488] sm:$0xf]
        %v1084 = vld [vmem:[%s235 + $0x148c] sm:$0xff]
        %v1085 = vld [vmem:[%s235 + $0x1494] sm:$0xff]
        %v1086 = vld [vmem:[%s235 + $0x149c] sm:$0xf]
        %v1087 = vld [vmem:[%s235 + $0x14a0] sm:$0xff]
        %v1088 = vld [vmem:[%s235 + $0x14a8] sm:$0xff]
        %v1089 = vld [vmem:[%s235 + $0x14b0] sm:$0xf]
        %v1090 = vld [vmem:[%s235 + $0x14b4] sm:$0xff]
        %v1091 = vld [vmem:[%s235 + $0x14bc] sm:$0xff]
        %v1092 = vld [vmem:[%s235 + $0x14c4] sm:$0xf]
        %v1093 = vld [vmem:[%s235 + $0x14c8] sm:$0xff]
        %v1094 = vld [vmem:[%s235 + $0x14d0] sm:$0xff]
        %v1095 = vld [vmem:[%s235 + $0x14d8] sm:$0xf]
        %v1096 = vld [vmem:[%s235 + $0x14dc] sm:$0xff]
        %v1097 = vld [vmem:[%s235 + $0x14e4] sm:$0xff]
        %v1098 = vld [vmem:[%s235 + $0x14ec] sm:$0xf]
        %v1099 = vld [vmem:[%s235 + $0x14f0] sm:$0xff]
        %v1100 = vld [vmem:[%s235 + $0x14f8] sm:$0xff]
        %v1101 = vld [vmem:[%s235 + $0x1500] sm:$0xf]
        %v1102 = vld [vmem:[%s235 + $0x1504] sm:$0xff]
        %v1103 = vld [vmem:[%s235 + $0x150c] sm:$0xff]
        %v1104 = vld [vmem:[%s235 + $0x1514] sm:$0xf]
        %v1105 = vld [vmem:[%s235 + $0x1518] sm:$0xff]
        %v1106 = vld [vmem:[%s235 + $0x1520] sm:$0xff]
        %v1107 = vld [vmem:[%s235 + $0x1528] sm:$0xf]
        %v1108 = vld [vmem:[%s235 + $0x152c] sm:$0xff]
        %v1109 = vld [vmem:[%s235 + $0x1534] sm:$0xff]
        %v1110 = vld [vmem:[%s235 + $0x153c] sm:$0xf]
        %v1111 = vld [vmem:[%s235 + $0x1540] sm:$0xff]
        %v1112 = vld [vmem:[%s235 + $0x1548] sm:$0xff]
        %v1113 = vld [vmem:[%s235 + $0x1550] sm:$0xf]
        %v1114 = vld [vmem:[%s235 + $0x1554] sm:$0xff]
        %v1115 = vld [vmem:[%s235 + $0x155c] sm:$0xff]
        %v1116 = vld [vmem:[%s235 + $0x1564] sm:$0xf]
        %v1117 = vld [vmem:[%s235 + $0x1568] sm:$0xff]
        %v1118 = vld [vmem:[%s235 + $0x1570] sm:$0xff]
        %v1119 = vld [vmem:[%s235 + $0x1578] sm:$0xf]
        %v1120 = vld [vmem:[%s235 + $0x157c] sm:$0xff]
        %v1121 = vld [vmem:[%s235 + $0x1584] sm:$0xff]
        %v1122 = vld [vmem:[%s235 + $0x158c] sm:$0xf]
        %v1123 = vld [vmem:[%s235 + $0x1590] sm:$0xff]
        %v1124 = vld [vmem:[%s235 + $0x1598] sm:$0xff]
        %v1125 = vld [vmem:[%s235 + $0x15a0] sm:$0xf]
        %v1126 = vld [vmem:[%s235 + $0x15a4] sm:$0xff]
        %v1127 = vld [vmem:[%s235 + $0x15ac] sm:$0xff]
        %v1128 = vld [vmem:[%s235 + $0x15b4] sm:$0xf]
        %v1129 = vld [vmem:[%s235 + $0x15b8] sm:$0xff]
        %v1130 = vld [vmem:[%s235 + $0x15c0] sm:$0xff]
        %v1131 = vld [vmem:[%s235 + $0x15c8] sm:$0xf]
        %v1132 = vld [vmem:[%s235 + $0x15cc] sm:$0xff]
        %v1133 = vld [vmem:[%s235 + $0x15d4] sm:$0xff]
        %v1134 = vld [vmem:[%s235 + $0x15dc] sm:$0xf]
        %v1135 = vld [vmem:[%s235 + $0x15e0] sm:$0xff]
        %v1136 = vld [vmem:[%s235 + $0x15e8] sm:$0xff]
        %v1137 = vld [vmem:[%s235 + $0x15f0] sm:$0xf]
        %v1138 = vld [vmem:[%s235 + $0x15f4] sm:$0xff]
        %v1139 = vld [vmem:[%s235 + $0x15fc] sm:$0xff]
        %v1140 = vld [vmem:[%s235 + $0x1604] sm:$0xf]
        %v1141 = vld [vmem:[%s235 + $0x1608] sm:$0xff]
        %v1142 = vld [vmem:[%s235 + $0x1610] sm:$0xff]
        %v1143 = vld [vmem:[%s235 + $0x1618] sm:$0xf]
        %v1144 = vld [vmem:[%s235 + $0x161c] sm:$0xff]
        %v1145 = vld [vmem:[%s235 + $0x1624] sm:$0xff]
        %v1146 = vld [vmem:[%s235 + $0x162c] sm:$0xf]
        %v1147 = vld [vmem:[%s235 + $0x1630] sm:$0xff]
        %v1148 = vld [vmem:[%s235 + $0x1638] sm:$0xff]
        %v1149 = vld [vmem:[%s235 + $0x1640] sm:$0xf]
        %v1150 = vld [vmem:[%s235 + $0x1644] sm:$0xff]
        %v1151 = vld [vmem:[%s235 + $0x164c] sm:$0xff]
        %v1152 = vld [vmem:[%s235 + $0x1654] sm:$0xf]
        %v1153 = vld [vmem:[%s235 + $0x1658] sm:$0xff]
        %v1154 = vld [vmem:[%s235 + $0x1660] sm:$0xff]
        %v1155 = vld [vmem:[%s235 + $0x1668] sm:$0xf]
        %v1156 = vld [vmem:[%s235 + $0x166c] sm:$0xff]
        %v1157 = vld [vmem:[%s235 + $0x1674] sm:$0xff]
        %v1158 = vld [vmem:[%s235 + $0x167c] sm:$0xf]
        %v1159 = vld [vmem:[%s235 + $0x1680] sm:$0xff]
        %v1160 = vld [vmem:[%s235 + $0x1688] sm:$0xff]
        %v1161 = vld [vmem:[%s235 + $0x1690] sm:$0xf]
        %v1162 = vld [vmem:[%s235 + $0x1694] sm:$0xff]
        %v1163 = vld [vmem:[%s235 + $0x169c] sm:$0xff]
        %v1164 = vld [vmem:[%s235 + $0x16a4] sm:$0xf]
        %v1165 = vld [vmem:[%s235 + $0x16a8] sm:$0xff]
        %v1166 = vld [vmem:[%s235 + $0x16b0] sm:$0xff]
        %v1167 = vld [vmem:[%s235 + $0x16b8] sm:$0xf]
        %v1168 = vld [vmem:[%s235 + $0x16bc] sm:$0xff]
        %v1169 = vld [vmem:[%s235 + $0x16c4] sm:$0xff]
        %v1170 = vld [vmem:[%s235 + $0x16cc] sm:$0xf]
        %v1171 = vld [vmem:[%s235 + $0x16d0] sm:$0xff]
        %v1172 = vld [vmem:[%s235 + $0x16d8] sm:$0xff]
        %v1173 = vld [vmem:[%s235 + $0x16e0] sm:$0xf]
        %v1174 = vld [vmem:[%s235 + $0x16e4] sm:$0xff]
        %v1175 = vld [vmem:[%s235 + $0x16ec] sm:$0xff]
        %v1176 = vld [vmem:[%s235 + $0x16f4] sm:$0xf]
        %v1177 = vld [vmem:[%s235 + $0x16f8] sm:$0xff]
        %v1178 = vld [vmem:[%s235 + $0x1700] sm:$0xff]
        %v1179 = vld [vmem:[%s235 + $0x1708] sm:$0xf]
        %v1180 = vld [vmem:[%s235 + $0x170c] sm:$0xff]
        %v1181 = vld [vmem:[%s235 + $0x1714] sm:$0xff]
        %v1182 = vld [vmem:[%s235 + $0x171c] sm:$0xf]
        %v1183 = vld [vmem:[%s235 + $0x1720] sm:$0xff]
        %v1184 = vld [vmem:[%s235 + $0x1728] sm:$0xff]
        %v1185 = vld [vmem:[%s235 + $0x1730] sm:$0xf]
        %v1186 = vld [vmem:[%s235 + $0x1734] sm:$0xff]
        %v1187 = vld [vmem:[%s235 + $0x173c] sm:$0xff]
        %v1188 = vld [vmem:[%s235 + $0x1744] sm:$0xf]
        %v1189 = vld [vmem:[%s235 + $0x1748] sm:$0xff]
        %v1190 = vld [vmem:[%s235 + $0x1750] sm:$0xff]
        %v1191 = vld [vmem:[%s235 + $0x1758] sm:$0xf]
        %v1192 = vld [vmem:[%s235 + $0x175c] sm:$0xff]
        %v1193 = vld [vmem:[%s235 + $0x1764] sm:$0xff]
        %v1194 = vld [vmem:[%s235 + $0x176c] sm:$0xf]
        %v1195 = vld [vmem:[%s235 + $0x1770] sm:$0xff]
        %v1196 = vld [vmem:[%s235 + $0x1778] sm:$0xff]
        %v1197 = vld [vmem:[%s235 + $0x1780] sm:$0xf]
        %v1198 = vld [vmem:[%s235 + $0x1784] sm:$0xff]
        %v1199 = vld [vmem:[%s235 + $0x178c] sm:$0xff]
        %v1200 = vld [vmem:[%s235 + $0x1794] sm:$0xf]
        %v1201 = vld [vmem:[%s235 + $0x1798] sm:$0xff]
        %v1202 = vld [vmem:[%s235 + $0x17a0] sm:$0xff]
        %v1203 = vld [vmem:[%s235 + $0x17a8] sm:$0xf]
        %v1204 = vld [vmem:[%s235 + $0x17ac] sm:$0xff]
        %v1205 = vld [vmem:[%s235 + $0x17b4] sm:$0xff]
        %v1206 = vld [vmem:[%s235 + $0x17bc] sm:$0xf]
        %v1207 = vld [vmem:[%s235 + $0x17c0] sm:$0xff]
        %v1208 = vld [vmem:[%s235 + $0x17c8] sm:$0xff]
        %v1209 = vld [vmem:[%s235 + $0x17d0] sm:$0xf]
        %v1210 = vld [vmem:[%s235 + $0x17d4] sm:$0xff]
        %v1211 = vld [vmem:[%s235 + $0x17dc] sm:$0xff]
        %v1212 = vld [vmem:[%s235 + $0x17e4] sm:$0xf]
        %v1213 = vld [vmem:[%s235 + $0x17e8] sm:$0xff]
        %v1214 = vld [vmem:[%s235 + $0x17f0] sm:$0xff]
        %v1215 = vld [vmem:[%s235 + $0x17f8] sm:$0xf]
        %v1216 = vld [vmem:[%s235 + $0x17fc] sm:$0xff]
        %v1217 = vld [vmem:[%s235 + $0x1804] sm:$0xff]
        %v1218 = vld [vmem:[%s235 + $0x180c] sm:$0xf]
        %v1219 = vld [vmem:[%s235 + $0x1810] sm:$0xff]
        %v1220 = vld [vmem:[%s235 + $0x1818] sm:$0xff]
        %v1221 = vld [vmem:[%s235 + $0x1820] sm:$0xf]
        %v1222 = vld [vmem:[%s235 + $0x1824] sm:$0xff]
        %v1223 = vld [vmem:[%s235 + $0x182c] sm:$0xff]
        %v1224 = vld [vmem:[%s235 + $0x1834] sm:$0xf]
        %v1225 = vld [vmem:[%s235 + $0x1838] sm:$0xff]
        %v1226 = vld [vmem:[%s235 + $0x1840] sm:$0xff]
        %v1227 = vld [vmem:[%s235 + $0x1848] sm:$0xf]
        %v1228 = vld [vmem:[%s235 + $0x184c] sm:$0xff]
        %v1229 = vld [vmem:[%s235 + $0x1854] sm:$0xff]
        %v1230 = vld [vmem:[%s235 + $0x185c] sm:$0xf]
        %v1231 = vld [vmem:[%s235 + $0x1860] sm:$0xff]
        %v1232 = vld [vmem:[%s235 + $0x1868] sm:$0xff]
        %v1233 = vld [vmem:[%s235 + $0x1870] sm:$0xf]
        %v1234 = vld [vmem:[%s235 + $0x1874] sm:$0xff]
        %v1235 = vld [vmem:[%s235 + $0x187c] sm:$0xff]
        %v1236 = vld [vmem:[%s235 + $0x1884] sm:$0xf]
        %v1237 = vld [vmem:[%s235 + $0x1888] sm:$0xff]
        %v1238 = vld [vmem:[%s235 + $0x1890] sm:$0xff]
        %v1239 = vld [vmem:[%s235 + $0x1898] sm:$0xf]
        %v1240 = vld [vmem:[%s235 + $0x189c] sm:$0xff]
        %v1241 = vld [vmem:[%s235 + $0x18a4] sm:$0xff]
        %v1242 = vld [vmem:[%s235 + $0x18ac] sm:$0xf]
        %v1243 = vld [vmem:[%s235 + $0x18b0] sm:$0xff]
        %v1244 = vld [vmem:[%s235 + $0x18b8] sm:$0xff]
        %v1245 = vld [vmem:[%s235 + $0x18c0] sm:$0xf]
        %v1246 = vld [vmem:[%s235 + $0x18c4] sm:$0xff]
        %v1247 = vld [vmem:[%s235 + $0x18cc] sm:$0xff]
        %v1248 = vld [vmem:[%s235 + $0x18d4] sm:$0xf]
        %v1249 = vld [vmem:[%s235 + $0x18d8] sm:$0xff]
        %v1250 = vld [vmem:[%s235 + $0x18e0] sm:$0xff]
        %v1251 = vld [vmem:[%s235 + $0x18e8] sm:$0xf]
        %v1252 = vld [vmem:[%s235 + $0x18ec] sm:$0xff]
        %v1253 = vld [vmem:[%s235 + $0x18f4] sm:$0xff]
        %v1254 = vld [vmem:[%s235 + $0x18fc] sm:$0xf]
        %v1255 = vld [vmem:[%s244] sm:$0x1f]
        %v1257 = vlaneseq
        %v1258 = vshrl.u32 %v1257, 7
        %v1259 = vsub.s32 0, %v1258
        %v1260 = vrot.slane %v1255, %v1259
        %v1261 = vlaneseq
        %v1262 = vshrl.u32 %v1261, 7
        %v1263 = vsub.s32 1, %v1262
        %v1264 = vrot.slane %v1255, %v1263
        %v1265 = vlaneseq
        %v1266 = vshrl.u32 %v1265, 7
        %v1267 = vsub.s32 2, %v1266
        %v1268 = vrot.slane %v1255, %v1267
        %v1269 = vlaneseq
        %v1270 = vshrl.u32 %v1269, 7
        %v1271 = vsub.s32 3, %v1270
        %v1272 = vrot.slane %v1255, %v1271
        %v1273 = vlaneseq
        %v1274 = vshrl.u32 %v1273, 7
        %v1275 = vsub.s32 4, %v1274
        %v1276 = vrot.slane %v1255, %v1275
        %v1285 = vcombine.high %v292, %v292
        %v1287 = vunpack.c.l.s4 1966171168
        %v1288 = vunpack.c.0.s8 %v1287
        %v1289 = vlaneseq
        %v1290 = vshrl.u32 %v1289, 7
        %v1291 = vsub.s32 %v1288, %v1290
        %v1292 = vrot.slane %v292, %v1291
        %v1294 = vunpack.c.l.s4 1966171168
        %v1295 = vunpack.c.0.s8 %v1294
        %v1296 = vlaneseq
        %v1297 = vshrl.u32 %v1296, 7
        %v1298 = vsub.s32 %v1295, %v1297
        %v1299 = vrot.slane %v1285, %v1298
        %v1300 = vcombine.high %v1292, %v1292
        %v1301 = vcombine.high %v1299, %v1299
        %v1303 = vunpack.c.l.s4 1966171168
        %v1304 = vunpack.c.0.s8 %v1303
        %v1305 = vlaneseq
        %v1306 = vshrl.u32 %v1305, 7
        %v1307 = vsub.s32 %v1304, %v1306
        %v1308 = vrot.slane %v1292, %v1307
        %v1310 = vunpack.c.l.s4 1966171168
        %v1311 = vunpack.c.0.s8 %v1310
        %v1312 = vlaneseq
        %v1313 = vshrl.u32 %v1312, 7
        %v1314 = vsub.s32 %v1311, %v1313
        %v1315 = vrot.slane %v1299, %v1314
        %v1317 = vunpack.c.l.s4 1966171168
        %v1318 = vunpack.c.0.s8 %v1317
        %v1319 = vlaneseq
        %v1320 = vshrl.u32 %v1319, 7
        %v1321 = vsub.s32 %v1318, %v1320
        %v1322 = vrot.slane %v1300, %v1321
        %v1324 = vunpack.c.l.s4 1966171168
        %v1325 = vunpack.c.0.s8 %v1324
        %v1326 = vlaneseq
        %v1327 = vshrl.u32 %v1326, 7
        %v1328 = vsub.s32 %v1325, %v1327
        %v1329 = vrot.slane %v1301, %v1328
        %v1330 = vcombine.high %v1308, %v1308
        %v1331 = vcombine.high %v1315, %v1315
        %v1332 = vcombine.high %v1322, %v1322
        %v1333 = vcombine.high %v1329, %v1329
        %v1334 = vcombine.high %v293, %v293
        %v1336 = vunpack.c.l.s4 1966171168
        %v1337 = vunpack.c.0.s8 %v1336
        %v1338 = vlaneseq
        %v1339 = vshrl.u32 %v1338, 7
        %v1340 = vsub.s32 %v1337, %v1339
        %v1341 = vrot.slane %v293, %v1340
        %v1343 = vunpack.c.l.s4 1966171168
        %v1344 = vunpack.c.0.s8 %v1343
        %v1345 = vlaneseq
        %v1346 = vshrl.u32 %v1345, 7
        %v1347 = vsub.s32 %v1344, %v1346
        %v1348 = vrot.slane %v1334, %v1347
        %v1349 = vcombine.high %v1341, %v1341
        %v1350 = vcombine.high %v1348, %v1348
        %v1352 = vunpack.c.l.s4 1966171168
        %v1353 = vunpack.c.0.s8 %v1352
        %v1354 = vlaneseq
        %v1355 = vshrl.u32 %v1354, 7
        %v1356 = vsub.s32 %v1353, %v1355
        %v1357 = vrot.slane %v1341, %v1356
        %v1359 = vunpack.c.l.s4 1966171168
        %v1360 = vunpack.c.0.s8 %v1359
        %v1361 = vlaneseq
        %v1362 = vshrl.u32 %v1361, 7
        %v1363 = vsub.s32 %v1360, %v1362
        %v1364 = vrot.slane %v1348, %v1363
        %v1366 = vunpack.c.l.s4 1966171168
        %v1367 = vunpack.c.0.s8 %v1366
        %v1368 = vlaneseq
        %v1369 = vshrl.u32 %v1368, 7
        %v1370 = vsub.s32 %v1367, %v1369
        %v1371 = vrot.slane %v1349, %v1370
        %v1373 = vunpack.c.l.s4 1966171168
        %v1374 = vunpack.c.0.s8 %v1373
        %v1375 = vlaneseq
        %v1376 = vshrl.u32 %v1375, 7
        %v1377 = vsub.s32 %v1374, %v1376
        %v1378 = vrot.slane %v1350, %v1377
        %v1379 = vcombine.high %v1357, %v1357
        %v1380 = vcombine.high %v1364, %v1364
        %v1381 = vcombine.high %v1371, %v1371
        %v1382 = vcombine.high %v1378, %v1378
        %v1384 = vunpack.c.l.s4 1966171168
        %v1385 = vunpack.c.0.s8 %v1384
        %v1386 = vlaneseq
        %v1387 = vshrl.u32 %v1386, 7
        %v1388 = vsub.s32 %v1385, %v1387
        %v1389 = vrot.slane %v294, %v1388
        %v1390 = vcombine.high %v1389, %v1389
        %v1392 = vunpack.c.l.s4 1966171168
        %v1393 = vunpack.c.0.s8 %v1392
        %v1394 = vlaneseq
        %v1395 = vshrl.u32 %v1394, 7
        %v1396 = vsub.s32 %v1393, %v1395
        %v1397 = vrot.slane %v1389, %v1396
        %v1399 = vunpack.c.l.s4 1966171168
        %v1400 = vunpack.c.0.s8 %v1399
        %v1401 = vlaneseq
        %v1402 = vshrl.u32 %v1401, 7
        %v1403 = vsub.s32 %v1400, %v1402
        %v1404 = vrot.slane %v1390, %v1403
        %v1405 = vcombine.high %v1397, %v1397
        %v1406 = vcombine.high %v1404, %v1404
        %v2387 = vunpack.c.l.b16 %v295
        %v2388 = vunpack.c.h.b16 %v295
        %v2389 = vunpack.c.l.b16 %v296
        %v2390 = vunpack.c.h.b16 %v296
        %v2391 = vunpack.c.l.b16 %v297
        %v2392 = vunpack.c.l.b16 %v298
        %v2393 = vunpack.c.h.b16 %v298
        %v2394 = vunpack.c.l.b16 %v299
        %v2395 = vunpack.c.h.b16 %v299
        %v2396 = vunpack.c.l.b16 %v300
        %v2397 = vunpack.c.l.b16 %v301
        %v2398 = vunpack.c.h.b16 %v301
        %v2399 = vunpack.c.l.b16 %v302
        %v2400 = vunpack.c.h.b16 %v302
        %v2401 = vunpack.c.l.b16 %v303
        %v2402 = vunpack.c.l.b16 %v304
        %v2403 = vunpack.c.h.b16 %v304
        %v2404 = vunpack.c.l.b16 %v305
        %v2405 = vunpack.c.h.b16 %v305
        %v2406 = vunpack.c.l.b16 %v306
        %v2407 = vunpack.c.l.b16 %v307
        %v2408 = vunpack.c.h.b16 %v307
        %v2409 = vunpack.c.l.b16 %v308
        %v2410 = vunpack.c.h.b16 %v308
        %v2411 = vunpack.c.l.b16 %v309
        %v2412 = vunpack.c.l.b16 %v310
        %v2413 = vunpack.c.h.b16 %v310
        %v2414 = vunpack.c.l.b16 %v311
        %v2415 = vunpack.c.h.b16 %v311
        %v2416 = vunpack.c.l.b16 %v312
        %v2417 = vunpack.c.l.b16 %v313
        %v2418 = vunpack.c.h.b16 %v313
        %v2419 = vunpack.c.l.b16 %v314
        %v2420 = vunpack.c.h.b16 %v314
        %v2421 = vunpack.c.l.b16 %v315
        %v2422 = vunpack.c.l.b16 %v316
        %v2423 = vunpack.c.h.b16 %v316
        %v2424 = vunpack.c.l.b16 %v317
        %v2425 = vunpack.c.h.b16 %v317
        %v2426 = vunpack.c.l.b16 %v318
        %v2427 = vunpack.c.l.b16 %v319
        %v2428 = vunpack.c.h.b16 %v319
        %v2429 = vunpack.c.l.b16 %v320
        %v2430 = vunpack.c.h.b16 %v320
        %v2431 = vunpack.c.l.b16 %v321
        %v2432 = vunpack.c.l.b16 %v322
        %v2433 = vunpack.c.h.b16 %v322
        %v2434 = vunpack.c.l.b16 %v323
        %v2435 = vunpack.c.h.b16 %v323
        %v2436 = vunpack.c.l.b16 %v324
        %v2437 = vunpack.c.l.b16 %v325
        %v2438 = vunpack.c.h.b16 %v325
        %v2439 = vunpack.c.l.b16 %v326
        %v2440 = vunpack.c.h.b16 %v326
        %v2441 = vunpack.c.l.b16 %v327
        %v2442 = vunpack.c.l.b16 %v328
        %v2443 = vunpack.c.h.b16 %v328
        %v2444 = vunpack.c.l.b16 %v329
        %v2445 = vunpack.c.h.b16 %v329
        %v2446 = vunpack.c.l.b16 %v330
        %v2447 = vunpack.c.l.b16 %v331
        %v2448 = vunpack.c.h.b16 %v331
        %v2449 = vunpack.c.l.b16 %v332
        %v2450 = vunpack.c.h.b16 %v332
        %v2451 = vunpack.c.l.b16 %v333
        %v2452 = vunpack.c.l.b16 %v334
        %v2453 = vunpack.c.h.b16 %v334
        %v2454 = vunpack.c.l.b16 %v335
        %v2455 = vunpack.c.h.b16 %v335
        %v2456 = vunpack.c.l.b16 %v336
        %v2457 = vunpack.c.l.b16 %v337
        %v2458 = vunpack.c.h.b16 %v337
        %v2459 = vunpack.c.l.b16 %v338
        %v2460 = vunpack.c.h.b16 %v338
        %v2461 = vunpack.c.l.b16 %v339
        %v2462 = vunpack.c.l.b16 %v340
        %v2463 = vunpack.c.h.b16 %v340
        %v2464 = vunpack.c.l.b16 %v341
        %v2465 = vunpack.c.h.b16 %v341
        %v2466 = vunpack.c.l.b16 %v342
        %v2467 = vunpack.c.l.b16 %v343
        %v2468 = vunpack.c.h.b16 %v343
        %v2469 = vunpack.c.l.b16 %v344
        %v2470 = vunpack.c.h.b16 %v344
        %v2471 = vunpack.c.l.b16 %v345
        %v2472 = vunpack.c.l.b16 %v346
        %v2473 = vunpack.c.h.b16 %v346
        %v2474 = vunpack.c.l.b16 %v347
        %v2475 = vunpack.c.h.b16 %v347
        %v2476 = vunpack.c.l.b16 %v348
        %v2477 = vunpack.c.l.b16 %v349
        %v2478 = vunpack.c.h.b16 %v349
        %v2479 = vunpack.c.l.b16 %v350
        %v2480 = vunpack.c.h.b16 %v350
        %v2481 = vunpack.c.l.b16 %v351
        %v2482 = vunpack.c.l.b16 %v352
        %v2483 = vunpack.c.h.b16 %v352
        %v2484 = vunpack.c.l.b16 %v353
        %v2485 = vunpack.c.h.b16 %v353
        %v2486 = vunpack.c.l.b16 %v354
        %v2487 = vunpack.c.l.b16 %v355
        %v2488 = vunpack.c.h.b16 %v355
        %v2489 = vunpack.c.l.b16 %v356
        %v2490 = vunpack.c.h.b16 %v356
        %v2491 = vunpack.c.l.b16 %v357
        %v2492 = vunpack.c.l.b16 %v358
        %v2493 = vunpack.c.h.b16 %v358
        %v2494 = vunpack.c.l.b16 %v359
        %v2495 = vunpack.c.h.b16 %v359
        %v2496 = vunpack.c.l.b16 %v360
        %v2497 = vunpack.c.l.b16 %v361
        %v2498 = vunpack.c.h.b16 %v361
        %v2499 = vunpack.c.l.b16 %v362
        %v2500 = vunpack.c.h.b16 %v362
        %v2501 = vunpack.c.l.b16 %v363
        %v2502 = vunpack.c.l.b16 %v364
        %v2503 = vunpack.c.h.b16 %v364
        %v2504 = vunpack.c.l.b16 %v365
        %v2505 = vunpack.c.h.b16 %v365
        %v2506 = vunpack.c.l.b16 %v366
        %v2507 = vunpack.c.l.b16 %v367
        %v2508 = vunpack.c.h.b16 %v367
        %v2509 = vunpack.c.l.b16 %v368
        %v2510 = vunpack.c.h.b16 %v368
        %v2511 = vunpack.c.l.b16 %v369
        %v2512 = vunpack.c.l.b16 %v370
        %v2513 = vunpack.c.h.b16 %v370
        %v2514 = vunpack.c.l.b16 %v371
        %v2515 = vunpack.c.h.b16 %v371
        %v2516 = vunpack.c.l.b16 %v372
        %v2517 = vunpack.c.l.b16 %v373
        %v2518 = vunpack.c.h.b16 %v373
        %v2519 = vunpack.c.l.b16 %v374
        %v2520 = vunpack.c.h.b16 %v374
        %v2521 = vunpack.c.l.b16 %v375
        %v2522 = vunpack.c.l.b16 %v376
        %v2523 = vunpack.c.h.b16 %v376
        %v2524 = vunpack.c.l.b16 %v377
        %v2525 = vunpack.c.h.b16 %v377
        %v2526 = vunpack.c.l.b16 %v378
        %v2527 = vunpack.c.l.b16 %v379
        %v2528 = vunpack.c.h.b16 %v379
        %v2529 = vunpack.c.l.b16 %v380
        %v2530 = vunpack.c.h.b16 %v380
        %v2531 = vunpack.c.l.b16 %v381
        %v2532 = vunpack.c.l.b16 %v382
        %v2533 = vunpack.c.h.b16 %v382
        %v2534 = vunpack.c.l.b16 %v383
        %v2535 = vunpack.c.h.b16 %v383
        %v2536 = vunpack.c.l.b16 %v384
        %v2537 = vunpack.c.l.b16 %v385
        %v2538 = vunpack.c.h.b16 %v385
        %v2539 = vunpack.c.l.b16 %v386
        %v2540 = vunpack.c.h.b16 %v386
        %v2541 = vunpack.c.l.b16 %v387
        %v2542 = vunpack.c.l.b16 %v388
        %v2543 = vunpack.c.h.b16 %v388
        %v2544 = vunpack.c.l.b16 %v389
        %v2545 = vunpack.c.h.b16 %v389
        %v2546 = vunpack.c.l.b16 %v390
        %v2547 = vunpack.c.l.b16 %v391
        %v2548 = vunpack.c.h.b16 %v391
        %v2549 = vunpack.c.l.b16 %v392
        %v2550 = vunpack.c.h.b16 %v392
        %v2551 = vunpack.c.l.b16 %v393
        %v2552 = vunpack.c.l.b16 %v394
        %v2553 = vunpack.c.h.b16 %v394
        %v2554 = vunpack.c.l.b16 %v395
        %v2555 = vunpack.c.h.b16 %v395
        %v2556 = vunpack.c.l.b16 %v396
        %v2557 = vunpack.c.l.b16 %v397
        %v2558 = vunpack.c.h.b16 %v397
        %v2559 = vunpack.c.l.b16 %v398
        %v2560 = vunpack.c.h.b16 %v398
        %v2561 = vunpack.c.l.b16 %v399
        %v2562 = vunpack.c.l.b16 %v400
        %v2563 = vunpack.c.h.b16 %v400
        %v2564 = vunpack.c.l.b16 %v401
        %v2565 = vunpack.c.h.b16 %v401
        %v2566 = vunpack.c.l.b16 %v402
        %v2567 = vunpack.c.l.b16 %v403
        %v2568 = vunpack.c.h.b16 %v403
        %v2569 = vunpack.c.l.b16 %v404
        %v2570 = vunpack.c.h.b16 %v404
        %v2571 = vunpack.c.l.b16 %v405
        %v2572 = vunpack.c.l.b16 %v406
        %v2573 = vunpack.c.h.b16 %v406
        %v2574 = vunpack.c.l.b16 %v407
        %v2575 = vunpack.c.h.b16 %v407
        %v2576 = vunpack.c.l.b16 %v408
        %v2577 = vunpack.c.l.b16 %v409
        %v2578 = vunpack.c.h.b16 %v409
        %v2579 = vunpack.c.l.b16 %v410
        %v2580 = vunpack.c.h.b16 %v410
        %v2581 = vunpack.c.l.b16 %v411
        %v2582 = vunpack.c.l.b16 %v412
        %v2583 = vunpack.c.h.b16 %v412
        %v2584 = vunpack.c.l.b16 %v413
        %v2585 = vunpack.c.h.b16 %v413
        %v2586 = vunpack.c.l.b16 %v414
        %v2587 = vunpack.c.l.b16 %v415
        %v2588 = vunpack.c.h.b16 %v415
        %v2589 = vunpack.c.l.b16 %v416
        %v2590 = vunpack.c.h.b16 %v416
        %v2591 = vunpack.c.l.b16 %v417
        %v2592 = vunpack.c.l.b16 %v418
        %v2593 = vunpack.c.h.b16 %v418
        %v2594 = vunpack.c.l.b16 %v419
        %v2595 = vunpack.c.h.b16 %v419
        %v2596 = vunpack.c.l.b16 %v420
        %v2597 = vunpack.c.l.b16 %v421
        %v2598 = vunpack.c.h.b16 %v421
        %v2599 = vunpack.c.l.b16 %v422
        %v2600 = vunpack.c.h.b16 %v422
        %v2601 = vunpack.c.l.b16 %v423
        %v2602 = vunpack.c.l.b16 %v424
        %v2603 = vunpack.c.h.b16 %v424
        %v2604 = vunpack.c.l.b16 %v425
        %v2605 = vunpack.c.h.b16 %v425
        %v2606 = vunpack.c.l.b16 %v426
        %v2607 = vunpack.c.l.b16 %v427
        %v2608 = vunpack.c.h.b16 %v427
        %v2609 = vunpack.c.l.b16 %v428
        %v2610 = vunpack.c.h.b16 %v428
        %v2611 = vunpack.c.l.b16 %v429
        %v2612 = vunpack.c.l.b16 %v430
        %v2613 = vunpack.c.h.b16 %v430
        %v2614 = vunpack.c.l.b16 %v431
        %v2615 = vunpack.c.h.b16 %v431
        %v2616 = vunpack.c.l.b16 %v432
        %v2617 = vunpack.c.l.b16 %v433
        %v2618 = vunpack.c.h.b16 %v433
        %v2619 = vunpack.c.l.b16 %v434
        %v2620 = vunpack.c.h.b16 %v434
        %v2621 = vunpack.c.l.b16 %v435
        %v2622 = vunpack.c.l.b16 %v436
        %v2623 = vunpack.c.h.b16 %v436
        %v2624 = vunpack.c.l.b16 %v437
        %v2625 = vunpack.c.h.b16 %v437
        %v2626 = vunpack.c.l.b16 %v438
        %v2627 = vunpack.c.l.b16 %v439
        %v2628 = vunpack.c.h.b16 %v439
        %v2629 = vunpack.c.l.b16 %v440
        %v2630 = vunpack.c.h.b16 %v440
        %v2631 = vunpack.c.l.b16 %v441
        %v2632 = vunpack.c.l.b16 %v442
        %v2633 = vunpack.c.h.b16 %v442
        %v2634 = vunpack.c.l.b16 %v443
        %v2635 = vunpack.c.h.b16 %v443
        %v2636 = vunpack.c.l.b16 %v444
        %v2637 = vunpack.c.l.b16 %v445
        %v2638 = vunpack.c.h.b16 %v445
        %v2639 = vunpack.c.l.b16 %v446
        %v2640 = vunpack.c.h.b16 %v446
        %v2641 = vunpack.c.l.b16 %v447
        %v2642 = vunpack.c.l.b16 %v448
        %v2643 = vunpack.c.h.b16 %v448
        %v2644 = vunpack.c.l.b16 %v449
        %v2645 = vunpack.c.h.b16 %v449
        %v2646 = vunpack.c.l.b16 %v450
        %v2647 = vunpack.c.l.b16 %v451
        %v2648 = vunpack.c.h.b16 %v451
        %v2649 = vunpack.c.l.b16 %v452
        %v2650 = vunpack.c.h.b16 %v452
        %v2651 = vunpack.c.l.b16 %v453
        %v2652 = vunpack.c.l.b16 %v454
        %v2653 = vunpack.c.h.b16 %v454
        %v2654 = vunpack.c.l.b16 %v455
        %v2655 = vunpack.c.h.b16 %v455
        %v2656 = vunpack.c.l.b16 %v456
        %v2657 = vunpack.c.l.b16 %v457
        %v2658 = vunpack.c.h.b16 %v457
        %v2659 = vunpack.c.l.b16 %v458
        %v2660 = vunpack.c.h.b16 %v458
        %v2661 = vunpack.c.l.b16 %v459
        %v2662 = vunpack.c.l.b16 %v460
        %v2663 = vunpack.c.h.b16 %v460
        %v2664 = vunpack.c.l.b16 %v461
        %v2665 = vunpack.c.h.b16 %v461
        %v2666 = vunpack.c.l.b16 %v462
        %v2667 = vunpack.c.l.b16 %v463
        %v2668 = vunpack.c.h.b16 %v463
        %v2669 = vunpack.c.l.b16 %v464
        %v2670 = vunpack.c.h.b16 %v464
        %v2671 = vunpack.c.l.b16 %v465
        %v2672 = vunpack.c.l.b16 %v466
        %v2673 = vunpack.c.h.b16 %v466
        %v2674 = vunpack.c.l.b16 %v467
        %v2675 = vunpack.c.h.b16 %v467
        %v2676 = vunpack.c.l.b16 %v468
        %v2677 = vunpack.c.l.b16 %v469
        %v2678 = vunpack.c.h.b16 %v469
        %v2679 = vunpack.c.l.b16 %v470
        %v2680 = vunpack.c.h.b16 %v470
        %v2681 = vunpack.c.l.b16 %v471
        %v2682 = vunpack.c.l.b16 %v472
        %v2683 = vunpack.c.h.b16 %v472
        %v2684 = vunpack.c.l.b16 %v473
        %v2685 = vunpack.c.h.b16 %v473
        %v2686 = vunpack.c.l.b16 %v474
        %v2687 = vunpack.c.l.b16 %v475
        %v2688 = vunpack.c.h.b16 %v475
        %v2689 = vunpack.c.l.b16 %v476
        %v2690 = vunpack.c.h.b16 %v476
        %v2691 = vunpack.c.l.b16 %v477
        %v2692 = vunpack.c.l.b16 %v478
        %v2693 = vunpack.c.h.b16 %v478
        %v2694 = vunpack.c.l.b16 %v479
        %v2695 = vunpack.c.h.b16 %v479
        %v2696 = vunpack.c.l.b16 %v480
        %v2697 = vunpack.c.l.b16 %v481
        %v2698 = vunpack.c.h.b16 %v481
        %v2699 = vunpack.c.l.b16 %v482
        %v2700 = vunpack.c.h.b16 %v482
        %v2701 = vunpack.c.l.b16 %v483
        %v2702 = vunpack.c.l.b16 %v484
        %v2703 = vunpack.c.h.b16 %v484
        %v2704 = vunpack.c.l.b16 %v485
        %v2705 = vunpack.c.h.b16 %v485
        %v2706 = vunpack.c.l.b16 %v486
        %v2707 = vunpack.c.l.b16 %v487
        %v2708 = vunpack.c.h.b16 %v487
        %v2709 = vunpack.c.l.b16 %v488
        %v2710 = vunpack.c.h.b16 %v488
        %v2711 = vunpack.c.l.b16 %v489
        %v2712 = vunpack.c.l.b16 %v490
        %v2713 = vunpack.c.h.b16 %v490
        %v2714 = vunpack.c.l.b16 %v491
        %v2715 = vunpack.c.h.b16 %v491
        %v2716 = vunpack.c.l.b16 %v492
        %v2717 = vunpack.c.l.b16 %v493
        %v2718 = vunpack.c.h.b16 %v493
        %v2719 = vunpack.c.l.b16 %v494
        %v2720 = vunpack.c.h.b16 %v494
        %v2721 = vunpack.c.l.b16 %v495
        %v2722 = vunpack.c.l.b16 %v496
        %v2723 = vunpack.c.h.b16 %v496
        %v2724 = vunpack.c.l.b16 %v497
        %v2725 = vunpack.c.h.b16 %v497
        %v2726 = vunpack.c.l.b16 %v498
        %v2727 = vunpack.c.l.b16 %v499
        %v2728 = vunpack.c.h.b16 %v499
        %v2729 = vunpack.c.l.b16 %v500
        %v2730 = vunpack.c.h.b16 %v500
        %v2731 = vunpack.c.l.b16 %v501
        %v2732 = vunpack.c.l.b16 %v502
        %v2733 = vunpack.c.h.b16 %v502
        %v2734 = vunpack.c.l.b16 %v503
        %v2735 = vunpack.c.h.b16 %v503
        %v2736 = vunpack.c.l.b16 %v504
        %v2737 = vunpack.c.l.b16 %v505
        %v2738 = vunpack.c.h.b16 %v505
        %v2739 = vunpack.c.l.b16 %v506
        %v2740 = vunpack.c.h.b16 %v506
        %v2741 = vunpack.c.l.b16 %v507
        %v2742 = vunpack.c.l.b16 %v508
        %v2743 = vunpack.c.h.b16 %v508
        %v2744 = vunpack.c.l.b16 %v509
        %v2745 = vunpack.c.h.b16 %v509
        %v2746 = vunpack.c.l.b16 %v510
        %v2747 = vunpack.c.l.b16 %v511
        %v2748 = vunpack.c.h.b16 %v511
        %v2749 = vunpack.c.l.b16 %v512
        %v2750 = vunpack.c.h.b16 %v512
        %v2751 = vunpack.c.l.b16 %v513
        %v2752 = vunpack.c.l.b16 %v514
        %v2753 = vunpack.c.h.b16 %v514
        %v2754 = vunpack.c.l.b16 %v515
        %v2755 = vunpack.c.h.b16 %v515
        %v2756 = vunpack.c.l.b16 %v516
        %v2757 = vunpack.c.l.b16 %v517
        %v2758 = vunpack.c.h.b16 %v517
        %v2759 = vunpack.c.l.b16 %v518
        %v2760 = vunpack.c.h.b16 %v518
        %v2761 = vunpack.c.l.b16 %v519
        %v2762 = vunpack.c.l.b16 %v520
        %v2763 = vunpack.c.h.b16 %v520
        %v2764 = vunpack.c.l.b16 %v521
        %v2765 = vunpack.c.h.b16 %v521
        %v2766 = vunpack.c.l.b16 %v522
        %v2767 = vunpack.c.l.b16 %v523
        %v2768 = vunpack.c.h.b16 %v523
        %v2769 = vunpack.c.l.b16 %v524
        %v2770 = vunpack.c.h.b16 %v524
        %v2771 = vunpack.c.l.b16 %v525
        %v2772 = vunpack.c.l.b16 %v526
        %v2773 = vunpack.c.h.b16 %v526
        %v2774 = vunpack.c.l.b16 %v527
        %v2775 = vunpack.c.h.b16 %v527
        %v2776 = vunpack.c.l.b16 %v528
        %v2777 = vunpack.c.l.b16 %v529
        %v2778 = vunpack.c.h.b16 %v529
        %v2779 = vunpack.c.l.b16 %v530
        %v2780 = vunpack.c.h.b16 %v530
        %v2781 = vunpack.c.l.b16 %v531
        %v2782 = vunpack.c.l.b16 %v532
        %v2783 = vunpack.c.h.b16 %v532
        %v2784 = vunpack.c.l.b16 %v533
        %v2785 = vunpack.c.h.b16 %v533
        %v2786 = vunpack.c.l.b16 %v534
        %v2787 = vunpack.c.l.b16 %v535
        %v2788 = vunpack.c.h.b16 %v535
        %v2789 = vunpack.c.l.b16 %v536
        %v2790 = vunpack.c.h.b16 %v536
        %v2791 = vunpack.c.l.b16 %v537
        %v2792 = vunpack.c.l.b16 %v538
        %v2793 = vunpack.c.h.b16 %v538
        %v2794 = vunpack.c.l.b16 %v539
        %v2795 = vunpack.c.h.b16 %v539
        %v2796 = vunpack.c.l.b16 %v540
        %v2797 = vunpack.c.l.b16 %v541
        %v2798 = vunpack.c.h.b16 %v541
        %v2799 = vunpack.c.l.b16 %v542
        %v2800 = vunpack.c.h.b16 %v542
        %v2801 = vunpack.c.l.b16 %v543
        %v2802 = vunpack.c.l.b16 %v544
        %v2803 = vunpack.c.h.b16 %v544
        %v2804 = vunpack.c.l.b16 %v545
        %v2805 = vunpack.c.h.b16 %v545
        %v2806 = vunpack.c.l.b16 %v546
        %v2807 = vunpack.c.l.b16 %v547
        %v2808 = vunpack.c.h.b16 %v547
        %v2809 = vunpack.c.l.b16 %v548
        %v2810 = vunpack.c.h.b16 %v548
        %v2811 = vunpack.c.l.b16 %v549
        %v2812 = vunpack.c.l.b16 %v550
        %v2813 = vunpack.c.h.b16 %v550
        %v2814 = vunpack.c.l.b16 %v551
        %v2815 = vunpack.c.h.b16 %v551
        %v2816 = vunpack.c.l.b16 %v552
        %v2817 = vunpack.c.l.b16 %v553
        %v2818 = vunpack.c.h.b16 %v553
        %v2819 = vunpack.c.l.b16 %v554
        %v2820 = vunpack.c.h.b16 %v554
        %v2821 = vunpack.c.l.b16 %v555
        %v2822 = vunpack.c.l.b16 %v556
        %v2823 = vunpack.c.h.b16 %v556
        %v2824 = vunpack.c.l.b16 %v557
        %v2825 = vunpack.c.h.b16 %v557
        %v2826 = vunpack.c.l.b16 %v558
        %v2827 = vunpack.c.l.b16 %v559
        %v2828 = vunpack.c.h.b16 %v559
        %v2829 = vunpack.c.l.b16 %v560
        %v2830 = vunpack.c.h.b16 %v560
        %v2831 = vunpack.c.l.b16 %v561
        %v2832 = vunpack.c.l.b16 %v562
        %v2833 = vunpack.c.h.b16 %v562
        %v2834 = vunpack.c.l.b16 %v563
        %v2835 = vunpack.c.h.b16 %v563
        %v2836 = vunpack.c.l.b16 %v564
        %v2837 = vunpack.c.l.b16 %v565
        %v2838 = vunpack.c.h.b16 %v565
        %v2839 = vunpack.c.l.b16 %v566
        %v2840 = vunpack.c.h.b16 %v566
        %v2841 = vunpack.c.l.b16 %v567
        %v2842 = vunpack.c.l.b16 %v568
        %v2843 = vunpack.c.h.b16 %v568
        %v2844 = vunpack.c.l.b16 %v569
        %v2845 = vunpack.c.h.b16 %v569
        %v2846 = vunpack.c.l.b16 %v570
        %v2847 = vunpack.c.l.b16 %v571
        %v2848 = vunpack.c.h.b16 %v571
        %v2849 = vunpack.c.l.b16 %v572
        %v2850 = vunpack.c.h.b16 %v572
        %v2851 = vunpack.c.l.b16 %v573
        %v2852 = vunpack.c.l.b16 %v574
        %v2853 = vunpack.c.h.b16 %v574
        %v2854 = vunpack.c.l.b16 %v575
        %v2855 = vunpack.c.h.b16 %v575
        %v2856 = vunpack.c.l.b16 %v576
        %v2857 = vunpack.c.l.b16 %v577
        %v2858 = vunpack.c.h.b16 %v577
        %v2859 = vunpack.c.l.b16 %v578
        %v2860 = vunpack.c.h.b16 %v578
        %v2861 = vunpack.c.l.b16 %v579
        %v2862 = vunpack.c.l.b16 %v580
        %v2863 = vunpack.c.h.b16 %v580
        %v2864 = vunpack.c.l.b16 %v581
        %v2865 = vunpack.c.h.b16 %v581
        %v2866 = vunpack.c.l.b16 %v582
        %v2867 = vunpack.c.l.b16 %v583
        %v2868 = vunpack.c.h.b16 %v583
        %v2869 = vunpack.c.l.b16 %v584
        %v2870 = vunpack.c.h.b16 %v584
        %v2871 = vunpack.c.l.b16 %v585
        %v2872 = vunpack.c.l.b16 %v586
        %v2873 = vunpack.c.h.b16 %v586
        %v2874 = vunpack.c.l.b16 %v587
        %v2875 = vunpack.c.h.b16 %v587
        %v2876 = vunpack.c.l.b16 %v588
        %v2877 = vunpack.c.l.b16 %v589
        %v2878 = vunpack.c.h.b16 %v589
        %v2879 = vunpack.c.l.b16 %v590
        %v2880 = vunpack.c.h.b16 %v590
        %v2881 = vunpack.c.l.b16 %v591
        %v2882 = vunpack.c.l.b16 %v592
        %v2883 = vunpack.c.h.b16 %v592
        %v2884 = vunpack.c.l.b16 %v593
        %v2885 = vunpack.c.h.b16 %v593
        %v2886 = vunpack.c.l.b16 %v594
        %v2887 = vunpack.c.l.b16 %v595
        %v2888 = vunpack.c.h.b16 %v595
        %v2889 = vunpack.c.l.b16 %v596
        %v2890 = vunpack.c.h.b16 %v596
        %v2891 = vunpack.c.l.b16 %v597
        %v2892 = vunpack.c.l.b16 %v598
        %v2893 = vunpack.c.h.b16 %v598
        %v2894 = vunpack.c.l.b16 %v599
        %v2895 = vunpack.c.h.b16 %v599
        %v2896 = vunpack.c.l.b16 %v600
        %v2897 = vunpack.c.l.b16 %v601
        %v2898 = vunpack.c.h.b16 %v601
        %v2899 = vunpack.c.l.b16 %v602
        %v2900 = vunpack.c.h.b16 %v602
        %v2901 = vunpack.c.l.b16 %v603
        %v2902 = vunpack.c.l.b16 %v604
        %v2903 = vunpack.c.h.b16 %v604
        %v2904 = vunpack.c.l.b16 %v605
        %v2905 = vunpack.c.h.b16 %v605
        %v2906 = vunpack.c.l.b16 %v606
        %v2907 = vunpack.c.l.b16 %v607
        %v2908 = vunpack.c.h.b16 %v607
        %v2909 = vunpack.c.l.b16 %v608
        %v2910 = vunpack.c.h.b16 %v608
        %v2911 = vunpack.c.l.b16 %v609
        %v2912 = vunpack.c.l.b16 %v610
        %v2913 = vunpack.c.h.b16 %v610
        %v2914 = vunpack.c.l.b16 %v611
        %v2915 = vunpack.c.h.b16 %v611
        %v2916 = vunpack.c.l.b16 %v612
        %v2917 = vunpack.c.l.b16 %v613
        %v2918 = vunpack.c.h.b16 %v613
        %v2919 = vunpack.c.l.b16 %v614
        %v2920 = vunpack.c.h.b16 %v614
        %v2921 = vunpack.c.l.b16 %v615
        %v2922 = vunpack.c.l.b16 %v616
        %v2923 = vunpack.c.h.b16 %v616
        %v2924 = vunpack.c.l.b16 %v617
        %v2925 = vunpack.c.h.b16 %v617
        %v2926 = vunpack.c.l.b16 %v618
        %v2927 = vunpack.c.l.b16 %v619
        %v2928 = vunpack.c.h.b16 %v619
        %v2929 = vunpack.c.l.b16 %v620
        %v2930 = vunpack.c.h.b16 %v620
        %v2931 = vunpack.c.l.b16 %v621
        %v2932 = vunpack.c.l.b16 %v622
        %v2933 = vunpack.c.h.b16 %v622
        %v2934 = vunpack.c.l.b16 %v623
        %v2935 = vunpack.c.h.b16 %v623
        %v2936 = vunpack.c.l.b16 %v624
        %v2937 = vunpack.c.l.b16 %v625
        %v2938 = vunpack.c.h.b16 %v625
        %v2939 = vunpack.c.l.b16 %v626
        %v2940 = vunpack.c.h.b16 %v626
        %v2941 = vunpack.c.l.b16 %v627
        %v2942 = vunpack.c.l.b16 %v628
        %v2943 = vunpack.c.h.b16 %v628
        %v2944 = vunpack.c.l.b16 %v629
        %v2945 = vunpack.c.h.b16 %v629
        %v2946 = vunpack.c.l.b16 %v630
        %v2947 = vunpack.c.l.b16 %v631
        %v2948 = vunpack.c.h.b16 %v631
        %v2949 = vunpack.c.l.b16 %v632
        %v2950 = vunpack.c.h.b16 %v632
        %v2951 = vunpack.c.l.b16 %v633
        %v2952 = vunpack.c.l.b16 %v634
        %v2953 = vunpack.c.h.b16 %v634
        %v2954 = vunpack.c.l.b16 %v635
        %v2955 = vunpack.c.h.b16 %v635
        %v2956 = vunpack.c.l.b16 %v636
        %v2957 = vunpack.c.l.b16 %v637
        %v2958 = vunpack.c.h.b16 %v637
        %v2959 = vunpack.c.l.b16 %v638
        %v2960 = vunpack.c.h.b16 %v638
        %v2961 = vunpack.c.l.b16 %v639
        %v2962 = vunpack.c.l.b16 %v640
        %v2963 = vunpack.c.h.b16 %v640
        %v2964 = vunpack.c.l.b16 %v641
        %v2965 = vunpack.c.h.b16 %v641
        %v2966 = vunpack.c.l.b16 %v642
        %v2967 = vunpack.c.l.b16 %v643
        %v2968 = vunpack.c.h.b16 %v643
        %v2969 = vunpack.c.l.b16 %v644
        %v2970 = vunpack.c.h.b16 %v644
        %v2971 = vunpack.c.l.b16 %v645
        %v2972 = vunpack.c.l.b16 %v646
        %v2973 = vunpack.c.h.b16 %v646
        %v2974 = vunpack.c.l.b16 %v647
        %v2975 = vunpack.c.h.b16 %v647
        %v2976 = vunpack.c.l.b16 %v648
        %v2977 = vunpack.c.l.b16 %v649
        %v2978 = vunpack.c.h.b16 %v649
        %v2979 = vunpack.c.l.b16 %v650
        %v2980 = vunpack.c.h.b16 %v650
        %v2981 = vunpack.c.l.b16 %v651
        %v2982 = vunpack.c.l.b16 %v652
        %v2983 = vunpack.c.h.b16 %v652
        %v2984 = vunpack.c.l.b16 %v653
        %v2985 = vunpack.c.h.b16 %v653
        %v2986 = vunpack.c.l.b16 %v654
        %v2987 = vunpack.c.l.b16 %v655
        %v2988 = vunpack.c.h.b16 %v655
        %v2989 = vunpack.c.l.b16 %v656
        %v2990 = vunpack.c.h.b16 %v656
        %v2991 = vunpack.c.l.b16 %v657
        %v2992 = vunpack.c.l.b16 %v658
        %v2993 = vunpack.c.h.b16 %v658
        %v2994 = vunpack.c.l.b16 %v659
        %v2995 = vunpack.c.h.b16 %v659
        %v2996 = vunpack.c.l.b16 %v660
        %v2997 = vunpack.c.l.b16 %v661
        %v2998 = vunpack.c.h.b16 %v661
        %v2999 = vunpack.c.l.b16 %v662
        %v3000 = vunpack.c.h.b16 %v662
        %v3001 = vunpack.c.l.b16 %v663
        %v3002 = vunpack.c.l.b16 %v664
        %v3003 = vunpack.c.h.b16 %v664
        %v3004 = vunpack.c.l.b16 %v665
        %v3005 = vunpack.c.h.b16 %v665
        %v3006 = vunpack.c.l.b16 %v666
        %v3007 = vunpack.c.l.b16 %v667
        %v3008 = vunpack.c.h.b16 %v667
        %v3009 = vunpack.c.l.b16 %v668
        %v3010 = vunpack.c.h.b16 %v668
        %v3011 = vunpack.c.l.b16 %v669
        %v3012 = vunpack.c.l.b16 %v670
        %v3013 = vunpack.c.h.b16 %v670
        %v3014 = vunpack.c.l.b16 %v671
        %v3015 = vunpack.c.h.b16 %v671
        %v3016 = vunpack.c.l.b16 %v672
        %v3017 = vunpack.c.l.b16 %v673
        %v3018 = vunpack.c.h.b16 %v673
        %v3019 = vunpack.c.l.b16 %v674
        %v3020 = vunpack.c.h.b16 %v674
        %v3021 = vunpack.c.l.b16 %v675
        %v3022 = vunpack.c.l.b16 %v676
        %v3023 = vunpack.c.h.b16 %v676
        %v3024 = vunpack.c.l.b16 %v677
        %v3025 = vunpack.c.h.b16 %v677
        %v3026 = vunpack.c.l.b16 %v678
        %v3027 = vunpack.c.l.b16 %v679
        %v3028 = vunpack.c.h.b16 %v679
        %v3029 = vunpack.c.l.b16 %v680
        %v3030 = vunpack.c.h.b16 %v680
        %v3031 = vunpack.c.l.b16 %v681
        %v3032 = vunpack.c.l.b16 %v682
        %v3033 = vunpack.c.h.b16 %v682
        %v3034 = vunpack.c.l.b16 %v683
        %v3035 = vunpack.c.h.b16 %v683
        %v3036 = vunpack.c.l.b16 %v684
        %v3037 = vunpack.c.l.b16 %v685
        %v3038 = vunpack.c.h.b16 %v685
        %v3039 = vunpack.c.l.b16 %v686
        %v3040 = vunpack.c.h.b16 %v686
        %v3041 = vunpack.c.l.b16 %v687
        %v3042 = vunpack.c.l.b16 %v688
        %v3043 = vunpack.c.h.b16 %v688
        %v3044 = vunpack.c.l.b16 %v689
        %v3045 = vunpack.c.h.b16 %v689
        %v3046 = vunpack.c.l.b16 %v690
        %v3047 = vunpack.c.l.b16 %v691
        %v3048 = vunpack.c.h.b16 %v691
        %v3049 = vunpack.c.l.b16 %v692
        %v3050 = vunpack.c.h.b16 %v692
        %v3051 = vunpack.c.l.b16 %v693
        %v3052 = vunpack.c.l.b16 %v694
        %v3053 = vunpack.c.h.b16 %v694
        %v3054 = vunpack.c.l.b16 %v695
        %v3055 = vunpack.c.h.b16 %v695
        %v3056 = vunpack.c.l.b16 %v696
        %v3057 = vunpack.c.l.b16 %v697
        %v3058 = vunpack.c.h.b16 %v697
        %v3059 = vunpack.c.l.b16 %v698
        %v3060 = vunpack.c.h.b16 %v698
        %v3061 = vunpack.c.l.b16 %v699
        %v3062 = vunpack.c.l.b16 %v700
        %v3063 = vunpack.c.h.b16 %v700
        %v3064 = vunpack.c.l.b16 %v701
        %v3065 = vunpack.c.h.b16 %v701
        %v3066 = vunpack.c.l.b16 %v702
        %v3067 = vunpack.c.l.b16 %v703
        %v3068 = vunpack.c.h.b16 %v703
        %v3069 = vunpack.c.l.b16 %v704
        %v3070 = vunpack.c.h.b16 %v704
        %v3071 = vunpack.c.l.b16 %v705
        %v3072 = vunpack.c.l.b16 %v706
        %v3073 = vunpack.c.h.b16 %v706
        %v3074 = vunpack.c.l.b16 %v707
        %v3075 = vunpack.c.h.b16 %v707
        %v3076 = vunpack.c.l.b16 %v708
        %v3077 = vunpack.c.l.b16 %v709
        %v3078 = vunpack.c.h.b16 %v709
        %v3079 = vunpack.c.l.b16 %v710
        %v3080 = vunpack.c.h.b16 %v710
        %v3081 = vunpack.c.l.b16 %v711
        %v3082 = vunpack.c.l.b16 %v712
        %v3083 = vunpack.c.h.b16 %v712
        %v3084 = vunpack.c.l.b16 %v713
        %v3085 = vunpack.c.h.b16 %v713
        %v3086 = vunpack.c.l.b16 %v714
        %v3087 = vunpack.c.l.b16 %v715
        %v3088 = vunpack.c.h.b16 %v715
        %v3089 = vunpack.c.l.b16 %v716
        %v3090 = vunpack.c.h.b16 %v716
        %v3091 = vunpack.c.l.b16 %v717
        %v3092 = vunpack.c.l.b16 %v718
        %v3093 = vunpack.c.h.b16 %v718
        %v3094 = vunpack.c.l.b16 %v719
        %v3095 = vunpack.c.h.b16 %v719
        %v3096 = vunpack.c.l.b16 %v720
        %v3097 = vunpack.c.l.b16 %v721
        %v3098 = vunpack.c.h.b16 %v721
        %v3099 = vunpack.c.l.b16 %v722
        %v3100 = vunpack.c.h.b16 %v722
        %v3101 = vunpack.c.l.b16 %v723
        %v3102 = vunpack.c.l.b16 %v724
        %v3103 = vunpack.c.h.b16 %v724
        %v3104 = vunpack.c.l.b16 %v725
        %v3105 = vunpack.c.h.b16 %v725
        %v3106 = vunpack.c.l.b16 %v726
        %v3107 = vunpack.c.l.b16 %v727
        %v3108 = vunpack.c.h.b16 %v727
        %v3109 = vunpack.c.l.b16 %v728
        %v3110 = vunpack.c.h.b16 %v728
        %v3111 = vunpack.c.l.b16 %v729
        %v3112 = vunpack.c.l.b16 %v730
        %v3113 = vunpack.c.h.b16 %v730
        %v3114 = vunpack.c.l.b16 %v731
        %v3115 = vunpack.c.h.b16 %v731
        %v3116 = vunpack.c.l.b16 %v732
        %v3117 = vunpack.c.l.b16 %v733
        %v3118 = vunpack.c.h.b16 %v733
        %v3119 = vunpack.c.l.b16 %v734
        %v3120 = vunpack.c.h.b16 %v734
        %v3121 = vunpack.c.l.b16 %v735
        %v3122 = vunpack.c.l.b16 %v736
        %v3123 = vunpack.c.h.b16 %v736
        %v3124 = vunpack.c.l.b16 %v737
        %v3125 = vunpack.c.h.b16 %v737
        %v3126 = vunpack.c.l.b16 %v738
        %v3127 = vunpack.c.l.b16 %v739
        %v3128 = vunpack.c.h.b16 %v739
        %v3129 = vunpack.c.l.b16 %v740
        %v3130 = vunpack.c.h.b16 %v740
        %v3131 = vunpack.c.l.b16 %v741
        %v3132 = vunpack.c.l.b16 %v742
        %v3133 = vunpack.c.h.b16 %v742
        %v3134 = vunpack.c.l.b16 %v743
        %v3135 = vunpack.c.h.b16 %v743
        %v3136 = vunpack.c.l.b16 %v744
        %v3137 = vunpack.c.l.b16 %v745
        %v3138 = vunpack.c.h.b16 %v745
        %v3139 = vunpack.c.l.b16 %v746
        %v3140 = vunpack.c.h.b16 %v746
        %v3141 = vunpack.c.l.b16 %v747
        %v3142 = vunpack.c.l.b16 %v748
        %v3143 = vunpack.c.h.b16 %v748
        %v3144 = vunpack.c.l.b16 %v749
        %v3145 = vunpack.c.h.b16 %v749
        %v3146 = vunpack.c.l.b16 %v750
        %v3147 = vunpack.c.l.b16 %v751
        %v3148 = vunpack.c.h.b16 %v751
        %v3149 = vunpack.c.l.b16 %v752
        %v3150 = vunpack.c.h.b16 %v752
        %v3151 = vunpack.c.l.b16 %v753
        %v3152 = vunpack.c.l.b16 %v754
        %v3153 = vunpack.c.h.b16 %v754
        %v3154 = vunpack.c.l.b16 %v755
        %v3155 = vunpack.c.h.b16 %v755
        %v3156 = vunpack.c.l.b16 %v756
        %v3157 = vunpack.c.l.b16 %v757
        %v3158 = vunpack.c.h.b16 %v757
        %v3159 = vunpack.c.l.b16 %v758
        %v3160 = vunpack.c.h.b16 %v758
        %v3161 = vunpack.c.l.b16 %v759
        %v3162 = vunpack.c.l.b16 %v760
        %v3163 = vunpack.c.h.b16 %v760
        %v3164 = vunpack.c.l.b16 %v761
        %v3165 = vunpack.c.h.b16 %v761
        %v3166 = vunpack.c.l.b16 %v762
        %v3167 = vunpack.c.l.b16 %v763
        %v3168 = vunpack.c.h.b16 %v763
        %v3169 = vunpack.c.l.b16 %v764
        %v3170 = vunpack.c.h.b16 %v764
        %v3171 = vunpack.c.l.b16 %v765
        %v3172 = vunpack.c.l.b16 %v766
        %v3173 = vunpack.c.h.b16 %v766
        %v3174 = vunpack.c.l.b16 %v767
        %v3175 = vunpack.c.h.b16 %v767
        %v3176 = vunpack.c.l.b16 %v768
        %v3177 = vunpack.c.l.b16 %v769
        %v3178 = vunpack.c.h.b16 %v769
        %v3179 = vunpack.c.l.b16 %v770
        %v3180 = vunpack.c.h.b16 %v770
        %v3181 = vunpack.c.l.b16 %v771
        %v3182 = vunpack.c.l.b16 %v772
        %v3183 = vunpack.c.h.b16 %v772
        %v3184 = vunpack.c.l.b16 %v773
        %v3185 = vunpack.c.h.b16 %v773
        %v3186 = vunpack.c.l.b16 %v774
        %v3187 = vunpack.c.l.b16 %v775
        %v3188 = vunpack.c.h.b16 %v775
        %v3189 = vunpack.c.l.b16 %v776
        %v3190 = vunpack.c.h.b16 %v776
        %v3191 = vunpack.c.l.b16 %v777
        %v3192 = vunpack.c.l.b16 %v778
        %v3193 = vunpack.c.h.b16 %v778
        %v3194 = vunpack.c.l.b16 %v779
        %v3195 = vunpack.c.h.b16 %v779
        %v3196 = vunpack.c.l.b16 %v780
        %v3197 = vunpack.c.l.b16 %v781
        %v3198 = vunpack.c.h.b16 %v781
        %v3199 = vunpack.c.l.b16 %v782
        %v3200 = vunpack.c.h.b16 %v782
        %v3201 = vunpack.c.l.b16 %v783
        %v3202 = vunpack.c.l.b16 %v784
        %v3203 = vunpack.c.h.b16 %v784
        %v3204 = vunpack.c.l.b16 %v785
        %v3205 = vunpack.c.h.b16 %v785
        %v3206 = vunpack.c.l.b16 %v786
        %v3207 = vunpack.c.l.b16 %v787
        %v3208 = vunpack.c.h.b16 %v787
        %v3209 = vunpack.c.l.b16 %v788
        %v3210 = vunpack.c.h.b16 %v788
        %v3211 = vunpack.c.l.b16 %v789
        %v3212 = vunpack.c.l.b16 %v790
        %v3213 = vunpack.c.h.b16 %v790
        %v3214 = vunpack.c.l.b16 %v791
        %v3215 = vunpack.c.h.b16 %v791
        %v3216 = vunpack.c.l.b16 %v792
        %v3217 = vunpack.c.l.b16 %v793
        %v3218 = vunpack.c.h.b16 %v793
        %v3219 = vunpack.c.l.b16 %v794
        %v3220 = vunpack.c.h.b16 %v794
        %v3221 = vunpack.c.l.b16 %v795
        %v3222 = vunpack.c.l.b16 %v796
        %v3223 = vunpack.c.h.b16 %v796
        %v3224 = vunpack.c.l.b16 %v797
        %v3225 = vunpack.c.h.b16 %v797
        %v3226 = vunpack.c.l.b16 %v798
        %v3227 = vunpack.c.l.b16 %v799
        %v3228 = vunpack.c.h.b16 %v799
        %v3229 = vunpack.c.l.b16 %v800
        %v3230 = vunpack.c.h.b16 %v800
        %v3231 = vunpack.c.l.b16 %v801
        %v3232 = vunpack.c.l.b16 %v802
        %v3233 = vunpack.c.h.b16 %v802
        %v3234 = vunpack.c.l.b16 %v803
        %v3235 = vunpack.c.h.b16 %v803
        %v3236 = vunpack.c.l.b16 %v804
        %v3237 = vunpack.c.l.b16 %v805
        %v3238 = vunpack.c.h.b16 %v805
        %v3239 = vunpack.c.l.b16 %v806
        %v3240 = vunpack.c.h.b16 %v806
        %v3241 = vunpack.c.l.b16 %v807
        %v3242 = vunpack.c.l.b16 %v808
        %v3243 = vunpack.c.h.b16 %v808
        %v3244 = vunpack.c.l.b16 %v809
        %v3245 = vunpack.c.h.b16 %v809
        %v3246 = vunpack.c.l.b16 %v810
        %v3247 = vunpack.c.l.b16 %v811
        %v3248 = vunpack.c.h.b16 %v811
        %v3249 = vunpack.c.l.b16 %v812
        %v3250 = vunpack.c.h.b16 %v812
        %v3251 = vunpack.c.l.b16 %v813
        %v3252 = vunpack.c.l.b16 %v814
        %v3253 = vunpack.c.h.b16 %v814
        %v3254 = vunpack.c.l.b16 %v815
        %v3255 = vunpack.c.h.b16 %v815
        %v3256 = vunpack.c.l.b16 %v816
        %v3257 = vunpack.c.l.b16 %v817
        %v3258 = vunpack.c.h.b16 %v817
        %v3259 = vunpack.c.l.b16 %v818
        %v3260 = vunpack.c.h.b16 %v818
        %v3261 = vunpack.c.l.b16 %v819
        %v3262 = vunpack.c.l.b16 %v820
        %v3263 = vunpack.c.h.b16 %v820
        %v3264 = vunpack.c.l.b16 %v821
        %v3265 = vunpack.c.h.b16 %v821
        %v3266 = vunpack.c.l.b16 %v822
        %v3267 = vunpack.c.l.b16 %v823
        %v3268 = vunpack.c.h.b16 %v823
        %v3269 = vunpack.c.l.b16 %v824
        %v3270 = vunpack.c.h.b16 %v824
        %v3271 = vunpack.c.l.b16 %v825
        %v3272 = vunpack.c.l.b16 %v826
        %v3273 = vunpack.c.h.b16 %v826
        %v3274 = vunpack.c.l.b16 %v827
        %v3275 = vunpack.c.h.b16 %v827
        %v3276 = vunpack.c.l.b16 %v828
        %v3277 = vunpack.c.l.b16 %v829
        %v3278 = vunpack.c.h.b16 %v829
        %v3279 = vunpack.c.l.b16 %v830
        %v3280 = vunpack.c.h.b16 %v830
        %v3281 = vunpack.c.l.b16 %v831
        %v3282 = vunpack.c.l.b16 %v832
        %v3283 = vunpack.c.h.b16 %v832
        %v3284 = vunpack.c.l.b16 %v833
        %v3285 = vunpack.c.h.b16 %v833
        %v3286 = vunpack.c.l.b16 %v834
        %v3287 = vunpack.c.l.b16 %v835
        %v3288 = vunpack.c.h.b16 %v835
        %v3289 = vunpack.c.l.b16 %v836
        %v3290 = vunpack.c.h.b16 %v836
        %v3291 = vunpack.c.l.b16 %v837
        %v3292 = vunpack.c.l.b16 %v838
        %v3293 = vunpack.c.h.b16 %v838
        %v3294 = vunpack.c.l.b16 %v839
        %v3295 = vunpack.c.h.b16 %v839
        %v3296 = vunpack.c.l.b16 %v840
        %v3297 = vunpack.c.l.b16 %v841
        %v3298 = vunpack.c.h.b16 %v841
        %v3299 = vunpack.c.l.b16 %v842
        %v3300 = vunpack.c.h.b16 %v842
        %v3301 = vunpack.c.l.b16 %v843
        %v3302 = vunpack.c.l.b16 %v844
        %v3303 = vunpack.c.h.b16 %v844
        %v3304 = vunpack.c.l.b16 %v845
        %v3305 = vunpack.c.h.b16 %v845
        %v3306 = vunpack.c.l.b16 %v846
        %v3307 = vunpack.c.l.b16 %v847
        %v3308 = vunpack.c.h.b16 %v847
        %v3309 = vunpack.c.l.b16 %v848
        %v3310 = vunpack.c.h.b16 %v848
        %v3311 = vunpack.c.l.b16 %v849
        %v3312 = vunpack.c.l.b16 %v850
        %v3313 = vunpack.c.h.b16 %v850
        %v3314 = vunpack.c.l.b16 %v851
        %v3315 = vunpack.c.h.b16 %v851
        %v3316 = vunpack.c.l.b16 %v852
        %v3317 = vunpack.c.l.b16 %v853
        %v3318 = vunpack.c.h.b16 %v853
        %v3319 = vunpack.c.l.b16 %v854
        %v3320 = vunpack.c.h.b16 %v854
        %v3321 = vunpack.c.l.b16 %v855
        %v3322 = vunpack.c.l.b16 %v856
        %v3323 = vunpack.c.h.b16 %v856
        %v3324 = vunpack.c.l.b16 %v857
        %v3325 = vunpack.c.h.b16 %v857
        %v3326 = vunpack.c.l.b16 %v858
        %v3327 = vunpack.c.l.b16 %v859
        %v3328 = vunpack.c.h.b16 %v859
        %v3329 = vunpack.c.l.b16 %v860
        %v3330 = vunpack.c.h.b16 %v860
        %v3331 = vunpack.c.l.b16 %v861
        %v3332 = vunpack.c.l.b16 %v862
        %v3333 = vunpack.c.h.b16 %v862
        %v3334 = vunpack.c.l.b16 %v863
        %v3335 = vunpack.c.h.b16 %v863
        %v3336 = vunpack.c.l.b16 %v864
        %v3337 = vunpack.c.l.b16 %v865
        %v3338 = vunpack.c.h.b16 %v865
        %v3339 = vunpack.c.l.b16 %v866
        %v3340 = vunpack.c.h.b16 %v866
        %v3341 = vunpack.c.l.b16 %v867
        %v3342 = vunpack.c.l.b16 %v868
        %v3343 = vunpack.c.h.b16 %v868
        %v3344 = vunpack.c.l.b16 %v869
        %v3345 = vunpack.c.h.b16 %v869
        %v3346 = vunpack.c.l.b16 %v870
        %v3347 = vunpack.c.l.b16 %v871
        %v3348 = vunpack.c.h.b16 %v871
        %v3349 = vunpack.c.l.b16 %v872
        %v3350 = vunpack.c.h.b16 %v872
        %v3351 = vunpack.c.l.b16 %v873
        %v3352 = vunpack.c.l.b16 %v874
        %v3353 = vunpack.c.h.b16 %v874
        %v3354 = vunpack.c.l.b16 %v875
        %v3355 = vunpack.c.h.b16 %v875
        %v3356 = vunpack.c.l.b16 %v876
        %v3357 = vunpack.c.l.b16 %v877
        %v3358 = vunpack.c.h.b16 %v877
        %v3359 = vunpack.c.l.b16 %v878
        %v3360 = vunpack.c.h.b16 %v878
        %v3361 = vunpack.c.l.b16 %v879
        %v3362 = vunpack.c.l.b16 %v880
        %v3363 = vunpack.c.h.b16 %v880
        %v3364 = vunpack.c.l.b16 %v881
        %v3365 = vunpack.c.h.b16 %v881
        %v3366 = vunpack.c.l.b16 %v882
        %v3367 = vunpack.c.l.b16 %v883
        %v3368 = vunpack.c.h.b16 %v883
        %v3369 = vunpack.c.l.b16 %v884
        %v3370 = vunpack.c.h.b16 %v884
        %v3371 = vunpack.c.l.b16 %v885
        %v3372 = vunpack.c.l.b16 %v886
        %v3373 = vunpack.c.h.b16 %v886
        %v3374 = vunpack.c.l.b16 %v887
        %v3375 = vunpack.c.h.b16 %v887
        %v3376 = vunpack.c.l.b16 %v888
        %v3377 = vunpack.c.l.b16 %v889
        %v3378 = vunpack.c.h.b16 %v889
        %v3379 = vunpack.c.l.b16 %v890
        %v3380 = vunpack.c.h.b16 %v890
        %v3381 = vunpack.c.l.b16 %v891
        %v3382 = vunpack.c.l.b16 %v892
        %v3383 = vunpack.c.h.b16 %v892
        %v3384 = vunpack.c.l.b16 %v893
        %v3385 = vunpack.c.h.b16 %v893
        %v3386 = vunpack.c.l.b16 %v894
        %v3387 = vunpack.c.l.b16 %v895
        %v3388 = vunpack.c.h.b16 %v895
        %v3389 = vunpack.c.l.b16 %v896
        %v3390 = vunpack.c.h.b16 %v896
        %v3391 = vunpack.c.l.b16 %v897
        %v3392 = vunpack.c.l.b16 %v898
        %v3393 = vunpack.c.h.b16 %v898
        %v3394 = vunpack.c.l.b16 %v899
        %v3395 = vunpack.c.h.b16 %v899
        %v3396 = vunpack.c.l.b16 %v900
        %v3397 = vunpack.c.l.b16 %v901
        %v3398 = vunpack.c.h.b16 %v901
        %v3399 = vunpack.c.l.b16 %v902
        %v3400 = vunpack.c.h.b16 %v902
        %v3401 = vunpack.c.l.b16 %v903
        %v3402 = vunpack.c.l.b16 %v904
        %v3403 = vunpack.c.h.b16 %v904
        %v3404 = vunpack.c.l.b16 %v905
        %v3405 = vunpack.c.h.b16 %v905
        %v3406 = vunpack.c.l.b16 %v906
        %v3407 = vunpack.c.l.b16 %v907
        %v3408 = vunpack.c.h.b16 %v907
        %v3409 = vunpack.c.l.b16 %v908
        %v3410 = vunpack.c.h.b16 %v908
        %v3411 = vunpack.c.l.b16 %v909
        %v3412 = vunpack.c.l.b16 %v910
        %v3413 = vunpack.c.h.b16 %v910
        %v3414 = vunpack.c.l.b16 %v911
        %v3415 = vunpack.c.h.b16 %v911
        %v3416 = vunpack.c.l.b16 %v912
        %v3417 = vunpack.c.l.b16 %v913
        %v3418 = vunpack.c.h.b16 %v913
        %v3419 = vunpack.c.l.b16 %v914
        %v3420 = vunpack.c.h.b16 %v914
        %v3421 = vunpack.c.l.b16 %v915
        %v3422 = vunpack.c.l.b16 %v916
        %v3423 = vunpack.c.h.b16 %v916
        %v3424 = vunpack.c.l.b16 %v917
        %v3425 = vunpack.c.h.b16 %v917
        %v3426 = vunpack.c.l.b16 %v918
        %v3427 = vunpack.c.l.b16 %v919
        %v3428 = vunpack.c.h.b16 %v919
        %v3429 = vunpack.c.l.b16 %v920
        %v3430 = vunpack.c.h.b16 %v920
        %v3431 = vunpack.c.l.b16 %v921
        %v3432 = vunpack.c.l.b16 %v922
        %v3433 = vunpack.c.h.b16 %v922
        %v3434 = vunpack.c.l.b16 %v923
        %v3435 = vunpack.c.h.b16 %v923
        %v3436 = vunpack.c.l.b16 %v924
        %v3437 = vunpack.c.l.b16 %v925
        %v3438 = vunpack.c.h.b16 %v925
        %v3439 = vunpack.c.l.b16 %v926
        %v3440 = vunpack.c.h.b16 %v926
        %v3441 = vunpack.c.l.b16 %v927
        %v3442 = vunpack.c.l.b16 %v928
        %v3443 = vunpack.c.h.b16 %v928
        %v3444 = vunpack.c.l.b16 %v929
        %v3445 = vunpack.c.h.b16 %v929
        %v3446 = vunpack.c.l.b16 %v930
        %v3447 = vunpack.c.l.b16 %v931
        %v3448 = vunpack.c.h.b16 %v931
        %v3449 = vunpack.c.l.b16 %v932
        %v3450 = vunpack.c.h.b16 %v932
        %v3451 = vunpack.c.l.b16 %v933
        %v3452 = vunpack.c.l.b16 %v934
        %v3453 = vunpack.c.h.b16 %v934
        %v3454 = vunpack.c.l.b16 %v935
        %v3455 = vunpack.c.h.b16 %v935
        %v3456 = vunpack.c.l.b16 %v936
        %v3457 = vunpack.c.l.b16 %v937
        %v3458 = vunpack.c.h.b16 %v937
        %v3459 = vunpack.c.l.b16 %v938
        %v3460 = vunpack.c.h.b16 %v938
        %v3461 = vunpack.c.l.b16 %v939
        %v3462 = vunpack.c.l.b16 %v940
        %v3463 = vunpack.c.h.b16 %v940
        %v3464 = vunpack.c.l.b16 %v941
        %v3465 = vunpack.c.h.b16 %v941
        %v3466 = vunpack.c.l.b16 %v942
        %v3467 = vunpack.c.l.b16 %v943
        %v3468 = vunpack.c.h.b16 %v943
        %v3469 = vunpack.c.l.b16 %v944
        %v3470 = vunpack.c.h.b16 %v944
        %v3471 = vunpack.c.l.b16 %v945
        %v3472 = vunpack.c.l.b16 %v946
        %v3473 = vunpack.c.h.b16 %v946
        %v3474 = vunpack.c.l.b16 %v947
        %v3475 = vunpack.c.h.b16 %v947
        %v3476 = vunpack.c.l.b16 %v948
        %v3477 = vunpack.c.l.b16 %v949
        %v3478 = vunpack.c.h.b16 %v949
        %v3479 = vunpack.c.l.b16 %v950
        %v3480 = vunpack.c.h.b16 %v950
        %v3481 = vunpack.c.l.b16 %v951
        %v3482 = vunpack.c.l.b16 %v952
        %v3483 = vunpack.c.h.b16 %v952
        %v3484 = vunpack.c.l.b16 %v953
        %v3485 = vunpack.c.h.b16 %v953
        %v3486 = vunpack.c.l.b16 %v954
        %v3487 = vunpack.c.l.b16 %v955
        %v3488 = vunpack.c.h.b16 %v955
        %v3489 = vunpack.c.l.b16 %v956
        %v3490 = vunpack.c.h.b16 %v956
        %v3491 = vunpack.c.l.b16 %v957
        %v3492 = vunpack.c.l.b16 %v958
        %v3493 = vunpack.c.h.b16 %v958
        %v3494 = vunpack.c.l.b16 %v959
        %v3495 = vunpack.c.h.b16 %v959
        %v3496 = vunpack.c.l.b16 %v960
        %v3497 = vunpack.c.l.b16 %v961
        %v3498 = vunpack.c.h.b16 %v961
        %v3499 = vunpack.c.l.b16 %v962
        %v3500 = vunpack.c.h.b16 %v962
        %v3501 = vunpack.c.l.b16 %v963
        %v3502 = vunpack.c.l.b16 %v964
        %v3503 = vunpack.c.h.b16 %v964
        %v3504 = vunpack.c.l.b16 %v965
        %v3505 = vunpack.c.h.b16 %v965
        %v3506 = vunpack.c.l.b16 %v966
        %v3507 = vunpack.c.l.b16 %v967
        %v3508 = vunpack.c.h.b16 %v967
        %v3509 = vunpack.c.l.b16 %v968
        %v3510 = vunpack.c.h.b16 %v968
        %v3511 = vunpack.c.l.b16 %v969
        %v3512 = vunpack.c.l.b16 %v970
        %v3513 = vunpack.c.h.b16 %v970
        %v3514 = vunpack.c.l.b16 %v971
        %v3515 = vunpack.c.h.b16 %v971
        %v3516 = vunpack.c.l.b16 %v972
        %v3517 = vunpack.c.l.b16 %v973
        %v3518 = vunpack.c.h.b16 %v973
        %v3519 = vunpack.c.l.b16 %v974
        %v3520 = vunpack.c.h.b16 %v974
        %v3521 = vunpack.c.l.b16 %v975
        %v3522 = vunpack.c.l.b16 %v976
        %v3523 = vunpack.c.h.b16 %v976
        %v3524 = vunpack.c.l.b16 %v977
        %v3525 = vunpack.c.h.b16 %v977
        %v3526 = vunpack.c.l.b16 %v978
        %v3527 = vunpack.c.l.b16 %v979
        %v3528 = vunpack.c.h.b16 %v979
        %v3529 = vunpack.c.l.b16 %v980
        %v3530 = vunpack.c.h.b16 %v980
        %v3531 = vunpack.c.l.b16 %v981
        %v3532 = vunpack.c.l.b16 %v982
        %v3533 = vunpack.c.h.b16 %v982
        %v3534 = vunpack.c.l.b16 %v983
        %v3535 = vunpack.c.h.b16 %v983
        %v3536 = vunpack.c.l.b16 %v984
        %v3537 = vunpack.c.l.b16 %v985
        %v3538 = vunpack.c.h.b16 %v985
        %v3539 = vunpack.c.l.b16 %v986
        %v3540 = vunpack.c.h.b16 %v986
        %v3541 = vunpack.c.l.b16 %v987
        %v3542 = vunpack.c.l.b16 %v988
        %v3543 = vunpack.c.h.b16 %v988
        %v3544 = vunpack.c.l.b16 %v989
        %v3545 = vunpack.c.h.b16 %v989
        %v3546 = vunpack.c.l.b16 %v990
        %v3547 = vunpack.c.l.b16 %v991
        %v3548 = vunpack.c.h.b16 %v991
        %v3549 = vunpack.c.l.b16 %v992
        %v3550 = vunpack.c.h.b16 %v992
        %v3551 = vunpack.c.l.b16 %v993
        %v3552 = vunpack.c.l.b16 %v994
        %v3553 = vunpack.c.h.b16 %v994
        %v3554 = vunpack.c.l.b16 %v995
        %v3555 = vunpack.c.h.b16 %v995
        %v3556 = vunpack.c.l.b16 %v996
        %v3557 = vunpack.c.l.b16 %v997
        %v3558 = vunpack.c.h.b16 %v997
        %v3559 = vunpack.c.l.b16 %v998
        %v3560 = vunpack.c.h.b16 %v998
        %v3561 = vunpack.c.l.b16 %v999
        %v3562 = vunpack.c.l.b16 %v1000
        %v3563 = vunpack.c.h.b16 %v1000
        %v3564 = vunpack.c.l.b16 %v1001
        %v3565 = vunpack.c.h.b16 %v1001
        %v3566 = vunpack.c.l.b16 %v1002
        %v3567 = vunpack.c.l.b16 %v1003
        %v3568 = vunpack.c.h.b16 %v1003
        %v3569 = vunpack.c.l.b16 %v1004
        %v3570 = vunpack.c.h.b16 %v1004
        %v3571 = vunpack.c.l.b16 %v1005
        %v3572 = vunpack.c.l.b16 %v1006
        %v3573 = vunpack.c.h.b16 %v1006
        %v3574 = vunpack.c.l.b16 %v1007
        %v3575 = vunpack.c.h.b16 %v1007
        %v3576 = vunpack.c.l.b16 %v1008
        %v3577 = vunpack.c.l.b16 %v1009
        %v3578 = vunpack.c.h.b16 %v1009
        %v3579 = vunpack.c.l.b16 %v1010
        %v3580 = vunpack.c.h.b16 %v1010
        %v3581 = vunpack.c.l.b16 %v1011
        %v3582 = vunpack.c.l.b16 %v1012
        %v3583 = vunpack.c.h.b16 %v1012
        %v3584 = vunpack.c.l.b16 %v1013
        %v3585 = vunpack.c.h.b16 %v1013
        %v3586 = vunpack.c.l.b16 %v1014
        %v3587 = vunpack.c.l.b16 %v1015
        %v3588 = vunpack.c.h.b16 %v1015
        %v3589 = vunpack.c.l.b16 %v1016
        %v3590 = vunpack.c.h.b16 %v1016
        %v3591 = vunpack.c.l.b16 %v1017
        %v3592 = vunpack.c.l.b16 %v1018
        %v3593 = vunpack.c.h.b16 %v1018
        %v3594 = vunpack.c.l.b16 %v1019
        %v3595 = vunpack.c.h.b16 %v1019
        %v3596 = vunpack.c.l.b16 %v1020
        %v3597 = vunpack.c.l.b16 %v1021
        %v3598 = vunpack.c.h.b16 %v1021
        %v3599 = vunpack.c.l.b16 %v1022
        %v3600 = vunpack.c.h.b16 %v1022
        %v3601 = vunpack.c.l.b16 %v1023
        %v3602 = vunpack.c.l.b16 %v1024
        %v3603 = vunpack.c.h.b16 %v1024
        %v3604 = vunpack.c.l.b16 %v1025
        %v3605 = vunpack.c.h.b16 %v1025
        %v3606 = vunpack.c.l.b16 %v1026
        %v3607 = vunpack.c.l.b16 %v1027
        %v3608 = vunpack.c.h.b16 %v1027
        %v3609 = vunpack.c.l.b16 %v1028
        %v3610 = vunpack.c.h.b16 %v1028
        %v3611 = vunpack.c.l.b16 %v1029
        %v3612 = vunpack.c.l.b16 %v1030
        %v3613 = vunpack.c.h.b16 %v1030
        %v3614 = vunpack.c.l.b16 %v1031
        %v3615 = vunpack.c.h.b16 %v1031
        %v3616 = vunpack.c.l.b16 %v1032
        %v3617 = vunpack.c.l.b16 %v1033
        %v3618 = vunpack.c.h.b16 %v1033
        %v3619 = vunpack.c.l.b16 %v1034
        %v3620 = vunpack.c.h.b16 %v1034
        %v3621 = vunpack.c.l.b16 %v1035
        %v3622 = vunpack.c.l.b16 %v1036
        %v3623 = vunpack.c.h.b16 %v1036
        %v3624 = vunpack.c.l.b16 %v1037
        %v3625 = vunpack.c.h.b16 %v1037
        %v3626 = vunpack.c.l.b16 %v1038
        %v3627 = vunpack.c.l.b16 %v1039
        %v3628 = vunpack.c.h.b16 %v1039
        %v3629 = vunpack.c.l.b16 %v1040
        %v3630 = vunpack.c.h.b16 %v1040
        %v3631 = vunpack.c.l.b16 %v1041
        %v3632 = vunpack.c.l.b16 %v1042
        %v3633 = vunpack.c.h.b16 %v1042
        %v3634 = vunpack.c.l.b16 %v1043
        %v3635 = vunpack.c.h.b16 %v1043
        %v3636 = vunpack.c.l.b16 %v1044
        %v3637 = vunpack.c.l.b16 %v1045
        %v3638 = vunpack.c.h.b16 %v1045
        %v3639 = vunpack.c.l.b16 %v1046
        %v3640 = vunpack.c.h.b16 %v1046
        %v3641 = vunpack.c.l.b16 %v1047
        %v3642 = vunpack.c.l.b16 %v1048
        %v3643 = vunpack.c.h.b16 %v1048
        %v3644 = vunpack.c.l.b16 %v1049
        %v3645 = vunpack.c.h.b16 %v1049
        %v3646 = vunpack.c.l.b16 %v1050
        %v3647 = vunpack.c.l.b16 %v1051
        %v3648 = vunpack.c.h.b16 %v1051
        %v3649 = vunpack.c.l.b16 %v1052
        %v3650 = vunpack.c.h.b16 %v1052
        %v3651 = vunpack.c.l.b16 %v1053
        %v3652 = vunpack.c.l.b16 %v1054
        %v3653 = vunpack.c.h.b16 %v1054
        %v3654 = vunpack.c.l.b16 %v1055
        %v3655 = vunpack.c.h.b16 %v1055
        %v3656 = vunpack.c.l.b16 %v1056
        %v3657 = vunpack.c.l.b16 %v1057
        %v3658 = vunpack.c.h.b16 %v1057
        %v3659 = vunpack.c.l.b16 %v1058
        %v3660 = vunpack.c.h.b16 %v1058
        %v3661 = vunpack.c.l.b16 %v1059
        %v3662 = vunpack.c.l.b16 %v1060
        %v3663 = vunpack.c.h.b16 %v1060
        %v3664 = vunpack.c.l.b16 %v1061
        %v3665 = vunpack.c.h.b16 %v1061
        %v3666 = vunpack.c.l.b16 %v1062
        %v3667 = vunpack.c.l.b16 %v1063
        %v3668 = vunpack.c.h.b16 %v1063
        %v3669 = vunpack.c.l.b16 %v1064
        %v3670 = vunpack.c.h.b16 %v1064
        %v3671 = vunpack.c.l.b16 %v1065
        %v3672 = vunpack.c.l.b16 %v1066
        %v3673 = vunpack.c.h.b16 %v1066
        %v3674 = vunpack.c.l.b16 %v1067
        %v3675 = vunpack.c.h.b16 %v1067
        %v3676 = vunpack.c.l.b16 %v1068
        %v3677 = vunpack.c.l.b16 %v1069
        %v3678 = vunpack.c.h.b16 %v1069
        %v3679 = vunpack.c.l.b16 %v1070
        %v3680 = vunpack.c.h.b16 %v1070
        %v3681 = vunpack.c.l.b16 %v1071
        %v3682 = vunpack.c.l.b16 %v1072
        %v3683 = vunpack.c.h.b16 %v1072
        %v3684 = vunpack.c.l.b16 %v1073
        %v3685 = vunpack.c.h.b16 %v1073
        %v3686 = vunpack.c.l.b16 %v1074
        %v3687 = vunpack.c.l.b16 %v1075
        %v3688 = vunpack.c.h.b16 %v1075
        %v3689 = vunpack.c.l.b16 %v1076
        %v3690 = vunpack.c.h.b16 %v1076
        %v3691 = vunpack.c.l.b16 %v1077
        %v3692 = vunpack.c.l.b16 %v1078
        %v3693 = vunpack.c.h.b16 %v1078
        %v3694 = vunpack.c.l.b16 %v1079
        %v3695 = vunpack.c.h.b16 %v1079
        %v3696 = vunpack.c.l.b16 %v1080
        %v3697 = vunpack.c.l.b16 %v1081
        %v3698 = vunpack.c.h.b16 %v1081
        %v3699 = vunpack.c.l.b16 %v1082
        %v3700 = vunpack.c.h.b16 %v1082
        %v3701 = vunpack.c.l.b16 %v1083
        %v3702 = vunpack.c.l.b16 %v1084
        %v3703 = vunpack.c.h.b16 %v1084
        %v3704 = vunpack.c.l.b16 %v1085
        %v3705 = vunpack.c.h.b16 %v1085
        %v3706 = vunpack.c.l.b16 %v1086
        %v3707 = vunpack.c.l.b16 %v1087
        %v3708 = vunpack.c.h.b16 %v1087
        %v3709 = vunpack.c.l.b16 %v1088
        %v3710 = vunpack.c.h.b16 %v1088
        %v3711 = vunpack.c.l.b16 %v1089
        %v3712 = vunpack.c.l.b16 %v1090
        %v3713 = vunpack.c.h.b16 %v1090
        %v3714 = vunpack.c.l.b16 %v1091
        %v3715 = vunpack.c.h.b16 %v1091
        %v3716 = vunpack.c.l.b16 %v1092
        %v3717 = vunpack.c.l.b16 %v1093
        %v3718 = vunpack.c.h.b16 %v1093
        %v3719 = vunpack.c.l.b16 %v1094
        %v3720 = vunpack.c.h.b16 %v1094
        %v3721 = vunpack.c.l.b16 %v1095
        %v3722 = vunpack.c.l.b16 %v1096
        %v3723 = vunpack.c.h.b16 %v1096
        %v3724 = vunpack.c.l.b16 %v1097
        %v3725 = vunpack.c.h.b16 %v1097
        %v3726 = vunpack.c.l.b16 %v1098
        %v3727 = vunpack.c.l.b16 %v1099
        %v3728 = vunpack.c.h.b16 %v1099
        %v3729 = vunpack.c.l.b16 %v1100
        %v3730 = vunpack.c.h.b16 %v1100
        %v3731 = vunpack.c.l.b16 %v1101
        %v3732 = vunpack.c.l.b16 %v1102
        %v3733 = vunpack.c.h.b16 %v1102
        %v3734 = vunpack.c.l.b16 %v1103
        %v3735 = vunpack.c.h.b16 %v1103
        %v3736 = vunpack.c.l.b16 %v1104
        %v3737 = vunpack.c.l.b16 %v1105
        %v3738 = vunpack.c.h.b16 %v1105
        %v3739 = vunpack.c.l.b16 %v1106
        %v3740 = vunpack.c.h.b16 %v1106
        %v3741 = vunpack.c.l.b16 %v1107
        %v3742 = vunpack.c.l.b16 %v1108
        %v3743 = vunpack.c.h.b16 %v1108
        %v3744 = vunpack.c.l.b16 %v1109
        %v3745 = vunpack.c.h.b16 %v1109
        %v3746 = vunpack.c.l.b16 %v1110
        %v3747 = vunpack.c.l.b16 %v1111
        %v3748 = vunpack.c.h.b16 %v1111
        %v3749 = vunpack.c.l.b16 %v1112
        %v3750 = vunpack.c.h.b16 %v1112
        %v3751 = vunpack.c.l.b16 %v1113
        %v3752 = vunpack.c.l.b16 %v1114
        %v3753 = vunpack.c.h.b16 %v1114
        %v3754 = vunpack.c.l.b16 %v1115
        %v3755 = vunpack.c.h.b16 %v1115
        %v3756 = vunpack.c.l.b16 %v1116
        %v3757 = vunpack.c.l.b16 %v1117
        %v3758 = vunpack.c.h.b16 %v1117
        %v3759 = vunpack.c.l.b16 %v1118
        %v3760 = vunpack.c.h.b16 %v1118
        %v3761 = vunpack.c.l.b16 %v1119
        %v3762 = vunpack.c.l.b16 %v1120
        %v3763 = vunpack.c.h.b16 %v1120
        %v3764 = vunpack.c.l.b16 %v1121
        %v3765 = vunpack.c.h.b16 %v1121
        %v3766 = vunpack.c.l.b16 %v1122
        %v3767 = vunpack.c.l.b16 %v1123
        %v3768 = vunpack.c.h.b16 %v1123
        %v3769 = vunpack.c.l.b16 %v1124
        %v3770 = vunpack.c.h.b16 %v1124
        %v3771 = vunpack.c.l.b16 %v1125
        %v3772 = vunpack.c.l.b16 %v1126
        %v3773 = vunpack.c.h.b16 %v1126
        %v3774 = vunpack.c.l.b16 %v1127
        %v3775 = vunpack.c.h.b16 %v1127
        %v3776 = vunpack.c.l.b16 %v1128
        %v3777 = vunpack.c.l.b16 %v1129
        %v3778 = vunpack.c.h.b16 %v1129
        %v3779 = vunpack.c.l.b16 %v1130
        %v3780 = vunpack.c.h.b16 %v1130
        %v3781 = vunpack.c.l.b16 %v1131
        %v3782 = vunpack.c.l.b16 %v1132
        %v3783 = vunpack.c.h.b16 %v1132
        %v3784 = vunpack.c.l.b16 %v1133
        %v3785 = vunpack.c.h.b16 %v1133
        %v3786 = vunpack.c.l.b16 %v1134
        %v3787 = vunpack.c.l.b16 %v1135
        %v3788 = vunpack.c.h.b16 %v1135
        %v3789 = vunpack.c.l.b16 %v1136
        %v3790 = vunpack.c.h.b16 %v1136
        %v3791 = vunpack.c.l.b16 %v1137
        %v3792 = vunpack.c.l.b16 %v1138
        %v3793 = vunpack.c.h.b16 %v1138
        %v3794 = vunpack.c.l.b16 %v1139
        %v3795 = vunpack.c.h.b16 %v1139
        %v3796 = vunpack.c.l.b16 %v1140
        %v3797 = vunpack.c.l.b16 %v1141
        %v3798 = vunpack.c.h.b16 %v1141
        %v3799 = vunpack.c.l.b16 %v1142
        %v3800 = vunpack.c.h.b16 %v1142
        %v3801 = vunpack.c.l.b16 %v1143
        %v3802 = vunpack.c.l.b16 %v1144
        %v3803 = vunpack.c.h.b16 %v1144
        %v3804 = vunpack.c.l.b16 %v1145
        %v3805 = vunpack.c.h.b16 %v1145
        %v3806 = vunpack.c.l.b16 %v1146
        %v3807 = vunpack.c.l.b16 %v1147
        %v3808 = vunpack.c.h.b16 %v1147
        %v3809 = vunpack.c.l.b16 %v1148
        %v3810 = vunpack.c.h.b16 %v1148
        %v3811 = vunpack.c.l.b16 %v1149
        %v3812 = vunpack.c.l.b16 %v1150
        %v3813 = vunpack.c.h.b16 %v1150
        %v3814 = vunpack.c.l.b16 %v1151
        %v3815 = vunpack.c.h.b16 %v1151
        %v3816 = vunpack.c.l.b16 %v1152
        %v3817 = vunpack.c.l.b16 %v1153
        %v3818 = vunpack.c.h.b16 %v1153
        %v3819 = vunpack.c.l.b16 %v1154
        %v3820 = vunpack.c.h.b16 %v1154
        %v3821 = vunpack.c.l.b16 %v1155
        %v3822 = vunpack.c.l.b16 %v1156
        %v3823 = vunpack.c.h.b16 %v1156
        %v3824 = vunpack.c.l.b16 %v1157
        %v3825 = vunpack.c.h.b16 %v1157
        %v3826 = vunpack.c.l.b16 %v1158
        %v3827 = vunpack.c.l.b16 %v1159
        %v3828 = vunpack.c.h.b16 %v1159
        %v3829 = vunpack.c.l.b16 %v1160
        %v3830 = vunpack.c.h.b16 %v1160
        %v3831 = vunpack.c.l.b16 %v1161
        %v3832 = vunpack.c.l.b16 %v1162
        %v3833 = vunpack.c.h.b16 %v1162
        %v3834 = vunpack.c.l.b16 %v1163
        %v3835 = vunpack.c.h.b16 %v1163
        %v3836 = vunpack.c.l.b16 %v1164
        %v3837 = vunpack.c.l.b16 %v1165
        %v3838 = vunpack.c.h.b16 %v1165
        %v3839 = vunpack.c.l.b16 %v1166
        %v3840 = vunpack.c.h.b16 %v1166
        %v3841 = vunpack.c.l.b16 %v1167
        %v3842 = vunpack.c.l.b16 %v1168
        %v3843 = vunpack.c.h.b16 %v1168
        %v3844 = vunpack.c.l.b16 %v1169
        %v3845 = vunpack.c.h.b16 %v1169
        %v3846 = vunpack.c.l.b16 %v1170
        %v3847 = vunpack.c.l.b16 %v1171
        %v3848 = vunpack.c.h.b16 %v1171
        %v3849 = vunpack.c.l.b16 %v1172
        %v3850 = vunpack.c.h.b16 %v1172
        %v3851 = vunpack.c.l.b16 %v1173
        %v3852 = vunpack.c.l.b16 %v1174
        %v3853 = vunpack.c.h.b16 %v1174
        %v3854 = vunpack.c.l.b16 %v1175
        %v3855 = vunpack.c.h.b16 %v1175
        %v3856 = vunpack.c.l.b16 %v1176
        %v3857 = vunpack.c.l.b16 %v1177
        %v3858 = vunpack.c.h.b16 %v1177
        %v3859 = vunpack.c.l.b16 %v1178
        %v3860 = vunpack.c.h.b16 %v1178
        %v3861 = vunpack.c.l.b16 %v1179
        %v3862 = vunpack.c.l.b16 %v1180
        %v3863 = vunpack.c.h.b16 %v1180
        %v3864 = vunpack.c.l.b16 %v1181
        %v3865 = vunpack.c.h.b16 %v1181
        %v3866 = vunpack.c.l.b16 %v1182
        %v3867 = vunpack.c.l.b16 %v1183
        %v3868 = vunpack.c.h.b16 %v1183
        %v3869 = vunpack.c.l.b16 %v1184
        %v3870 = vunpack.c.h.b16 %v1184
        %v3871 = vunpack.c.l.b16 %v1185
        %v3872 = vunpack.c.l.b16 %v1186
        %v3873 = vunpack.c.h.b16 %v1186
        %v3874 = vunpack.c.l.b16 %v1187
        %v3875 = vunpack.c.h.b16 %v1187
        %v3876 = vunpack.c.l.b16 %v1188
        %v3877 = vunpack.c.l.b16 %v1189
        %v3878 = vunpack.c.h.b16 %v1189
        %v3879 = vunpack.c.l.b16 %v1190
        %v3880 = vunpack.c.h.b16 %v1190
        %v3881 = vunpack.c.l.b16 %v1191
        %v3882 = vunpack.c.l.b16 %v1192
        %v3883 = vunpack.c.h.b16 %v1192
        %v3884 = vunpack.c.l.b16 %v1193
        %v3885 = vunpack.c.h.b16 %v1193
        %v3886 = vunpack.c.l.b16 %v1194
        %v3887 = vunpack.c.l.b16 %v1195
        %v3888 = vunpack.c.h.b16 %v1195
        %v3889 = vunpack.c.l.b16 %v1196
        %v3890 = vunpack.c.h.b16 %v1196
        %v3891 = vunpack.c.l.b16 %v1197
        %v3892 = vunpack.c.l.b16 %v1198
        %v3893 = vunpack.c.h.b16 %v1198
        %v3894 = vunpack.c.l.b16 %v1199
        %v3895 = vunpack.c.h.b16 %v1199
        %v3896 = vunpack.c.l.b16 %v1200
        %v3897 = vunpack.c.l.b16 %v1201
        %v3898 = vunpack.c.h.b16 %v1201
        %v3899 = vunpack.c.l.b16 %v1202
        %v3900 = vunpack.c.h.b16 %v1202
        %v3901 = vunpack.c.l.b16 %v1203
        %v3902 = vunpack.c.l.b16 %v1204
        %v3903 = vunpack.c.h.b16 %v1204
        %v3904 = vunpack.c.l.b16 %v1205
        %v3905 = vunpack.c.h.b16 %v1205
        %v3906 = vunpack.c.l.b16 %v1206
        %v3907 = vunpack.c.l.b16 %v1207
        %v3908 = vunpack.c.h.b16 %v1207
        %v3909 = vunpack.c.l.b16 %v1208
        %v3910 = vunpack.c.h.b16 %v1208
        %v3911 = vunpack.c.l.b16 %v1209
        %v3912 = vunpack.c.l.b16 %v1210
        %v3913 = vunpack.c.h.b16 %v1210
        %v3914 = vunpack.c.l.b16 %v1211
        %v3915 = vunpack.c.h.b16 %v1211
        %v3916 = vunpack.c.l.b16 %v1212
        %v3917 = vunpack.c.l.b16 %v1213
        %v3918 = vunpack.c.h.b16 %v1213
        %v3919 = vunpack.c.l.b16 %v1214
        %v3920 = vunpack.c.h.b16 %v1214
        %v3921 = vunpack.c.l.b16 %v1215
        %v3922 = vunpack.c.l.b16 %v1216
        %v3923 = vunpack.c.h.b16 %v1216
        %v3924 = vunpack.c.l.b16 %v1217
        %v3925 = vunpack.c.h.b16 %v1217
        %v3926 = vunpack.c.l.b16 %v1218
        %v3927 = vunpack.c.l.b16 %v1219
        %v3928 = vunpack.c.h.b16 %v1219
        %v3929 = vunpack.c.l.b16 %v1220
        %v3930 = vunpack.c.h.b16 %v1220
        %v3931 = vunpack.c.l.b16 %v1221
        %v3932 = vunpack.c.l.b16 %v1222
        %v3933 = vunpack.c.h.b16 %v1222
        %v3934 = vunpack.c.l.b16 %v1223
        %v3935 = vunpack.c.h.b16 %v1223
        %v3936 = vunpack.c.l.b16 %v1224
        %v3937 = vunpack.c.l.b16 %v1225
        %v3938 = vunpack.c.h.b16 %v1225
        %v3939 = vunpack.c.l.b16 %v1226
        %v3940 = vunpack.c.h.b16 %v1226
        %v3941 = vunpack.c.l.b16 %v1227
        %v3942 = vunpack.c.l.b16 %v1228
        %v3943 = vunpack.c.h.b16 %v1228
        %v3944 = vunpack.c.l.b16 %v1229
        %v3945 = vunpack.c.h.b16 %v1229
        %v3946 = vunpack.c.l.b16 %v1230
        %v3947 = vunpack.c.l.b16 %v1231
        %v3948 = vunpack.c.h.b16 %v1231
        %v3949 = vunpack.c.l.b16 %v1232
        %v3950 = vunpack.c.h.b16 %v1232
        %v3951 = vunpack.c.l.b16 %v1233
        %v3952 = vunpack.c.l.b16 %v1234
        %v3953 = vunpack.c.h.b16 %v1234
        %v3954 = vunpack.c.l.b16 %v1235
        %v3955 = vunpack.c.h.b16 %v1235
        %v3956 = vunpack.c.l.b16 %v1236
        %v3957 = vunpack.c.l.b16 %v1237
        %v3958 = vunpack.c.h.b16 %v1237
        %v3959 = vunpack.c.l.b16 %v1238
        %v3960 = vunpack.c.h.b16 %v1238
        %v3961 = vunpack.c.l.b16 %v1239
        %v3962 = vunpack.c.l.b16 %v1240
        %v3963 = vunpack.c.h.b16 %v1240
        %v3964 = vunpack.c.l.b16 %v1241
        %v3965 = vunpack.c.h.b16 %v1241
        %v3966 = vunpack.c.l.b16 %v1242
        %v3967 = vunpack.c.l.b16 %v1243
        %v3968 = vunpack.c.h.b16 %v1243
        %v3969 = vunpack.c.l.b16 %v1244
        %v3970 = vunpack.c.h.b16 %v1244
        %v3971 = vunpack.c.l.b16 %v1245
        %v3972 = vunpack.c.l.b16 %v1246
        %v3973 = vunpack.c.h.b16 %v1246
        %v3974 = vunpack.c.l.b16 %v1247
        %v3975 = vunpack.c.h.b16 %v1247
        %v3976 = vunpack.c.l.b16 %v1248
        %v3977 = vunpack.c.l.b16 %v1249
        %v3978 = vunpack.c.h.b16 %v1249
        %v3979 = vunpack.c.l.b16 %v1250
        %v3980 = vunpack.c.h.b16 %v1250
        %v3981 = vunpack.c.l.b16 %v1251
        %v3982 = vunpack.c.l.b16 %v1252
        %v3983 = vunpack.c.h.b16 %v1252
        %v3984 = vunpack.c.l.b16 %v1253
        %v3985 = vunpack.c.h.b16 %v1253
        %v3986 = vunpack.c.l.b16 %v1254
        %v3987 = vpack.c.b16 %v2392, %v2387
        %v3988 = vpack.c.b16 %v2393, %v2388
        %v3989 = vpack.c.b16 %v2394, %v2389
        %v3990 = vpack.c.b16 %v2395, %v2390
        %v3991 = vpack.c.b16 %v2396, %v2391
        %v3992 = vpack.c.b16 %v2402, %v2397
        %v3993 = vpack.c.b16 %v2403, %v2398
        %v3994 = vpack.c.b16 %v2404, %v2399
        %v3995 = vpack.c.b16 %v2405, %v2400
        %v3996 = vpack.c.b16 %v2406, %v2401
        %v3997 = vpack.c.b16 %v2412, %v2407
        %v3998 = vpack.c.b16 %v2413, %v2408
        %v3999 = vpack.c.b16 %v2414, %v2409
        %v4000 = vpack.c.b16 %v2415, %v2410
        %v4001 = vpack.c.b16 %v2416, %v2411
        %v4002 = vpack.c.b16 %v2422, %v2417
        %v4003 = vpack.c.b16 %v2423, %v2418
        %v4004 = vpack.c.b16 %v2424, %v2419
        %v4005 = vpack.c.b16 %v2425, %v2420
        %v4006 = vpack.c.b16 %v2426, %v2421
        %v4007 = vpack.c.b16 %v2432, %v2427
        %v4008 = vpack.c.b16 %v2433, %v2428
        %v4009 = vpack.c.b16 %v2434, %v2429
        %v4010 = vpack.c.b16 %v2435, %v2430
        %v4011 = vpack.c.b16 %v2436, %v2431
        %v4012 = vpack.c.b16 %v2442, %v2437
        %v4013 = vpack.c.b16 %v2443, %v2438
        %v4014 = vpack.c.b16 %v2444, %v2439
        %v4015 = vpack.c.b16 %v2445, %v2440
        %v4016 = vpack.c.b16 %v2446, %v2441
        %v4017 = vpack.c.b16 %v2452, %v2447
        %v4018 = vpack.c.b16 %v2453, %v2448
        %v4019 = vpack.c.b16 %v2454, %v2449
        %v4020 = vpack.c.b16 %v2455, %v2450
        %v4021 = vpack.c.b16 %v2456, %v2451
        %v4022 = vpack.c.b16 %v2462, %v2457
        %v4023 = vpack.c.b16 %v2463, %v2458
        %v4024 = vpack.c.b16 %v2464, %v2459
        %v4025 = vpack.c.b16 %v2465, %v2460
        %v4026 = vpack.c.b16 %v2466, %v2461
        %v4027 = vpack.c.b16 %v2472, %v2467
        %v4028 = vpack.c.b16 %v2473, %v2468
        %v4029 = vpack.c.b16 %v2474, %v2469
        %v4030 = vpack.c.b16 %v2475, %v2470
        %v4031 = vpack.c.b16 %v2476, %v2471
        %v4032 = vpack.c.b16 %v2482, %v2477
        %v4033 = vpack.c.b16 %v2483, %v2478
        %v4034 = vpack.c.b16 %v2484, %v2479
        %v4035 = vpack.c.b16 %v2485, %v2480
        %v4036 = vpack.c.b16 %v2486, %v2481
        %v4037 = vpack.c.b16 %v2492, %v2487
        %v4038 = vpack.c.b16 %v2493, %v2488
        %v4039 = vpack.c.b16 %v2494, %v2489
        %v4040 = vpack.c.b16 %v2495, %v2490
        %v4041 = vpack.c.b16 %v2496, %v2491
        %v4042 = vpack.c.b16 %v2502, %v2497
        %v4043 = vpack.c.b16 %v2503, %v2498
        %v4044 = vpack.c.b16 %v2504, %v2499
        %v4045 = vpack.c.b16 %v2505, %v2500
        %v4046 = vpack.c.b16 %v2506, %v2501
        %v4047 = vpack.c.b16 %v2512, %v2507
        %v4048 = vpack.c.b16 %v2513, %v2508
        %v4049 = vpack.c.b16 %v2514, %v2509
        %v4050 = vpack.c.b16 %v2515, %v2510
        %v4051 = vpack.c.b16 %v2516, %v2511
        %v4052 = vpack.c.b16 %v2522, %v2517
        %v4053 = vpack.c.b16 %v2523, %v2518
        %v4054 = vpack.c.b16 %v2524, %v2519
        %v4055 = vpack.c.b16 %v2525, %v2520
        %v4056 = vpack.c.b16 %v2526, %v2521
        %v4057 = vpack.c.b16 %v2532, %v2527
        %v4058 = vpack.c.b16 %v2533, %v2528
        %v4059 = vpack.c.b16 %v2534, %v2529
        %v4060 = vpack.c.b16 %v2535, %v2530
        %v4061 = vpack.c.b16 %v2536, %v2531
        %v4062 = vpack.c.b16 %v2542, %v2537
        %v4063 = vpack.c.b16 %v2543, %v2538
        %v4064 = vpack.c.b16 %v2544, %v2539
        %v4065 = vpack.c.b16 %v2545, %v2540
        %v4066 = vpack.c.b16 %v2546, %v2541
        %v4067 = vpack.c.b16 %v2552, %v2547
        %v4068 = vpack.c.b16 %v2553, %v2548
        %v4069 = vpack.c.b16 %v2554, %v2549
        %v4070 = vpack.c.b16 %v2555, %v2550
        %v4071 = vpack.c.b16 %v2556, %v2551
        %v4072 = vpack.c.b16 %v2562, %v2557
        %v4073 = vpack.c.b16 %v2563, %v2558
        %v4074 = vpack.c.b16 %v2564, %v2559
        %v4075 = vpack.c.b16 %v2565, %v2560
        %v4076 = vpack.c.b16 %v2566, %v2561
        %v4077 = vpack.c.b16 %v2572, %v2567
        %v4078 = vpack.c.b16 %v2573, %v2568
        %v4079 = vpack.c.b16 %v2574, %v2569
        %v4080 = vpack.c.b16 %v2575, %v2570
        %v4081 = vpack.c.b16 %v2576, %v2571
        %v4082 = vpack.c.b16 %v2582, %v2577
        %v4083 = vpack.c.b16 %v2583, %v2578
        %v4084 = vpack.c.b16 %v2584, %v2579
        %v4085 = vpack.c.b16 %v2585, %v2580
        %v4086 = vpack.c.b16 %v2586, %v2581
        %v4087 = vpack.c.b16 %v2592, %v2587
        %v4088 = vpack.c.b16 %v2593, %v2588
        %v4089 = vpack.c.b16 %v2594, %v2589
        %v4090 = vpack.c.b16 %v2595, %v2590
        %v4091 = vpack.c.b16 %v2596, %v2591
        %v4092 = vpack.c.b16 %v2602, %v2597
        %v4093 = vpack.c.b16 %v2603, %v2598
        %v4094 = vpack.c.b16 %v2604, %v2599
        %v4095 = vpack.c.b16 %v2605, %v2600
        %v4096 = vpack.c.b16 %v2606, %v2601
        %v4097 = vpack.c.b16 %v2612, %v2607
        %v4098 = vpack.c.b16 %v2613, %v2608
        %v4099 = vpack.c.b16 %v2614, %v2609
        %v4100 = vpack.c.b16 %v2615, %v2610
        %v4101 = vpack.c.b16 %v2616, %v2611
        %v4102 = vpack.c.b16 %v2622, %v2617
        %v4103 = vpack.c.b16 %v2623, %v2618
        %v4104 = vpack.c.b16 %v2624, %v2619
        %v4105 = vpack.c.b16 %v2625, %v2620
        %v4106 = vpack.c.b16 %v2626, %v2621
        %v4107 = vpack.c.b16 %v2632, %v2627
        %v4108 = vpack.c.b16 %v2633, %v2628
        %v4109 = vpack.c.b16 %v2634, %v2629
        %v4110 = vpack.c.b16 %v2635, %v2630
        %v4111 = vpack.c.b16 %v2636, %v2631
        %v4112 = vpack.c.b16 %v2642, %v2637
        %v4113 = vpack.c.b16 %v2643, %v2638
        %v4114 = vpack.c.b16 %v2644, %v2639
        %v4115 = vpack.c.b16 %v2645, %v2640
        %v4116 = vpack.c.b16 %v2646, %v2641
        %v4117 = vpack.c.b16 %v2652, %v2647
        %v4118 = vpack.c.b16 %v2653, %v2648
        %v4119 = vpack.c.b16 %v2654, %v2649
        %v4120 = vpack.c.b16 %v2655, %v2650
        %v4121 = vpack.c.b16 %v2656, %v2651
        %v4122 = vpack.c.b16 %v2662, %v2657
        %v4123 = vpack.c.b16 %v2663, %v2658
        %v4124 = vpack.c.b16 %v2664, %v2659
        %v4125 = vpack.c.b16 %v2665, %v2660
        %v4126 = vpack.c.b16 %v2666, %v2661
        %v4127 = vpack.c.b16 %v2672, %v2667
        %v4128 = vpack.c.b16 %v2673, %v2668
        %v4129 = vpack.c.b16 %v2674, %v2669
        %v4130 = vpack.c.b16 %v2675, %v2670
        %v4131 = vpack.c.b16 %v2676, %v2671
        %v4132 = vpack.c.b16 %v2682, %v2677
        %v4133 = vpack.c.b16 %v2683, %v2678
        %v4134 = vpack.c.b16 %v2684, %v2679
        %v4135 = vpack.c.b16 %v2685, %v2680
        %v4136 = vpack.c.b16 %v2686, %v2681
        %v4137 = vpack.c.b16 %v2692, %v2687
        %v4138 = vpack.c.b16 %v2693, %v2688
        %v4139 = vpack.c.b16 %v2694, %v2689
        %v4140 = vpack.c.b16 %v2695, %v2690
        %v4141 = vpack.c.b16 %v2696, %v2691
        %v4142 = vpack.c.b16 %v2702, %v2697
        %v4143 = vpack.c.b16 %v2703, %v2698
        %v4144 = vpack.c.b16 %v2704, %v2699
        %v4145 = vpack.c.b16 %v2705, %v2700
        %v4146 = vpack.c.b16 %v2706, %v2701
        %v4147 = vpack.c.b16 %v2712, %v2707
        %v4148 = vpack.c.b16 %v2713, %v2708
        %v4149 = vpack.c.b16 %v2714, %v2709
        %v4150 = vpack.c.b16 %v2715, %v2710
        %v4151 = vpack.c.b16 %v2716, %v2711
        %v4152 = vpack.c.b16 %v2722, %v2717
        %v4153 = vpack.c.b16 %v2723, %v2718
        %v4154 = vpack.c.b16 %v2724, %v2719
        %v4155 = vpack.c.b16 %v2725, %v2720
        %v4156 = vpack.c.b16 %v2726, %v2721
        %v4157 = vpack.c.b16 %v2732, %v2727
        %v4158 = vpack.c.b16 %v2733, %v2728
        %v4159 = vpack.c.b16 %v2734, %v2729
        %v4160 = vpack.c.b16 %v2735, %v2730
        %v4161 = vpack.c.b16 %v2736, %v2731
        %v4162 = vpack.c.b16 %v2742, %v2737
        %v4163 = vpack.c.b16 %v2743, %v2738
        %v4164 = vpack.c.b16 %v2744, %v2739
        %v4165 = vpack.c.b16 %v2745, %v2740
        %v4166 = vpack.c.b16 %v2746, %v2741
        %v4167 = vpack.c.b16 %v2752, %v2747
        %v4168 = vpack.c.b16 %v2753, %v2748
        %v4169 = vpack.c.b16 %v2754, %v2749
        %v4170 = vpack.c.b16 %v2755, %v2750
        %v4171 = vpack.c.b16 %v2756, %v2751
        %v4172 = vpack.c.b16 %v2762, %v2757
        %v4173 = vpack.c.b16 %v2763, %v2758
        %v4174 = vpack.c.b16 %v2764, %v2759
        %v4175 = vpack.c.b16 %v2765, %v2760
        %v4176 = vpack.c.b16 %v2766, %v2761
        %v4177 = vpack.c.b16 %v2772, %v2767
        %v4178 = vpack.c.b16 %v2773, %v2768
        %v4179 = vpack.c.b16 %v2774, %v2769
        %v4180 = vpack.c.b16 %v2775, %v2770
        %v4181 = vpack.c.b16 %v2776, %v2771
        %v4182 = vpack.c.b16 %v2782, %v2777
        %v4183 = vpack.c.b16 %v2783, %v2778
        %v4184 = vpack.c.b16 %v2784, %v2779
        %v4185 = vpack.c.b16 %v2785, %v2780
        %v4186 = vpack.c.b16 %v2786, %v2781
        %v4187 = vpack.c.b16 %v2792, %v2787
        %v4188 = vpack.c.b16 %v2793, %v2788
        %v4189 = vpack.c.b16 %v2794, %v2789
        %v4190 = vpack.c.b16 %v2795, %v2790
        %v4191 = vpack.c.b16 %v2796, %v2791
        %v4192 = vpack.c.b16 %v2802, %v2797
        %v4193 = vpack.c.b16 %v2803, %v2798
        %v4194 = vpack.c.b16 %v2804, %v2799
        %v4195 = vpack.c.b16 %v2805, %v2800
        %v4196 = vpack.c.b16 %v2806, %v2801
        %v4197 = vpack.c.b16 %v2812, %v2807
        %v4198 = vpack.c.b16 %v2813, %v2808
        %v4199 = vpack.c.b16 %v2814, %v2809
        %v4200 = vpack.c.b16 %v2815, %v2810
        %v4201 = vpack.c.b16 %v2816, %v2811
        %v4202 = vpack.c.b16 %v2822, %v2817
        %v4203 = vpack.c.b16 %v2823, %v2818
        %v4204 = vpack.c.b16 %v2824, %v2819
        %v4205 = vpack.c.b16 %v2825, %v2820
        %v4206 = vpack.c.b16 %v2826, %v2821
        %v4207 = vpack.c.b16 %v2832, %v2827
        %v4208 = vpack.c.b16 %v2833, %v2828
        %v4209 = vpack.c.b16 %v2834, %v2829
        %v4210 = vpack.c.b16 %v2835, %v2830
        %v4211 = vpack.c.b16 %v2836, %v2831
        %v4212 = vpack.c.b16 %v2842, %v2837
        %v4213 = vpack.c.b16 %v2843, %v2838
        %v4214 = vpack.c.b16 %v2844, %v2839
        %v4215 = vpack.c.b16 %v2845, %v2840
        %v4216 = vpack.c.b16 %v2846, %v2841
        %v4217 = vpack.c.b16 %v2852, %v2847
        %v4218 = vpack.c.b16 %v2853, %v2848
        %v4219 = vpack.c.b16 %v2854, %v2849
        %v4220 = vpack.c.b16 %v2855, %v2850
        %v4221 = vpack.c.b16 %v2856, %v2851
        %v4222 = vpack.c.b16 %v2862, %v2857
        %v4223 = vpack.c.b16 %v2863, %v2858
        %v4224 = vpack.c.b16 %v2864, %v2859
        %v4225 = vpack.c.b16 %v2865, %v2860
        %v4226 = vpack.c.b16 %v2866, %v2861
        %v4227 = vpack.c.b16 %v2872, %v2867
        %v4228 = vpack.c.b16 %v2873, %v2868
        %v4229 = vpack.c.b16 %v2874, %v2869
        %v4230 = vpack.c.b16 %v2875, %v2870
        %v4231 = vpack.c.b16 %v2876, %v2871
        %v4232 = vpack.c.b16 %v2882, %v2877
        %v4233 = vpack.c.b16 %v2883, %v2878
        %v4234 = vpack.c.b16 %v2884, %v2879
        %v4235 = vpack.c.b16 %v2885, %v2880
        %v4236 = vpack.c.b16 %v2886, %v2881
        %v4237 = vpack.c.b16 %v2892, %v2887
        %v4238 = vpack.c.b16 %v2893, %v2888
        %v4239 = vpack.c.b16 %v2894, %v2889
        %v4240 = vpack.c.b16 %v2895, %v2890
        %v4241 = vpack.c.b16 %v2896, %v2891
        %v4242 = vpack.c.b16 %v2902, %v2897
        %v4243 = vpack.c.b16 %v2903, %v2898
        %v4244 = vpack.c.b16 %v2904, %v2899
        %v4245 = vpack.c.b16 %v2905, %v2900
        %v4246 = vpack.c.b16 %v2906, %v2901
        %v4247 = vpack.c.b16 %v2912, %v2907
        %v4248 = vpack.c.b16 %v2913, %v2908
        %v4249 = vpack.c.b16 %v2914, %v2909
        %v4250 = vpack.c.b16 %v2915, %v2910
        %v4251 = vpack.c.b16 %v2916, %v2911
        %v4252 = vpack.c.b16 %v2922, %v2917
        %v4253 = vpack.c.b16 %v2923, %v2918
        %v4254 = vpack.c.b16 %v2924, %v2919
        %v4255 = vpack.c.b16 %v2925, %v2920
        %v4256 = vpack.c.b16 %v2926, %v2921
        %v4257 = vpack.c.b16 %v2932, %v2927
        %v4258 = vpack.c.b16 %v2933, %v2928
        %v4259 = vpack.c.b16 %v2934, %v2929
        %v4260 = vpack.c.b16 %v2935, %v2930
        %v4261 = vpack.c.b16 %v2936, %v2931
        %v4262 = vpack.c.b16 %v2942, %v2937
        %v4263 = vpack.c.b16 %v2943, %v2938
        %v4264 = vpack.c.b16 %v2944, %v2939
        %v4265 = vpack.c.b16 %v2945, %v2940
        %v4266 = vpack.c.b16 %v2946, %v2941
        %v4267 = vpack.c.b16 %v2952, %v2947
        %v4268 = vpack.c.b16 %v2953, %v2948
        %v4269 = vpack.c.b16 %v2954, %v2949
        %v4270 = vpack.c.b16 %v2955, %v2950
        %v4271 = vpack.c.b16 %v2956, %v2951
        %v4272 = vpack.c.b16 %v2962, %v2957
        %v4273 = vpack.c.b16 %v2963, %v2958
        %v4274 = vpack.c.b16 %v2964, %v2959
        %v4275 = vpack.c.b16 %v2965, %v2960
        %v4276 = vpack.c.b16 %v2966, %v2961
        %v4277 = vpack.c.b16 %v2972, %v2967
        %v4278 = vpack.c.b16 %v2973, %v2968
        %v4279 = vpack.c.b16 %v2974, %v2969
        %v4280 = vpack.c.b16 %v2975, %v2970
        %v4281 = vpack.c.b16 %v2976, %v2971
        %v4282 = vpack.c.b16 %v2982, %v2977
        %v4283 = vpack.c.b16 %v2983, %v2978
        %v4284 = vpack.c.b16 %v2984, %v2979
        %v4285 = vpack.c.b16 %v2985, %v2980
        %v4286 = vpack.c.b16 %v2986, %v2981
        %v4287 = vpack.c.b16 %v2992, %v2987
        %v4288 = vpack.c.b16 %v2993, %v2988
        %v4289 = vpack.c.b16 %v2994, %v2989
        %v4290 = vpack.c.b16 %v2995, %v2990
        %v4291 = vpack.c.b16 %v2996, %v2991
        %v4292 = vpack.c.b16 %v3002, %v2997
        %v4293 = vpack.c.b16 %v3003, %v2998
        %v4294 = vpack.c.b16 %v3004, %v2999
        %v4295 = vpack.c.b16 %v3005, %v3000
        %v4296 = vpack.c.b16 %v3006, %v3001
        %v4297 = vpack.c.b16 %v3012, %v3007
        %v4298 = vpack.c.b16 %v3013, %v3008
        %v4299 = vpack.c.b16 %v3014, %v3009
        %v4300 = vpack.c.b16 %v3015, %v3010
        %v4301 = vpack.c.b16 %v3016, %v3011
        %v4302 = vpack.c.b16 %v3022, %v3017
        %v4303 = vpack.c.b16 %v3023, %v3018
        %v4304 = vpack.c.b16 %v3024, %v3019
        %v4305 = vpack.c.b16 %v3025, %v3020
        %v4306 = vpack.c.b16 %v3026, %v3021
        %v4307 = vpack.c.b16 %v3032, %v3027
        %v4308 = vpack.c.b16 %v3033, %v3028
        %v4309 = vpack.c.b16 %v3034, %v3029
        %v4310 = vpack.c.b16 %v3035, %v3030
        %v4311 = vpack.c.b16 %v3036, %v3031
        %v4312 = vpack.c.b16 %v3042, %v3037
        %v4313 = vpack.c.b16 %v3043, %v3038
        %v4314 = vpack.c.b16 %v3044, %v3039
        %v4315 = vpack.c.b16 %v3045, %v3040
        %v4316 = vpack.c.b16 %v3046, %v3041
        %v4317 = vpack.c.b16 %v3052, %v3047
        %v4318 = vpack.c.b16 %v3053, %v3048
        %v4319 = vpack.c.b16 %v3054, %v3049
        %v4320 = vpack.c.b16 %v3055, %v3050
        %v4321 = vpack.c.b16 %v3056, %v3051
        %v4322 = vpack.c.b16 %v3062, %v3057
        %v4323 = vpack.c.b16 %v3063, %v3058
        %v4324 = vpack.c.b16 %v3064, %v3059
        %v4325 = vpack.c.b16 %v3065, %v3060
        %v4326 = vpack.c.b16 %v3066, %v3061
        %v4327 = vpack.c.b16 %v3072, %v3067
        %v4328 = vpack.c.b16 %v3073, %v3068
        %v4329 = vpack.c.b16 %v3074, %v3069
        %v4330 = vpack.c.b16 %v3075, %v3070
        %v4331 = vpack.c.b16 %v3076, %v3071
        %v4332 = vpack.c.b16 %v3082, %v3077
        %v4333 = vpack.c.b16 %v3083, %v3078
        %v4334 = vpack.c.b16 %v3084, %v3079
        %v4335 = vpack.c.b16 %v3085, %v3080
        %v4336 = vpack.c.b16 %v3086, %v3081
        %v4337 = vpack.c.b16 %v3092, %v3087
        %v4338 = vpack.c.b16 %v3093, %v3088
        %v4339 = vpack.c.b16 %v3094, %v3089
        %v4340 = vpack.c.b16 %v3095, %v3090
        %v4341 = vpack.c.b16 %v3096, %v3091
        %v4342 = vpack.c.b16 %v3102, %v3097
        %v4343 = vpack.c.b16 %v3103, %v3098
        %v4344 = vpack.c.b16 %v3104, %v3099
        %v4345 = vpack.c.b16 %v3105, %v3100
        %v4346 = vpack.c.b16 %v3106, %v3101
        %v4347 = vpack.c.b16 %v3112, %v3107
        %v4348 = vpack.c.b16 %v3113, %v3108
        %v4349 = vpack.c.b16 %v3114, %v3109
        %v4350 = vpack.c.b16 %v3115, %v3110
        %v4351 = vpack.c.b16 %v3116, %v3111
        %v4352 = vpack.c.b16 %v3122, %v3117
        %v4353 = vpack.c.b16 %v3123, %v3118
        %v4354 = vpack.c.b16 %v3124, %v3119
        %v4355 = vpack.c.b16 %v3125, %v3120
        %v4356 = vpack.c.b16 %v3126, %v3121
        %v4357 = vpack.c.b16 %v3132, %v3127
        %v4358 = vpack.c.b16 %v3133, %v3128
        %v4359 = vpack.c.b16 %v3134, %v3129
        %v4360 = vpack.c.b16 %v3135, %v3130
        %v4361 = vpack.c.b16 %v3136, %v3131
        %v4362 = vpack.c.b16 %v3142, %v3137
        %v4363 = vpack.c.b16 %v3143, %v3138
        %v4364 = vpack.c.b16 %v3144, %v3139
        %v4365 = vpack.c.b16 %v3145, %v3140
        %v4366 = vpack.c.b16 %v3146, %v3141
        %v4367 = vpack.c.b16 %v3152, %v3147
        %v4368 = vpack.c.b16 %v3153, %v3148
        %v4369 = vpack.c.b16 %v3154, %v3149
        %v4370 = vpack.c.b16 %v3155, %v3150
        %v4371 = vpack.c.b16 %v3156, %v3151
        %v4372 = vpack.c.b16 %v3162, %v3157
        %v4373 = vpack.c.b16 %v3163, %v3158
        %v4374 = vpack.c.b16 %v3164, %v3159
        %v4375 = vpack.c.b16 %v3165, %v3160
        %v4376 = vpack.c.b16 %v3166, %v3161
        %v4377 = vpack.c.b16 %v3172, %v3167
        %v4378 = vpack.c.b16 %v3173, %v3168
        %v4379 = vpack.c.b16 %v3174, %v3169
        %v4380 = vpack.c.b16 %v3175, %v3170
        %v4381 = vpack.c.b16 %v3176, %v3171
        %v4382 = vpack.c.b16 %v3182, %v3177
        %v4383 = vpack.c.b16 %v3183, %v3178
        %v4384 = vpack.c.b16 %v3184, %v3179
        %v4385 = vpack.c.b16 %v3185, %v3180
        %v4386 = vpack.c.b16 %v3186, %v3181
        %v4387 = vpack.c.b16 %v3192, %v3187
        %v4388 = vpack.c.b16 %v3193, %v3188
        %v4389 = vpack.c.b16 %v3194, %v3189
        %v4390 = vpack.c.b16 %v3195, %v3190
        %v4391 = vpack.c.b16 %v3196, %v3191
        %v4392 = vpack.c.b16 %v3202, %v3197
        %v4393 = vpack.c.b16 %v3203, %v3198
        %v4394 = vpack.c.b16 %v3204, %v3199
        %v4395 = vpack.c.b16 %v3205, %v3200
        %v4396 = vpack.c.b16 %v3206, %v3201
        %v4397 = vpack.c.b16 %v3212, %v3207
        %v4398 = vpack.c.b16 %v3213, %v3208
        %v4399 = vpack.c.b16 %v3214, %v3209
        %v4400 = vpack.c.b16 %v3215, %v3210
        %v4401 = vpack.c.b16 %v3216, %v3211
        %v4402 = vpack.c.b16 %v3222, %v3217
        %v4403 = vpack.c.b16 %v3223, %v3218
        %v4404 = vpack.c.b16 %v3224, %v3219
        %v4405 = vpack.c.b16 %v3225, %v3220
        %v4406 = vpack.c.b16 %v3226, %v3221
        %v4407 = vpack.c.b16 %v3232, %v3227
        %v4408 = vpack.c.b16 %v3233, %v3228
        %v4409 = vpack.c.b16 %v3234, %v3229
        %v4410 = vpack.c.b16 %v3235, %v3230
        %v4411 = vpack.c.b16 %v3236, %v3231
        %v4412 = vpack.c.b16 %v3242, %v3237
        %v4413 = vpack.c.b16 %v3243, %v3238
        %v4414 = vpack.c.b16 %v3244, %v3239
        %v4415 = vpack.c.b16 %v3245, %v3240
        %v4416 = vpack.c.b16 %v3246, %v3241
        %v4417 = vpack.c.b16 %v3252, %v3247
        %v4418 = vpack.c.b16 %v3253, %v3248
        %v4419 = vpack.c.b16 %v3254, %v3249
        %v4420 = vpack.c.b16 %v3255, %v3250
        %v4421 = vpack.c.b16 %v3256, %v3251
        %v4422 = vpack.c.b16 %v3262, %v3257
        %v4423 = vpack.c.b16 %v3263, %v3258
        %v4424 = vpack.c.b16 %v3264, %v3259
        %v4425 = vpack.c.b16 %v3265, %v3260
        %v4426 = vpack.c.b16 %v3266, %v3261
        %v4427 = vpack.c.b16 %v3272, %v3267
        %v4428 = vpack.c.b16 %v3273, %v3268
        %v4429 = vpack.c.b16 %v3274, %v3269
        %v4430 = vpack.c.b16 %v3275, %v3270
        %v4431 = vpack.c.b16 %v3276, %v3271
        %v4432 = vpack.c.b16 %v3282, %v3277
        %v4433 = vpack.c.b16 %v3283, %v3278
        %v4434 = vpack.c.b16 %v3284, %v3279
        %v4435 = vpack.c.b16 %v3285, %v3280
        %v4436 = vpack.c.b16 %v3286, %v3281
        %v4437 = vpack.c.b16 %v3292, %v3287
        %v4438 = vpack.c.b16 %v3293, %v3288
        %v4439 = vpack.c.b16 %v3294, %v3289
        %v4440 = vpack.c.b16 %v3295, %v3290
        %v4441 = vpack.c.b16 %v3296, %v3291
        %v4442 = vpack.c.b16 %v3302, %v3297
        %v4443 = vpack.c.b16 %v3303, %v3298
        %v4444 = vpack.c.b16 %v3304, %v3299
        %v4445 = vpack.c.b16 %v3305, %v3300
        %v4446 = vpack.c.b16 %v3306, %v3301
        %v4447 = vpack.c.b16 %v3312, %v3307
        %v4448 = vpack.c.b16 %v3313, %v3308
        %v4449 = vpack.c.b16 %v3314, %v3309
        %v4450 = vpack.c.b16 %v3315, %v3310
        %v4451 = vpack.c.b16 %v3316, %v3311
        %v4452 = vpack.c.b16 %v3322, %v3317
        %v4453 = vpack.c.b16 %v3323, %v3318
        %v4454 = vpack.c.b16 %v3324, %v3319
        %v4455 = vpack.c.b16 %v3325, %v3320
        %v4456 = vpack.c.b16 %v3326, %v3321
        %v4457 = vpack.c.b16 %v3332, %v3327
        %v4458 = vpack.c.b16 %v3333, %v3328
        %v4459 = vpack.c.b16 %v3334, %v3329
        %v4460 = vpack.c.b16 %v3335, %v3330
        %v4461 = vpack.c.b16 %v3336, %v3331
        %v4462 = vpack.c.b16 %v3342, %v3337
        %v4463 = vpack.c.b16 %v3343, %v3338
        %v4464 = vpack.c.b16 %v3344, %v3339
        %v4465 = vpack.c.b16 %v3345, %v3340
        %v4466 = vpack.c.b16 %v3346, %v3341
        %v4467 = vpack.c.b16 %v3352, %v3347
        %v4468 = vpack.c.b16 %v3353, %v3348
        %v4469 = vpack.c.b16 %v3354, %v3349
        %v4470 = vpack.c.b16 %v3355, %v3350
        %v4471 = vpack.c.b16 %v3356, %v3351
        %v4472 = vpack.c.b16 %v3362, %v3357
        %v4473 = vpack.c.b16 %v3363, %v3358
        %v4474 = vpack.c.b16 %v3364, %v3359
        %v4475 = vpack.c.b16 %v3365, %v3360
        %v4476 = vpack.c.b16 %v3366, %v3361
        %v4477 = vpack.c.b16 %v3372, %v3367
        %v4478 = vpack.c.b16 %v3373, %v3368
        %v4479 = vpack.c.b16 %v3374, %v3369
        %v4480 = vpack.c.b16 %v3375, %v3370
        %v4481 = vpack.c.b16 %v3376, %v3371
        %v4482 = vpack.c.b16 %v3382, %v3377
        %v4483 = vpack.c.b16 %v3383, %v3378
        %v4484 = vpack.c.b16 %v3384, %v3379
        %v4485 = vpack.c.b16 %v3385, %v3380
        %v4486 = vpack.c.b16 %v3386, %v3381
        %v4487 = vpack.c.b16 %v3392, %v3387
        %v4488 = vpack.c.b16 %v3393, %v3388
        %v4489 = vpack.c.b16 %v3394, %v3389
        %v4490 = vpack.c.b16 %v3395, %v3390
        %v4491 = vpack.c.b16 %v3396, %v3391
        %v4492 = vpack.c.b16 %v3402, %v3397
        %v4493 = vpack.c.b16 %v3403, %v3398
        %v4494 = vpack.c.b16 %v3404, %v3399
        %v4495 = vpack.c.b16 %v3405, %v3400
        %v4496 = vpack.c.b16 %v3406, %v3401
        %v4497 = vpack.c.b16 %v3412, %v3407
        %v4498 = vpack.c.b16 %v3413, %v3408
        %v4499 = vpack.c.b16 %v3414, %v3409
        %v4500 = vpack.c.b16 %v3415, %v3410
        %v4501 = vpack.c.b16 %v3416, %v3411
        %v4502 = vpack.c.b16 %v3422, %v3417
        %v4503 = vpack.c.b16 %v3423, %v3418
        %v4504 = vpack.c.b16 %v3424, %v3419
        %v4505 = vpack.c.b16 %v3425, %v3420
        %v4506 = vpack.c.b16 %v3426, %v3421
        %v4507 = vpack.c.b16 %v3432, %v3427
        %v4508 = vpack.c.b16 %v3433, %v3428
        %v4509 = vpack.c.b16 %v3434, %v3429
        %v4510 = vpack.c.b16 %v3435, %v3430
        %v4511 = vpack.c.b16 %v3436, %v3431
        %v4512 = vpack.c.b16 %v3442, %v3437
        %v4513 = vpack.c.b16 %v3443, %v3438
        %v4514 = vpack.c.b16 %v3444, %v3439
        %v4515 = vpack.c.b16 %v3445, %v3440
        %v4516 = vpack.c.b16 %v3446, %v3441
        %v4517 = vpack.c.b16 %v3452, %v3447
        %v4518 = vpack.c.b16 %v3453, %v3448
        %v4519 = vpack.c.b16 %v3454, %v3449
        %v4520 = vpack.c.b16 %v3455, %v3450
        %v4521 = vpack.c.b16 %v3456, %v3451
        %v4522 = vpack.c.b16 %v3462, %v3457
        %v4523 = vpack.c.b16 %v3463, %v3458
        %v4524 = vpack.c.b16 %v3464, %v3459
        %v4525 = vpack.c.b16 %v3465, %v3460
        %v4526 = vpack.c.b16 %v3466, %v3461
        %v4527 = vpack.c.b16 %v3472, %v3467
        %v4528 = vpack.c.b16 %v3473, %v3468
        %v4529 = vpack.c.b16 %v3474, %v3469
        %v4530 = vpack.c.b16 %v3475, %v3470
        %v4531 = vpack.c.b16 %v3476, %v3471
        %v4532 = vpack.c.b16 %v3482, %v3477
        %v4533 = vpack.c.b16 %v3483, %v3478
        %v4534 = vpack.c.b16 %v3484, %v3479
        %v4535 = vpack.c.b16 %v3485, %v3480
        %v4536 = vpack.c.b16 %v3486, %v3481
        %v4537 = vpack.c.b16 %v3492, %v3487
        %v4538 = vpack.c.b16 %v3493, %v3488
        %v4539 = vpack.c.b16 %v3494, %v3489
        %v4540 = vpack.c.b16 %v3495, %v3490
        %v4541 = vpack.c.b16 %v3496, %v3491
        %v4542 = vpack.c.b16 %v3502, %v3497
        %v4543 = vpack.c.b16 %v3503, %v3498
        %v4544 = vpack.c.b16 %v3504, %v3499
        %v4545 = vpack.c.b16 %v3505, %v3500
        %v4546 = vpack.c.b16 %v3506, %v3501
        %v4547 = vpack.c.b16 %v3512, %v3507
        %v4548 = vpack.c.b16 %v3513, %v3508
        %v4549 = vpack.c.b16 %v3514, %v3509
        %v4550 = vpack.c.b16 %v3515, %v3510
        %v4551 = vpack.c.b16 %v3516, %v3511
        %v4552 = vpack.c.b16 %v3522, %v3517
        %v4553 = vpack.c.b16 %v3523, %v3518
        %v4554 = vpack.c.b16 %v3524, %v3519
        %v4555 = vpack.c.b16 %v3525, %v3520
        %v4556 = vpack.c.b16 %v3526, %v3521
        %v4557 = vpack.c.b16 %v3532, %v3527
        %v4558 = vpack.c.b16 %v3533, %v3528
        %v4559 = vpack.c.b16 %v3534, %v3529
        %v4560 = vpack.c.b16 %v3535, %v3530
        %v4561 = vpack.c.b16 %v3536, %v3531
        %v4562 = vpack.c.b16 %v3542, %v3537
        %v4563 = vpack.c.b16 %v3543, %v3538
        %v4564 = vpack.c.b16 %v3544, %v3539
        %v4565 = vpack.c.b16 %v3545, %v3540
        %v4566 = vpack.c.b16 %v3546, %v3541
        %v4567 = vpack.c.b16 %v3552, %v3547
        %v4568 = vpack.c.b16 %v3553, %v3548
        %v4569 = vpack.c.b16 %v3554, %v3549
        %v4570 = vpack.c.b16 %v3555, %v3550
        %v4571 = vpack.c.b16 %v3556, %v3551
        %v4572 = vpack.c.b16 %v3562, %v3557
        %v4573 = vpack.c.b16 %v3563, %v3558
        %v4574 = vpack.c.b16 %v3564, %v3559
        %v4575 = vpack.c.b16 %v3565, %v3560
        %v4576 = vpack.c.b16 %v3566, %v3561
        %v4577 = vpack.c.b16 %v3572, %v3567
        %v4578 = vpack.c.b16 %v3573, %v3568
        %v4579 = vpack.c.b16 %v3574, %v3569
        %v4580 = vpack.c.b16 %v3575, %v3570
        %v4581 = vpack.c.b16 %v3576, %v3571
        %v4582 = vpack.c.b16 %v3582, %v3577
        %v4583 = vpack.c.b16 %v3583, %v3578
        %v4584 = vpack.c.b16 %v3584, %v3579
        %v4585 = vpack.c.b16 %v3585, %v3580
        %v4586 = vpack.c.b16 %v3586, %v3581
        %v4587 = vpack.c.b16 %v3592, %v3587
        %v4588 = vpack.c.b16 %v3593, %v3588
        %v4589 = vpack.c.b16 %v3594, %v3589
        %v4590 = vpack.c.b16 %v3595, %v3590
        %v4591 = vpack.c.b16 %v3596, %v3591
        %v4592 = vpack.c.b16 %v3602, %v3597
        %v4593 = vpack.c.b16 %v3603, %v3598
        %v4594 = vpack.c.b16 %v3604, %v3599
        %v4595 = vpack.c.b16 %v3605, %v3600
        %v4596 = vpack.c.b16 %v3606, %v3601
        %v4597 = vpack.c.b16 %v3612, %v3607
        %v4598 = vpack.c.b16 %v3613, %v3608
        %v4599 = vpack.c.b16 %v3614, %v3609
        %v4600 = vpack.c.b16 %v3615, %v3610
        %v4601 = vpack.c.b16 %v3616, %v3611
        %v4602 = vpack.c.b16 %v3622, %v3617
        %v4603 = vpack.c.b16 %v3623, %v3618
        %v4604 = vpack.c.b16 %v3624, %v3619
        %v4605 = vpack.c.b16 %v3625, %v3620
        %v4606 = vpack.c.b16 %v3626, %v3621
        %v4607 = vpack.c.b16 %v3632, %v3627
        %v4608 = vpack.c.b16 %v3633, %v3628
        %v4609 = vpack.c.b16 %v3634, %v3629
        %v4610 = vpack.c.b16 %v3635, %v3630
        %v4611 = vpack.c.b16 %v3636, %v3631
        %v4612 = vpack.c.b16 %v3642, %v3637
        %v4613 = vpack.c.b16 %v3643, %v3638
        %v4614 = vpack.c.b16 %v3644, %v3639
        %v4615 = vpack.c.b16 %v3645, %v3640
        %v4616 = vpack.c.b16 %v3646, %v3641
        %v4617 = vpack.c.b16 %v3652, %v3647
        %v4618 = vpack.c.b16 %v3653, %v3648
        %v4619 = vpack.c.b16 %v3654, %v3649
        %v4620 = vpack.c.b16 %v3655, %v3650
        %v4621 = vpack.c.b16 %v3656, %v3651
        %v4622 = vpack.c.b16 %v3662, %v3657
        %v4623 = vpack.c.b16 %v3663, %v3658
        %v4624 = vpack.c.b16 %v3664, %v3659
        %v4625 = vpack.c.b16 %v3665, %v3660
        %v4626 = vpack.c.b16 %v3666, %v3661
        %v4627 = vpack.c.b16 %v3672, %v3667
        %v4628 = vpack.c.b16 %v3673, %v3668
        %v4629 = vpack.c.b16 %v3674, %v3669
        %v4630 = vpack.c.b16 %v3675, %v3670
        %v4631 = vpack.c.b16 %v3676, %v3671
        %v4632 = vpack.c.b16 %v3682, %v3677
        %v4633 = vpack.c.b16 %v3683, %v3678
        %v4634 = vpack.c.b16 %v3684, %v3679
        %v4635 = vpack.c.b16 %v3685, %v3680
        %v4636 = vpack.c.b16 %v3686, %v3681
        %v4637 = vpack.c.b16 %v3692, %v3687
        %v4638 = vpack.c.b16 %v3693, %v3688
        %v4639 = vpack.c.b16 %v3694, %v3689
        %v4640 = vpack.c.b16 %v3695, %v3690
        %v4641 = vpack.c.b16 %v3696, %v3691
        %v4642 = vpack.c.b16 %v3702, %v3697
        %v4643 = vpack.c.b16 %v3703, %v3698
        %v4644 = vpack.c.b16 %v3704, %v3699
        %v4645 = vpack.c.b16 %v3705, %v3700
        %v4646 = vpack.c.b16 %v3706, %v3701
        %v4647 = vpack.c.b16 %v3712, %v3707
        %v4648 = vpack.c.b16 %v3713, %v3708
        %v4649 = vpack.c.b16 %v3714, %v3709
        %v4650 = vpack.c.b16 %v3715, %v3710
        %v4651 = vpack.c.b16 %v3716, %v3711
        %v4652 = vpack.c.b16 %v3722, %v3717
        %v4653 = vpack.c.b16 %v3723, %v3718
        %v4654 = vpack.c.b16 %v3724, %v3719
        %v4655 = vpack.c.b16 %v3725, %v3720
        %v4656 = vpack.c.b16 %v3726, %v3721
        %v4657 = vpack.c.b16 %v3732, %v3727
        %v4658 = vpack.c.b16 %v3733, %v3728
        %v4659 = vpack.c.b16 %v3734, %v3729
        %v4660 = vpack.c.b16 %v3735, %v3730
        %v4661 = vpack.c.b16 %v3736, %v3731
        %v4662 = vpack.c.b16 %v3742, %v3737
        %v4663 = vpack.c.b16 %v3743, %v3738
        %v4664 = vpack.c.b16 %v3744, %v3739
        %v4665 = vpack.c.b16 %v3745, %v3740
        %v4666 = vpack.c.b16 %v3746, %v3741
        %v4667 = vpack.c.b16 %v3752, %v3747
        %v4668 = vpack.c.b16 %v3753, %v3748
        %v4669 = vpack.c.b16 %v3754, %v3749
        %v4670 = vpack.c.b16 %v3755, %v3750
        %v4671 = vpack.c.b16 %v3756, %v3751
        %v4672 = vpack.c.b16 %v3762, %v3757
        %v4673 = vpack.c.b16 %v3763, %v3758
        %v4674 = vpack.c.b16 %v3764, %v3759
        %v4675 = vpack.c.b16 %v3765, %v3760
        %v4676 = vpack.c.b16 %v3766, %v3761
        %v4677 = vpack.c.b16 %v3772, %v3767
        %v4678 = vpack.c.b16 %v3773, %v3768
        %v4679 = vpack.c.b16 %v3774, %v3769
        %v4680 = vpack.c.b16 %v3775, %v3770
        %v4681 = vpack.c.b16 %v3776, %v3771
        %v4682 = vpack.c.b16 %v3782, %v3777
        %v4683 = vpack.c.b16 %v3783, %v3778
        %v4684 = vpack.c.b16 %v3784, %v3779
        %v4685 = vpack.c.b16 %v3785, %v3780
        %v4686 = vpack.c.b16 %v3786, %v3781
        %v4687 = vpack.c.b16 %v3792, %v3787
        %v4688 = vpack.c.b16 %v3793, %v3788
        %v4689 = vpack.c.b16 %v3794, %v3789
        %v4690 = vpack.c.b16 %v3795, %v3790
        %v4691 = vpack.c.b16 %v3796, %v3791
        %v4692 = vpack.c.b16 %v3802, %v3797
        %v4693 = vpack.c.b16 %v3803, %v3798
        %v4694 = vpack.c.b16 %v3804, %v3799
        %v4695 = vpack.c.b16 %v3805, %v3800
        %v4696 = vpack.c.b16 %v3806, %v3801
        %v4697 = vpack.c.b16 %v3812, %v3807
        %v4698 = vpack.c.b16 %v3813, %v3808
        %v4699 = vpack.c.b16 %v3814, %v3809
        %v4700 = vpack.c.b16 %v3815, %v3810
        %v4701 = vpack.c.b16 %v3816, %v3811
        %v4702 = vpack.c.b16 %v3822, %v3817
        %v4703 = vpack.c.b16 %v3823, %v3818
        %v4704 = vpack.c.b16 %v3824, %v3819
        %v4705 = vpack.c.b16 %v3825, %v3820
        %v4706 = vpack.c.b16 %v3826, %v3821
        %v4707 = vpack.c.b16 %v3832, %v3827
        %v4708 = vpack.c.b16 %v3833, %v3828
        %v4709 = vpack.c.b16 %v3834, %v3829
        %v4710 = vpack.c.b16 %v3835, %v3830
        %v4711 = vpack.c.b16 %v3836, %v3831
        %v4712 = vpack.c.b16 %v3842, %v3837
        %v4713 = vpack.c.b16 %v3843, %v3838
        %v4714 = vpack.c.b16 %v3844, %v3839
        %v4715 = vpack.c.b16 %v3845, %v3840
        %v4716 = vpack.c.b16 %v3846, %v3841
        %v4717 = vpack.c.b16 %v3852, %v3847
        %v4718 = vpack.c.b16 %v3853, %v3848
        %v4719 = vpack.c.b16 %v3854, %v3849
        %v4720 = vpack.c.b16 %v3855, %v3850
        %v4721 = vpack.c.b16 %v3856, %v3851
        %v4722 = vpack.c.b16 %v3862, %v3857
        %v4723 = vpack.c.b16 %v3863, %v3858
        %v4724 = vpack.c.b16 %v3864, %v3859
        %v4725 = vpack.c.b16 %v3865, %v3860
        %v4726 = vpack.c.b16 %v3866, %v3861
        %v4727 = vpack.c.b16 %v3872, %v3867
        %v4728 = vpack.c.b16 %v3873, %v3868
        %v4729 = vpack.c.b16 %v3874, %v3869
        %v4730 = vpack.c.b16 %v3875, %v3870
        %v4731 = vpack.c.b16 %v3876, %v3871
        %v4732 = vpack.c.b16 %v3882, %v3877
        %v4733 = vpack.c.b16 %v3883, %v3878
        %v4734 = vpack.c.b16 %v3884, %v3879
        %v4735 = vpack.c.b16 %v3885, %v3880
        %v4736 = vpack.c.b16 %v3886, %v3881
        %v4737 = vpack.c.b16 %v3892, %v3887
        %v4738 = vpack.c.b16 %v3893, %v3888
        %v4739 = vpack.c.b16 %v3894, %v3889
        %v4740 = vpack.c.b16 %v3895, %v3890
        %v4741 = vpack.c.b16 %v3896, %v3891
        %v4742 = vpack.c.b16 %v3902, %v3897
        %v4743 = vpack.c.b16 %v3903, %v3898
        %v4744 = vpack.c.b16 %v3904, %v3899
        %v4745 = vpack.c.b16 %v3905, %v3900
        %v4746 = vpack.c.b16 %v3906, %v3901
        %v4747 = vpack.c.b16 %v3912, %v3907
        %v4748 = vpack.c.b16 %v3913, %v3908
        %v4749 = vpack.c.b16 %v3914, %v3909
        %v4750 = vpack.c.b16 %v3915, %v3910
        %v4751 = vpack.c.b16 %v3916, %v3911
        %v4752 = vpack.c.b16 %v3922, %v3917
        %v4753 = vpack.c.b16 %v3923, %v3918
        %v4754 = vpack.c.b16 %v3924, %v3919
        %v4755 = vpack.c.b16 %v3925, %v3920
        %v4756 = vpack.c.b16 %v3926, %v3921
        %v4757 = vpack.c.b16 %v3932, %v3927
        %v4758 = vpack.c.b16 %v3933, %v3928
        %v4759 = vpack.c.b16 %v3934, %v3929
        %v4760 = vpack.c.b16 %v3935, %v3930
        %v4761 = vpack.c.b16 %v3936, %v3931
        %v4762 = vpack.c.b16 %v3942, %v3937
        %v4763 = vpack.c.b16 %v3943, %v3938
        %v4764 = vpack.c.b16 %v3944, %v3939
        %v4765 = vpack.c.b16 %v3945, %v3940
        %v4766 = vpack.c.b16 %v3946, %v3941
        %v4767 = vpack.c.b16 %v3952, %v3947
        %v4768 = vpack.c.b16 %v3953, %v3948
        %v4769 = vpack.c.b16 %v3954, %v3949
        %v4770 = vpack.c.b16 %v3955, %v3950
        %v4771 = vpack.c.b16 %v3956, %v3951
        %v4772 = vpack.c.b16 %v3962, %v3957
        %v4773 = vpack.c.b16 %v3963, %v3958
        %v4774 = vpack.c.b16 %v3964, %v3959
        %v4775 = vpack.c.b16 %v3965, %v3960
        %v4776 = vpack.c.b16 %v3966, %v3961
        %v4777 = vpack.c.b16 %v3972, %v3967
        %v4778 = vpack.c.b16 %v3973, %v3968
        %v4779 = vpack.c.b16 %v3974, %v3969
        %v4780 = vpack.c.b16 %v3975, %v3970
        %v4781 = vpack.c.b16 %v3976, %v3971
        %v4782 = vpack.c.b16 %v3982, %v3977
        %v4783 = vpack.c.b16 %v3983, %v3978
        %v4784 = vpack.c.b16 %v3984, %v3979
        %v4785 = vpack.c.b16 %v3985, %v3980
        %v4786 = vpack.c.b16 %v3986, %v3981
        %5587 = vmatprep.subr.bf16.mxu0 %v4023
        %5588 = vmatpush1.bf16.msra.mxu0 %v4022
        %5589 = vmatprep.subr.bf16.mxu0 %v4018
        %5590 = vmatpush1.bf16.msra.mxu0 %v4017
        %5591 = vmatprep.subr.bf16.mxu0 %v4013
        %5592 = vmatpush1.bf16.msra.mxu0 %v4012
        %5593 = vmatprep.subr.bf16.mxu0 %v4008
        %5594 = vmatpush1.bf16.msra.mxu0 %v4007
        %5595 = vmatprep.subr.bf16.mxu0 %v4003
        %5596 = vmatpush1.bf16.msra.mxu0 %v4002
        %5597 = vmatprep.subr.bf16.mxu0 %v3998
        %5598 = vmatpush1.bf16.msra.mxu0 %v3997
        %5599 = vmatprep.subr.bf16.mxu0 %v3993
        %5600 = vmatpush1.bf16.msra.mxu0 %v3992
        %5601 = vmatprep.subr.bf16.mxu0 %v3988
        %5602 = vmatpush1.bf16.msra.mxu0 %v3987
        %5603 = vmatprep.subr.bf16.mxu0 %v4063
        %5604 = vmatpush2.bf16.msra.mxu0 %v4062
        %5605 = vmatprep.subr.bf16.mxu0 %v4058
        %5606 = vmatpush2.bf16.msra.mxu0 %v4057
        %5607 = vmatprep.subr.bf16.mxu0 %v4053
        %5608 = vmatpush2.bf16.msra.mxu0 %v4052
        %5609 = vmatprep.subr.bf16.mxu0 %v4048
        %5610 = vmatpush2.bf16.msra.mxu0 %v4047
        %5611 = vmatprep.subr.bf16.mxu0 %v4043
        %5612 = vmatpush2.bf16.msra.mxu0 %v4042
        %5613 = vmatprep.subr.bf16.mxu0 %v4038
        %5614 = vmatpush2.bf16.msra.mxu0 %v4037
        %5615 = vmatprep.subr.bf16.mxu0 %v4033
        %5616 = vmatpush2.bf16.msra.mxu0 %v4032
        %5617 = vmatprep.subr.bf16.mxu0 %v4028
        %5618 = vmatpush2.bf16.msra.mxu0 %v4027
        %5619 = vmatprep.mubr.bf16.mxu0 %v1322
        %5620 = vmatmul.mubr.bf16.gmra.mxu0 %v1308
        %v5621 = vpop.f32.mrf.mxu0
        %v5622 = vadd.f32 %v1260, %v5621
        %v5623 = vpop.f32.mrf.mxu0
        %v5624 = vadd.f32 %v1264, %v5623
        %v5625 = vpop.f32.mrf.mxu0
        %v5626 = vpop.f32.mrf.mxu0
        %5627 = vdwg.mxu0
        %5628 = vmatprep.subr.bf16.mxu0 %v4103
        %5629 = vmatpush1.bf16.msra.mxu0 %v4102
        %5630 = vmatprep.subr.bf16.mxu0 %v4098
        %5631 = vmatpush1.bf16.msra.mxu0 %v4097
        %5632 = vmatprep.subr.bf16.mxu0 %v4093
        %5633 = vmatpush1.bf16.msra.mxu0 %v4092
        %5634 = vmatprep.subr.bf16.mxu0 %v4088
        %5635 = vmatpush1.bf16.msra.mxu0 %v4087
        %5636 = vmatprep.subr.bf16.mxu0 %v4083
        %5637 = vmatpush1.bf16.msra.mxu0 %v4082
        %5638 = vmatprep.subr.bf16.mxu0 %v4078
        %5639 = vmatpush1.bf16.msra.mxu0 %v4077
        %5640 = vmatprep.subr.bf16.mxu0 %v4073
        %5641 = vmatpush1.bf16.msra.mxu0 %v4072
        %5642 = vmatprep.subr.bf16.mxu0 %v4068
        %5643 = vmatpush1.bf16.msra.mxu0 %v4067
        %5644 = vmatprep.subr.bf16.mxu0 %v4143
        %5645 = vmatpush2.bf16.msra.mxu0 %v4142
        %5646 = vmatprep.subr.bf16.mxu0 %v4138
        %5647 = vmatpush2.bf16.msra.mxu0 %v4137
        %5648 = vmatprep.subr.bf16.mxu0 %v4133
        %5649 = vmatpush2.bf16.msra.mxu0 %v4132
        %5650 = vmatprep.subr.bf16.mxu0 %v4128
        %5651 = vmatpush2.bf16.msra.mxu0 %v4127
        %5652 = vmatprep.subr.bf16.mxu0 %v4123
        %5653 = vmatpush2.bf16.msra.mxu0 %v4122
        %5654 = vmatprep.subr.bf16.mxu0 %v4118
        %5655 = vmatpush2.bf16.msra.mxu0 %v4117
        %5656 = vmatprep.subr.bf16.mxu0 %v4113
        %5657 = vmatpush2.bf16.msra.mxu0 %v4112
        %5658 = vmatprep.subr.bf16.mxu0 %v4108
        %5659 = vmatpush2.bf16.msra.mxu0 %v4107
        %5660 = vmatprep.mubr.bf16.mxu0 %v1332
        %5661 = vmatmul.mubr.bf16.gmra.mxu0 %v1330
        %v5662 = vpop.f32.mrf.mxu0
        %v5663 = vadd.f32 %v5622, %v5662
        %v5664 = vpop.f32.mrf.mxu0
        %v5665 = vadd.f32 %v5624, %v5664
        %v5666 = vpop.f32.mrf.mxu0
        %v5667 = vpop.f32.mrf.mxu0
        %5668 = vdwg.mxu0
        %5669 = vmatprep.subr.bf16.mxu0 %v4183
        %5670 = vmatpush1.bf16.msra.mxu0 %v4182
        %5671 = vmatprep.subr.bf16.mxu0 %v4178
        %5672 = vmatpush1.bf16.msra.mxu0 %v4177
        %5673 = vmatprep.subr.bf16.mxu0 %v4173
        %5674 = vmatpush1.bf16.msra.mxu0 %v4172
        %5675 = vmatprep.subr.bf16.mxu0 %v4168
        %5676 = vmatpush1.bf16.msra.mxu0 %v4167
        %5677 = vmatprep.subr.bf16.mxu0 %v4163
        %5678 = vmatpush1.bf16.msra.mxu0 %v4162
        %5679 = vmatprep.subr.bf16.mxu0 %v4158
        %5680 = vmatpush1.bf16.msra.mxu0 %v4157
        %5681 = vmatprep.subr.bf16.mxu0 %v4153
        %5682 = vmatpush1.bf16.msra.mxu0 %v4152
        %5683 = vmatprep.subr.bf16.mxu0 %v4148
        %5684 = vmatpush1.bf16.msra.mxu0 %v4147
        %5685 = vmatprep.subr.bf16.mxu0 %v4223
        %5686 = vmatpush2.bf16.msra.mxu0 %v4222
        %5687 = vmatprep.subr.bf16.mxu0 %v4218
        %5688 = vmatpush2.bf16.msra.mxu0 %v4217
        %5689 = vmatprep.subr.bf16.mxu0 %v4213
        %5690 = vmatpush2.bf16.msra.mxu0 %v4212
        %5691 = vmatprep.subr.bf16.mxu0 %v4208
        %5692 = vmatpush2.bf16.msra.mxu0 %v4207
        %5693 = vmatprep.subr.bf16.mxu0 %v4203
        %5694 = vmatpush2.bf16.msra.mxu0 %v4202
        %5695 = vmatprep.subr.bf16.mxu0 %v4198
        %5696 = vmatpush2.bf16.msra.mxu0 %v4197
        %5697 = vmatprep.subr.bf16.mxu0 %v4193
        %5698 = vmatpush2.bf16.msra.mxu0 %v4192
        %5699 = vmatprep.subr.bf16.mxu0 %v4188
        %5700 = vmatpush2.bf16.msra.mxu0 %v4187
        %5701 = vmatprep.mubr.bf16.mxu0 %v1329
        %5702 = vmatmul.mubr.bf16.gmra.mxu0 %v1315
        %v5703 = vpop.f32.mrf.mxu0
        %v5704 = vadd.f32 %v5663, %v5703
        %v5705 = vpop.f32.mrf.mxu0
        %v5706 = vadd.f32 %v5665, %v5705
        %v5707 = vpop.f32.mrf.mxu0
        %v5708 = vpop.f32.mrf.mxu0
        %5709 = vdwg.mxu0
        %5710 = vmatprep.subr.bf16.mxu0 %v4263
        %5711 = vmatpush1.bf16.msra.mxu0 %v4262
        %5712 = vmatprep.subr.bf16.mxu0 %v4258
        %5713 = vmatpush1.bf16.msra.mxu0 %v4257
        %5714 = vmatprep.subr.bf16.mxu0 %v4253
        %5715 = vmatpush1.bf16.msra.mxu0 %v4252
        %5716 = vmatprep.subr.bf16.mxu0 %v4248
        %5717 = vmatpush1.bf16.msra.mxu0 %v4247
        %5718 = vmatprep.subr.bf16.mxu0 %v4243
        %5719 = vmatpush1.bf16.msra.mxu0 %v4242
        %5720 = vmatprep.subr.bf16.mxu0 %v4238
        %5721 = vmatpush1.bf16.msra.mxu0 %v4237
        %5722 = vmatprep.subr.bf16.mxu0 %v4233
        %5723 = vmatpush1.bf16.msra.mxu0 %v4232
        %5724 = vmatprep.subr.bf16.mxu0 %v4228
        %5725 = vmatpush1.bf16.msra.mxu0 %v4227
        %5726 = vmatprep.subr.bf16.mxu0 %v4303
        %5727 = vmatpush2.bf16.msra.mxu0 %v4302
        %5728 = vmatprep.subr.bf16.mxu0 %v4298
        %5729 = vmatpush2.bf16.msra.mxu0 %v4297
        %5730 = vmatprep.subr.bf16.mxu0 %v4293
        %5731 = vmatpush2.bf16.msra.mxu0 %v4292
        %5732 = vmatprep.subr.bf16.mxu0 %v4288
        %5733 = vmatpush2.bf16.msra.mxu0 %v4287
        %5734 = vmatprep.subr.bf16.mxu0 %v4283
        %5735 = vmatpush2.bf16.msra.mxu0 %v4282
        %5736 = vmatprep.subr.bf16.mxu0 %v4278
        %5737 = vmatpush2.bf16.msra.mxu0 %v4277
        %5738 = vmatprep.subr.bf16.mxu0 %v4273
        %5739 = vmatpush2.bf16.msra.mxu0 %v4272
        %5740 = vmatprep.subr.bf16.mxu0 %v4268
        %5741 = vmatpush2.bf16.msra.mxu0 %v4267
        %5742 = vmatprep.mubr.bf16.mxu0 %v1333
        %5743 = vmatmul.mubr.bf16.gmra.mxu0 %v1331
        %v5744 = vpop.f32.mrf.mxu0
        %v5745 = vadd.f32 %v5704, %v5744
        %v5746 = vpop.f32.mrf.mxu0
        %v5747 = vadd.f32 %v5706, %v5746
        %v5748 = vpop.f32.mrf.mxu0
        %v5749 = vpop.f32.mrf.mxu0
        %5750 = vdwg.mxu0
        %5751 = vmatprep.subr.bf16.mxu0 %v4343
        %5752 = vmatpush1.bf16.msra.mxu0 %v4342
        %5753 = vmatprep.subr.bf16.mxu0 %v4338
        %5754 = vmatpush1.bf16.msra.mxu0 %v4337
        %5755 = vmatprep.subr.bf16.mxu0 %v4333
        %5756 = vmatpush1.bf16.msra.mxu0 %v4332
        %5757 = vmatprep.subr.bf16.mxu0 %v4328
        %5758 = vmatpush1.bf16.msra.mxu0 %v4327
        %5759 = vmatprep.subr.bf16.mxu0 %v4323
        %5760 = vmatpush1.bf16.msra.mxu0 %v4322
        %5761 = vmatprep.subr.bf16.mxu0 %v4318
        %5762 = vmatpush1.bf16.msra.mxu0 %v4317
        %5763 = vmatprep.subr.bf16.mxu0 %v4313
        %5764 = vmatpush1.bf16.msra.mxu0 %v4312
        %5765 = vmatprep.subr.bf16.mxu0 %v4308
        %5766 = vmatpush1.bf16.msra.mxu0 %v4307
        %5767 = vmatprep.subr.bf16.mxu0 %v4383
        %5768 = vmatpush2.bf16.msra.mxu0 %v4382
        %5769 = vmatprep.subr.bf16.mxu0 %v4378
        %5770 = vmatpush2.bf16.msra.mxu0 %v4377
        %5771 = vmatprep.subr.bf16.mxu0 %v4373
        %5772 = vmatpush2.bf16.msra.mxu0 %v4372
        %5773 = vmatprep.subr.bf16.mxu0 %v4368
        %5774 = vmatpush2.bf16.msra.mxu0 %v4367
        %5775 = vmatprep.subr.bf16.mxu0 %v4363
        %5776 = vmatpush2.bf16.msra.mxu0 %v4362
        %5777 = vmatprep.subr.bf16.mxu0 %v4358
        %5778 = vmatpush2.bf16.msra.mxu0 %v4357
        %5779 = vmatprep.subr.bf16.mxu0 %v4353
        %5780 = vmatpush2.bf16.msra.mxu0 %v4352
        %5781 = vmatprep.subr.bf16.mxu0 %v4348
        %5782 = vmatpush2.bf16.msra.mxu0 %v4347
        %5783 = vmatprep.mubr.bf16.mxu0 %v1371
        %5784 = vmatmul.mubr.bf16.gmra.mxu0 %v1357
        %v5785 = vpop.f32.mrf.mxu0
        %v5786 = vadd.f32 %v5745, %v5785
        %v5787 = vpop.f32.mrf.mxu0
        %v5788 = vadd.f32 %v5747, %v5787
        %v5789 = vpop.f32.mrf.mxu0
        %v5790 = vpop.f32.mrf.mxu0
        %5791 = vdwg.mxu0
        %5792 = vmatprep.subr.bf16.mxu0 %v4423
        %5793 = vmatpush1.bf16.msra.mxu0 %v4422
        %5794 = vmatprep.subr.bf16.mxu0 %v4418
        %5795 = vmatpush1.bf16.msra.mxu0 %v4417
        %5796 = vmatprep.subr.bf16.mxu0 %v4413
        %5797 = vmatpush1.bf16.msra.mxu0 %v4412
        %5798 = vmatprep.subr.bf16.mxu0 %v4408
        %5799 = vmatpush1.bf16.msra.mxu0 %v4407
        %5800 = vmatprep.subr.bf16.mxu0 %v4403
        %5801 = vmatpush1.bf16.msra.mxu0 %v4402
        %5802 = vmatprep.subr.bf16.mxu0 %v4398
        %5803 = vmatpush1.bf16.msra.mxu0 %v4397
        %5804 = vmatprep.subr.bf16.mxu0 %v4393
        %5805 = vmatpush1.bf16.msra.mxu0 %v4392
        %5806 = vmatprep.subr.bf16.mxu0 %v4388
        %5807 = vmatpush1.bf16.msra.mxu0 %v4387
        %5808 = vmatprep.subr.bf16.mxu0 %v4463
        %5809 = vmatpush2.bf16.msra.mxu0 %v4462
        %5810 = vmatprep.subr.bf16.mxu0 %v4458
        %5811 = vmatpush2.bf16.msra.mxu0 %v4457
        %5812 = vmatprep.subr.bf16.mxu0 %v4453
        %5813 = vmatpush2.bf16.msra.mxu0 %v4452
        %5814 = vmatprep.subr.bf16.mxu0 %v4448
        %5815 = vmatpush2.bf16.msra.mxu0 %v4447
        %5816 = vmatprep.subr.bf16.mxu0 %v4443
        %5817 = vmatpush2.bf16.msra.mxu0 %v4442
        %5818 = vmatprep.subr.bf16.mxu0 %v4438
        %5819 = vmatpush2.bf16.msra.mxu0 %v4437
        %5820 = vmatprep.subr.bf16.mxu0 %v4433
        %5821 = vmatpush2.bf16.msra.mxu0 %v4432
        %5822 = vmatprep.subr.bf16.mxu0 %v4428
        %5823 = vmatpush2.bf16.msra.mxu0 %v4427
        %5824 = vmatprep.mubr.bf16.mxu0 %v1381
        %5825 = vmatmul.mubr.bf16.gmra.mxu0 %v1379
        %v5826 = vpop.f32.mrf.mxu0
        %v5827 = vadd.f32 %v5786, %v5826
        %v5828 = vpop.f32.mrf.mxu0
        %v5829 = vadd.f32 %v5788, %v5828
        %v5830 = vpop.f32.mrf.mxu0
        %v5831 = vpop.f32.mrf.mxu0
        %5832 = vdwg.mxu0
        %5833 = vmatprep.subr.bf16.mxu0 %v4503
        %5834 = vmatpush1.bf16.msra.mxu0 %v4502
        %5835 = vmatprep.subr.bf16.mxu0 %v4498
        %5836 = vmatpush1.bf16.msra.mxu0 %v4497
        %5837 = vmatprep.subr.bf16.mxu0 %v4493
        %5838 = vmatpush1.bf16.msra.mxu0 %v4492
        %5839 = vmatprep.subr.bf16.mxu0 %v4488
        %5840 = vmatpush1.bf16.msra.mxu0 %v4487
        %5841 = vmatprep.subr.bf16.mxu0 %v4483
        %5842 = vmatpush1.bf16.msra.mxu0 %v4482
        %5843 = vmatprep.subr.bf16.mxu0 %v4478
        %5844 = vmatpush1.bf16.msra.mxu0 %v4477
        %5845 = vmatprep.subr.bf16.mxu0 %v4473
        %5846 = vmatpush1.bf16.msra.mxu0 %v4472
        %5847 = vmatprep.subr.bf16.mxu0 %v4468
        %5848 = vmatpush1.bf16.msra.mxu0 %v4467
        %5849 = vmatprep.subr.bf16.mxu0 %v4543
        %5850 = vmatpush2.bf16.msra.mxu0 %v4542
        %5851 = vmatprep.subr.bf16.mxu0 %v4538
        %5852 = vmatpush2.bf16.msra.mxu0 %v4537
        %5853 = vmatprep.subr.bf16.mxu0 %v4533
        %5854 = vmatpush2.bf16.msra.mxu0 %v4532
        %5855 = vmatprep.subr.bf16.mxu0 %v4528
        %5856 = vmatpush2.bf16.msra.mxu0 %v4527
        %5857 = vmatprep.subr.bf16.mxu0 %v4523
        %5858 = vmatpush2.bf16.msra.mxu0 %v4522
        %5859 = vmatprep.subr.bf16.mxu0 %v4518
        %5860 = vmatpush2.bf16.msra.mxu0 %v4517
        %5861 = vmatprep.subr.bf16.mxu0 %v4513
        %5862 = vmatpush2.bf16.msra.mxu0 %v4512
        %5863 = vmatprep.subr.bf16.mxu0 %v4508
        %5864 = vmatpush2.bf16.msra.mxu0 %v4507
        %5865 = vmatprep.mubr.bf16.mxu0 %v1378
        %5866 = vmatmul.mubr.bf16.gmra.mxu0 %v1364
        %v5867 = vpop.f32.mrf.mxu0
        %v5868 = vadd.f32 %v5827, %v5867
        %v5869 = vpop.f32.mrf.mxu0
        %v5870 = vadd.f32 %v5829, %v5869
        %v5871 = vpop.f32.mrf.mxu0
        %v5872 = vpop.f32.mrf.mxu0
        %5873 = vdwg.mxu0
        %5874 = vmatprep.subr.bf16.mxu0 %v4583
        %5875 = vmatpush1.bf16.msra.mxu0 %v4582
        %5876 = vmatprep.subr.bf16.mxu0 %v4578
        %5877 = vmatpush1.bf16.msra.mxu0 %v4577
        %5878 = vmatprep.subr.bf16.mxu0 %v4573
        %5879 = vmatpush1.bf16.msra.mxu0 %v4572
        %5880 = vmatprep.subr.bf16.mxu0 %v4568
        %5881 = vmatpush1.bf16.msra.mxu0 %v4567
        %5882 = vmatprep.subr.bf16.mxu0 %v4563
        %5883 = vmatpush1.bf16.msra.mxu0 %v4562
        %5884 = vmatprep.subr.bf16.mxu0 %v4558
        %5885 = vmatpush1.bf16.msra.mxu0 %v4557
        %5886 = vmatprep.subr.bf16.mxu0 %v4553
        %5887 = vmatpush1.bf16.msra.mxu0 %v4552
        %5888 = vmatprep.subr.bf16.mxu0 %v4548
        %5889 = vmatpush1.bf16.msra.mxu0 %v4547
        %5890 = vmatprep.subr.bf16.mxu0 %v4623
        %5891 = vmatpush2.bf16.msra.mxu0 %v4622
        %5892 = vmatprep.subr.bf16.mxu0 %v4618
        %5893 = vmatpush2.bf16.msra.mxu0 %v4617
        %5894 = vmatprep.subr.bf16.mxu0 %v4613
        %5895 = vmatpush2.bf16.msra.mxu0 %v4612
        %5896 = vmatprep.subr.bf16.mxu0 %v4608
        %5897 = vmatpush2.bf16.msra.mxu0 %v4607
        %5898 = vmatprep.subr.bf16.mxu0 %v4603
        %5899 = vmatpush2.bf16.msra.mxu0 %v4602
        %5900 = vmatprep.subr.bf16.mxu0 %v4598
        %5901 = vmatpush2.bf16.msra.mxu0 %v4597
        %5902 = vmatprep.subr.bf16.mxu0 %v4593
        %5903 = vmatpush2.bf16.msra.mxu0 %v4592
        %5904 = vmatprep.subr.bf16.mxu0 %v4588
        %5905 = vmatpush2.bf16.msra.mxu0 %v4587
        %5906 = vmatprep.mubr.bf16.mxu0 %v1382
        %5907 = vmatmul.mubr.bf16.gmra.mxu0 %v1380
        %v5908 = vpop.f32.mrf.mxu0
        %v5909 = vadd.f32 %v5868, %v5908
        %v5910 = vpop.f32.mrf.mxu0
        %v5911 = vadd.f32 %v5870, %v5910
        %v5912 = vpop.f32.mrf.mxu0
        %v5913 = vpop.f32.mrf.mxu0
        %5914 = vdwg.mxu0
        %5915 = vmatprep.subr.bf16.mxu0 %v4663
        %5916 = vmatpush1.bf16.msra.mxu0 %v4662
        %5917 = vmatprep.subr.bf16.mxu0 %v4658
        %5918 = vmatpush1.bf16.msra.mxu0 %v4657
        %5919 = vmatprep.subr.bf16.mxu0 %v4653
        %5920 = vmatpush1.bf16.msra.mxu0 %v4652
        %5921 = vmatprep.subr.bf16.mxu0 %v4648
        %5922 = vmatpush1.bf16.msra.mxu0 %v4647
        %5923 = vmatprep.subr.bf16.mxu0 %v4643
        %5924 = vmatpush1.bf16.msra.mxu0 %v4642
        %5925 = vmatprep.subr.bf16.mxu0 %v4638
        %5926 = vmatpush1.bf16.msra.mxu0 %v4637
        %5927 = vmatprep.subr.bf16.mxu0 %v4633
        %5928 = vmatpush1.bf16.msra.mxu0 %v4632
        %5929 = vmatprep.subr.bf16.mxu0 %v4628
        %5930 = vmatpush1.bf16.msra.mxu0 %v4627
        %5931 = vmatprep.subr.bf16.mxu0 %v4703
        %5932 = vmatpush2.bf16.msra.mxu0 %v4702
        %5933 = vmatprep.subr.bf16.mxu0 %v4698
        %5934 = vmatpush2.bf16.msra.mxu0 %v4697
        %5935 = vmatprep.subr.bf16.mxu0 %v4693
        %5936 = vmatpush2.bf16.msra.mxu0 %v4692
        %5937 = vmatprep.subr.bf16.mxu0 %v4688
        %5938 = vmatpush2.bf16.msra.mxu0 %v4687
        %5939 = vmatprep.subr.bf16.mxu0 %v4683
        %5940 = vmatpush2.bf16.msra.mxu0 %v4682
        %5941 = vmatprep.subr.bf16.mxu0 %v4678
        %5942 = vmatpush2.bf16.msra.mxu0 %v4677
        %5943 = vmatprep.subr.bf16.mxu0 %v4673
        %5944 = vmatpush2.bf16.msra.mxu0 %v4672
        %5945 = vmatprep.subr.bf16.mxu0 %v4668
        %5946 = vmatpush2.bf16.msra.mxu0 %v4667
        %5947 = vmatprep.mubr.bf16.mxu0 %v1404
        %5948 = vmatmul.mubr.bf16.gmra.mxu0 %v1397
        %v5949 = vpop.f32.mrf.mxu0
        %v5950 = vadd.f32 %v5909, %v5949
        %v5951 = vpop.f32.mrf.mxu0
        %v5952 = vadd.f32 %v5911, %v5951
        %v5953 = vpop.f32.mrf.mxu0
        %v5954 = vpop.f32.mrf.mxu0
        %5955 = vdwg.mxu0
        %5956 = vmatprep.subr.bf16.mxu0 %v4743
        %5957 = vmatpush1.bf16.msra.mxu0 %v4742
        %5958 = vmatprep.subr.bf16.mxu0 %v4738
        %5959 = vmatpush1.bf16.msra.mxu0 %v4737
        %5960 = vmatprep.subr.bf16.mxu0 %v4733
        %5961 = vmatpush1.bf16.msra.mxu0 %v4732
        %5962 = vmatprep.subr.bf16.mxu0 %v4728
        %5963 = vmatpush1.bf16.msra.mxu0 %v4727
        %5964 = vmatprep.subr.bf16.mxu0 %v4723
        %5965 = vmatpush1.bf16.msra.mxu0 %v4722
        %5966 = vmatprep.subr.bf16.mxu0 %v4718
        %5967 = vmatpush1.bf16.msra.mxu0 %v4717
        %5968 = vmatprep.subr.bf16.mxu0 %v4713
        %5969 = vmatpush1.bf16.msra.mxu0 %v4712
        %5970 = vmatprep.subr.bf16.mxu0 %v4708
        %5971 = vmatpush1.bf16.msra.mxu0 %v4707
        %5972 = vmatprep.subr.bf16.mxu0 %v4783
        %5973 = vmatpush2.bf16.msra.mxu0 %v4782
        %5974 = vmatprep.subr.bf16.mxu0 %v4778
        %5975 = vmatpush2.bf16.msra.mxu0 %v4777
        %5976 = vmatprep.subr.bf16.mxu0 %v4773
        %5977 = vmatpush2.bf16.msra.mxu0 %v4772
        %5978 = vmatprep.subr.bf16.mxu0 %v4768
        %5979 = vmatpush2.bf16.msra.mxu0 %v4767
        %5980 = vmatprep.subr.bf16.mxu0 %v4763
        %5981 = vmatpush2.bf16.msra.mxu0 %v4762
        %5982 = vmatprep.subr.bf16.mxu0 %v4758
        %5983 = vmatpush2.bf16.msra.mxu0 %v4757
        %5984 = vmatprep.subr.bf16.mxu0 %v4753
        %5985 = vmatpush2.bf16.msra.mxu0 %v4752
        %5986 = vmatprep.subr.bf16.mxu0 %v4748
        %5987 = vmatpush2.bf16.msra.mxu0 %v4747
        %5988 = vmatprep.mubr.bf16.mxu0 %v1406
        %5989 = vmatmul.mubr.bf16.gmra.mxu0 %v1405
        %v5990 = vpop.f32.mrf.mxu0
        %v5991 = vadd.f32 %v5950, %v5990
        %v5992 = vpop.f32.mrf.mxu0
        %v5993 = vadd.f32 %v5952, %v5992
        %v5994 = vpop.f32.mrf.mxu0
        %v5995 = vpop.f32.mrf.mxu0
        %5996 = vdwg.mxu0
        %5997 = vmatprep.subr.bf16.mxu0 %v4025
        %5998 = vmatpush1.bf16.msra.mxu0 %v4024
        %5999 = vmatprep.subr.bf16.mxu0 %v4020
        %6000 = vmatpush1.bf16.msra.mxu0 %v4019
        %6001 = vmatprep.subr.bf16.mxu0 %v4015
        %6002 = vmatpush1.bf16.msra.mxu0 %v4014
        %6003 = vmatprep.subr.bf16.mxu0 %v4010
        %6004 = vmatpush1.bf16.msra.mxu0 %v4009
        %6005 = vmatprep.subr.bf16.mxu0 %v4005
        %6006 = vmatpush1.bf16.msra.mxu0 %v4004
        %6007 = vmatprep.subr.bf16.mxu0 %v4000
        %6008 = vmatpush1.bf16.msra.mxu0 %v3999
        %6009 = vmatprep.subr.bf16.mxu0 %v3995
        %6010 = vmatpush1.bf16.msra.mxu0 %v3994
        %6011 = vmatprep.subr.bf16.mxu0 %v3990
        %6012 = vmatpush1.bf16.msra.mxu0 %v3989
        %6013 = vmatprep.subr.bf16.mxu0 %v4065
        %6014 = vmatpush2.bf16.msra.mxu0 %v4064
        %6015 = vmatprep.subr.bf16.mxu0 %v4060
        %6016 = vmatpush2.bf16.msra.mxu0 %v4059
        %6017 = vmatprep.subr.bf16.mxu0 %v4055
        %6018 = vmatpush2.bf16.msra.mxu0 %v4054
        %6019 = vmatprep.subr.bf16.mxu0 %v4050
        %6020 = vmatpush2.bf16.msra.mxu0 %v4049
        %6021 = vmatprep.subr.bf16.mxu0 %v4045
        %6022 = vmatpush2.bf16.msra.mxu0 %v4044
        %6023 = vmatprep.subr.bf16.mxu0 %v4040
        %6024 = vmatpush2.bf16.msra.mxu0 %v4039
        %6025 = vmatprep.subr.bf16.mxu0 %v4035
        %6026 = vmatpush2.bf16.msra.mxu0 %v4034
        %6027 = vmatprep.subr.bf16.mxu0 %v4030
        %6028 = vmatpush2.bf16.msra.mxu0 %v4029
        %6029 = vmatprep.mubr.bf16.mxu0 %v1322
        %6030 = vmatmul.mubr.bf16.gmra.mxu0 %v1308
        %v6031 = vpop.f32.mrf.mxu0
        %v6032 = vadd.f32 %v1268, %v6031
        %v6033 = vpop.f32.mrf.mxu0
        %v6034 = vadd.f32 %v1272, %v6033
        %v6035 = vpop.f32.mrf.mxu0
        %v6036 = vpop.f32.mrf.mxu0
        %6037 = vdwg.mxu0
        %6038 = vmatprep.subr.bf16.mxu0 %v4105
        %6039 = vmatpush1.bf16.msra.mxu0 %v4104
        %6040 = vmatprep.subr.bf16.mxu0 %v4100
        %6041 = vmatpush1.bf16.msra.mxu0 %v4099
        %6042 = vmatprep.subr.bf16.mxu0 %v4095
        %6043 = vmatpush1.bf16.msra.mxu0 %v4094
        %6044 = vmatprep.subr.bf16.mxu0 %v4090
        %6045 = vmatpush1.bf16.msra.mxu0 %v4089
        %6046 = vmatprep.subr.bf16.mxu0 %v4085
        %6047 = vmatpush1.bf16.msra.mxu0 %v4084
        %6048 = vmatprep.subr.bf16.mxu0 %v4080
        %6049 = vmatpush1.bf16.msra.mxu0 %v4079
        %6050 = vmatprep.subr.bf16.mxu0 %v4075
        %6051 = vmatpush1.bf16.msra.mxu0 %v4074
        %6052 = vmatprep.subr.bf16.mxu0 %v4070
        %6053 = vmatpush1.bf16.msra.mxu0 %v4069
        %6054 = vmatprep.subr.bf16.mxu0 %v4145
        %6055 = vmatpush2.bf16.msra.mxu0 %v4144
        %6056 = vmatprep.subr.bf16.mxu0 %v4140
        %6057 = vmatpush2.bf16.msra.mxu0 %v4139
        %6058 = vmatprep.subr.bf16.mxu0 %v4135
        %6059 = vmatpush2.bf16.msra.mxu0 %v4134
        %6060 = vmatprep.subr.bf16.mxu0 %v4130
        %6061 = vmatpush2.bf16.msra.mxu0 %v4129
        %6062 = vmatprep.subr.bf16.mxu0 %v4125
        %6063 = vmatpush2.bf16.msra.mxu0 %v4124
        %6064 = vmatprep.subr.bf16.mxu0 %v4120
        %6065 = vmatpush2.bf16.msra.mxu0 %v4119
        %6066 = vmatprep.subr.bf16.mxu0 %v4115
        %6067 = vmatpush2.bf16.msra.mxu0 %v4114
        %6068 = vmatprep.subr.bf16.mxu0 %v4110
        %6069 = vmatpush2.bf16.msra.mxu0 %v4109
        %6070 = vmatprep.mubr.bf16.mxu0 %v1332
        %6071 = vmatmul.mubr.bf16.gmra.mxu0 %v1330
        %v6072 = vpop.f32.mrf.mxu0
        %v6073 = vadd.f32 %v6032, %v6072
        %v6074 = vpop.f32.mrf.mxu0
        %v6075 = vadd.f32 %v6034, %v6074
        %v6076 = vpop.f32.mrf.mxu0
        %v6077 = vpop.f32.mrf.mxu0
        %6078 = vdwg.mxu0
        %6079 = vmatprep.subr.bf16.mxu0 %v4185
        %6080 = vmatpush1.bf16.msra.mxu0 %v4184
        %6081 = vmatprep.subr.bf16.mxu0 %v4180
        %6082 = vmatpush1.bf16.msra.mxu0 %v4179
        %6083 = vmatprep.subr.bf16.mxu0 %v4175
        %6084 = vmatpush1.bf16.msra.mxu0 %v4174
        %6085 = vmatprep.subr.bf16.mxu0 %v4170
        %6086 = vmatpush1.bf16.msra.mxu0 %v4169
        %6087 = vmatprep.subr.bf16.mxu0 %v4165
        %6088 = vmatpush1.bf16.msra.mxu0 %v4164
        %6089 = vmatprep.subr.bf16.mxu0 %v4160
        %6090 = vmatpush1.bf16.msra.mxu0 %v4159
        %6091 = vmatprep.subr.bf16.mxu0 %v4155
        %6092 = vmatpush1.bf16.msra.mxu0 %v4154
        %6093 = vmatprep.subr.bf16.mxu0 %v4150
        %6094 = vmatpush1.bf16.msra.mxu0 %v4149
        %6095 = vmatprep.subr.bf16.mxu0 %v4225
        %6096 = vmatpush2.bf16.msra.mxu0 %v4224
        %6097 = vmatprep.subr.bf16.mxu0 %v4220
        %6098 = vmatpush2.bf16.msra.mxu0 %v4219
        %6099 = vmatprep.subr.bf16.mxu0 %v4215
        %6100 = vmatpush2.bf16.msra.mxu0 %v4214
        %6101 = vmatprep.subr.bf16.mxu0 %v4210
        %6102 = vmatpush2.bf16.msra.mxu0 %v4209
        %6103 = vmatprep.subr.bf16.mxu0 %v4205
        %6104 = vmatpush2.bf16.msra.mxu0 %v4204
        %6105 = vmatprep.subr.bf16.mxu0 %v4200
        %6106 = vmatpush2.bf16.msra.mxu0 %v4199
        %6107 = vmatprep.subr.bf16.mxu0 %v4195
        %6108 = vmatpush2.bf16.msra.mxu0 %v4194
        %6109 = vmatprep.subr.bf16.mxu0 %v4190
        %6110 = vmatpush2.bf16.msra.mxu0 %v4189
        %6111 = vmatprep.mubr.bf16.mxu0 %v1329
        %6112 = vmatmul.mubr.bf16.gmra.mxu0 %v1315
        %v6113 = vpop.f32.mrf.mxu0
        %v6114 = vadd.f32 %v6073, %v6113
        %v6115 = vpop.f32.mrf.mxu0
        %v6116 = vadd.f32 %v6075, %v6115
        %v6117 = vpop.f32.mrf.mxu0
        %v6118 = vpop.f32.mrf.mxu0
        %6119 = vdwg.mxu0
        %6120 = vmatprep.subr.bf16.mxu0 %v4265
        %6121 = vmatpush1.bf16.msra.mxu0 %v4264
        %6122 = vmatprep.subr.bf16.mxu0 %v4260
        %6123 = vmatpush1.bf16.msra.mxu0 %v4259
        %6124 = vmatprep.subr.bf16.mxu0 %v4255
        %6125 = vmatpush1.bf16.msra.mxu0 %v4254
        %6126 = vmatprep.subr.bf16.mxu0 %v4250
        %6127 = vmatpush1.bf16.msra.mxu0 %v4249
        %6128 = vmatprep.subr.bf16.mxu0 %v4245
        %6129 = vmatpush1.bf16.msra.mxu0 %v4244
        %6130 = vmatprep.subr.bf16.mxu0 %v4240
        %6131 = vmatpush1.bf16.msra.mxu0 %v4239
        %6132 = vmatprep.subr.bf16.mxu0 %v4235
        %6133 = vmatpush1.bf16.msra.mxu0 %v4234
        %6134 = vmatprep.subr.bf16.mxu0 %v4230
        %6135 = vmatpush1.bf16.msra.mxu0 %v4229
        %6136 = vmatprep.subr.bf16.mxu0 %v4305
        %6137 = vmatpush2.bf16.msra.mxu0 %v4304
        %6138 = vmatprep.subr.bf16.mxu0 %v4300
        %6139 = vmatpush2.bf16.msra.mxu0 %v4299
        %6140 = vmatprep.subr.bf16.mxu0 %v4295
        %6141 = vmatpush2.bf16.msra.mxu0 %v4294
        %6142 = vmatprep.subr.bf16.mxu0 %v4290
        %6143 = vmatpush2.bf16.msra.mxu0 %v4289
        %6144 = vmatprep.subr.bf16.mxu0 %v4285
        %6145 = vmatpush2.bf16.msra.mxu0 %v4284
        %6146 = vmatprep.subr.bf16.mxu0 %v4280
        %6147 = vmatpush2.bf16.msra.mxu0 %v4279
        %6148 = vmatprep.subr.bf16.mxu0 %v4275
        %6149 = vmatpush2.bf16.msra.mxu0 %v4274
        %6150 = vmatprep.subr.bf16.mxu0 %v4270
        %6151 = vmatpush2.bf16.msra.mxu0 %v4269
        %6152 = vmatprep.mubr.bf16.mxu0 %v1333
        %6153 = vmatmul.mubr.bf16.gmra.mxu0 %v1331
        %v6154 = vpop.f32.mrf.mxu0
        %v6155 = vadd.f32 %v6114, %v6154
        %v6156 = vpop.f32.mrf.mxu0
        %v6157 = vadd.f32 %v6116, %v6156
        %v6158 = vpop.f32.mrf.mxu0
        %v6159 = vpop.f32.mrf.mxu0
        %6160 = vdwg.mxu0
        %6161 = vmatprep.subr.bf16.mxu0 %v4345
        %6162 = vmatpush1.bf16.msra.mxu0 %v4344
        %6163 = vmatprep.subr.bf16.mxu0 %v4340
        %6164 = vmatpush1.bf16.msra.mxu0 %v4339
        %6165 = vmatprep.subr.bf16.mxu0 %v4335
        %6166 = vmatpush1.bf16.msra.mxu0 %v4334
        %6167 = vmatprep.subr.bf16.mxu0 %v4330
        %6168 = vmatpush1.bf16.msra.mxu0 %v4329
        %6169 = vmatprep.subr.bf16.mxu0 %v4325
        %6170 = vmatpush1.bf16.msra.mxu0 %v4324
        %6171 = vmatprep.subr.bf16.mxu0 %v4320
        %6172 = vmatpush1.bf16.msra.mxu0 %v4319
        %6173 = vmatprep.subr.bf16.mxu0 %v4315
        %6174 = vmatpush1.bf16.msra.mxu0 %v4314
        %6175 = vmatprep.subr.bf16.mxu0 %v4310
        %6176 = vmatpush1.bf16.msra.mxu0 %v4309
        %6177 = vmatprep.subr.bf16.mxu0 %v4385
        %6178 = vmatpush2.bf16.msra.mxu0 %v4384
        %6179 = vmatprep.subr.bf16.mxu0 %v4380
        %6180 = vmatpush2.bf16.msra.mxu0 %v4379
        %6181 = vmatprep.subr.bf16.mxu0 %v4375
        %6182 = vmatpush2.bf16.msra.mxu0 %v4374
        %6183 = vmatprep.subr.bf16.mxu0 %v4370
        %6184 = vmatpush2.bf16.msra.mxu0 %v4369
        %6185 = vmatprep.subr.bf16.mxu0 %v4365
        %6186 = vmatpush2.bf16.msra.mxu0 %v4364
        %6187 = vmatprep.subr.bf16.mxu0 %v4360
        %6188 = vmatpush2.bf16.msra.mxu0 %v4359
        %6189 = vmatprep.subr.bf16.mxu0 %v4355
        %6190 = vmatpush2.bf16.msra.mxu0 %v4354
        %6191 = vmatprep.subr.bf16.mxu0 %v4350
        %6192 = vmatpush2.bf16.msra.mxu0 %v4349
        %6193 = vmatprep.mubr.bf16.mxu0 %v1371
        %6194 = vmatmul.mubr.bf16.gmra.mxu0 %v1357
        %v6195 = vpop.f32.mrf.mxu0
        %v6196 = vadd.f32 %v6155, %v6195
        %v6197 = vpop.f32.mrf.mxu0
        %v6198 = vadd.f32 %v6157, %v6197
        %v6199 = vpop.f32.mrf.mxu0
        %v6200 = vpop.f32.mrf.mxu0
        %6201 = vdwg.mxu0
        %6202 = vmatprep.subr.bf16.mxu0 %v4425
        %6203 = vmatpush1.bf16.msra.mxu0 %v4424
        %6204 = vmatprep.subr.bf16.mxu0 %v4420
        %6205 = vmatpush1.bf16.msra.mxu0 %v4419
        %6206 = vmatprep.subr.bf16.mxu0 %v4415
        %6207 = vmatpush1.bf16.msra.mxu0 %v4414
        %6208 = vmatprep.subr.bf16.mxu0 %v4410
        %6209 = vmatpush1.bf16.msra.mxu0 %v4409
        %6210 = vmatprep.subr.bf16.mxu0 %v4405
        %6211 = vmatpush1.bf16.msra.mxu0 %v4404
        %6212 = vmatprep.subr.bf16.mxu0 %v4400
        %6213 = vmatpush1.bf16.msra.mxu0 %v4399
        %6214 = vmatprep.subr.bf16.mxu0 %v4395
        %6215 = vmatpush1.bf16.msra.mxu0 %v4394
        %6216 = vmatprep.subr.bf16.mxu0 %v4390
        %6217 = vmatpush1.bf16.msra.mxu0 %v4389
        %6218 = vmatprep.subr.bf16.mxu0 %v4465
        %6219 = vmatpush2.bf16.msra.mxu0 %v4464
        %6220 = vmatprep.subr.bf16.mxu0 %v4460
        %6221 = vmatpush2.bf16.msra.mxu0 %v4459
        %6222 = vmatprep.subr.bf16.mxu0 %v4455
        %6223 = vmatpush2.bf16.msra.mxu0 %v4454
        %6224 = vmatprep.subr.bf16.mxu0 %v4450
        %6225 = vmatpush2.bf16.msra.mxu0 %v4449
        %6226 = vmatprep.subr.bf16.mxu0 %v4445
        %6227 = vmatpush2.bf16.msra.mxu0 %v4444
        %6228 = vmatprep.subr.bf16.mxu0 %v4440
        %6229 = vmatpush2.bf16.msra.mxu0 %v4439
        %6230 = vmatprep.subr.bf16.mxu0 %v4435
        %6231 = vmatpush2.bf16.msra.mxu0 %v4434
        %6232 = vmatprep.subr.bf16.mxu0 %v4430
        %6233 = vmatpush2.bf16.msra.mxu0 %v4429
        %6234 = vmatprep.mubr.bf16.mxu0 %v1381
        %6235 = vmatmul.mubr.bf16.gmra.mxu0 %v1379
        %v6236 = vpop.f32.mrf.mxu0
        %v6237 = vadd.f32 %v6196, %v6236
        %v6238 = vpop.f32.mrf.mxu0
        %v6239 = vadd.f32 %v6198, %v6238
        %v6240 = vpop.f32.mrf.mxu0
        %v6241 = vpop.f32.mrf.mxu0
        %6242 = vdwg.mxu0
        %6243 = vmatprep.subr.bf16.mxu0 %v4505
        %6244 = vmatpush1.bf16.msra.mxu0 %v4504
        %6245 = vmatprep.subr.bf16.mxu0 %v4500
        %6246 = vmatpush1.bf16.msra.mxu0 %v4499
        %6247 = vmatprep.subr.bf16.mxu0 %v4495
        %6248 = vmatpush1.bf16.msra.mxu0 %v4494
        %6249 = vmatprep.subr.bf16.mxu0 %v4490
        %6250 = vmatpush1.bf16.msra.mxu0 %v4489
        %6251 = vmatprep.subr.bf16.mxu0 %v4485
        %6252 = vmatpush1.bf16.msra.mxu0 %v4484
        %6253 = vmatprep.subr.bf16.mxu0 %v4480
        %6254 = vmatpush1.bf16.msra.mxu0 %v4479
        %6255 = vmatprep.subr.bf16.mxu0 %v4475
        %6256 = vmatpush1.bf16.msra.mxu0 %v4474
        %6257 = vmatprep.subr.bf16.mxu0 %v4470
        %6258 = vmatpush1.bf16.msra.mxu0 %v4469
        %6259 = vmatprep.subr.bf16.mxu0 %v4545
        %6260 = vmatpush2.bf16.msra.mxu0 %v4544
        %6261 = vmatprep.subr.bf16.mxu0 %v4540
        %6262 = vmatpush2.bf16.msra.mxu0 %v4539
        %6263 = vmatprep.subr.bf16.mxu0 %v4535
        %6264 = vmatpush2.bf16.msra.mxu0 %v4534
        %6265 = vmatprep.subr.bf16.mxu0 %v4530
        %6266 = vmatpush2.bf16.msra.mxu0 %v4529
        %6267 = vmatprep.subr.bf16.mxu0 %v4525
        %6268 = vmatpush2.bf16.msra.mxu0 %v4524
        %6269 = vmatprep.subr.bf16.mxu0 %v4520
        %6270 = vmatpush2.bf16.msra.mxu0 %v4519
        %6271 = vmatprep.subr.bf16.mxu0 %v4515
        %6272 = vmatpush2.bf16.msra.mxu0 %v4514
        %6273 = vmatprep.subr.bf16.mxu0 %v4510
        %6274 = vmatpush2.bf16.msra.mxu0 %v4509
        %6275 = vmatprep.mubr.bf16.mxu0 %v1378
        %6276 = vmatmul.mubr.bf16.gmra.mxu0 %v1364
        %v6277 = vpop.f32.mrf.mxu0
        %v6278 = vadd.f32 %v6237, %v6277
        %v6279 = vpop.f32.mrf.mxu0
        %v6280 = vadd.f32 %v6239, %v6279
        %v6281 = vpop.f32.mrf.mxu0
        %v6282 = vpop.f32.mrf.mxu0
        %6283 = vdwg.mxu0
        %6284 = vmatprep.subr.bf16.mxu0 %v4585
        %6285 = vmatpush1.bf16.msra.mxu0 %v4584
        %6286 = vmatprep.subr.bf16.mxu0 %v4580
        %6287 = vmatpush1.bf16.msra.mxu0 %v4579
        %6288 = vmatprep.subr.bf16.mxu0 %v4575
        %6289 = vmatpush1.bf16.msra.mxu0 %v4574
        %6290 = vmatprep.subr.bf16.mxu0 %v4570
        %6291 = vmatpush1.bf16.msra.mxu0 %v4569
        %6292 = vmatprep.subr.bf16.mxu0 %v4565
        %6293 = vmatpush1.bf16.msra.mxu0 %v4564
        %6294 = vmatprep.subr.bf16.mxu0 %v4560
        %6295 = vmatpush1.bf16.msra.mxu0 %v4559
        %6296 = vmatprep.subr.bf16.mxu0 %v4555
        %6297 = vmatpush1.bf16.msra.mxu0 %v4554
        %6298 = vmatprep.subr.bf16.mxu0 %v4550
        %6299 = vmatpush1.bf16.msra.mxu0 %v4549
        %6300 = vmatprep.subr.bf16.mxu0 %v4625
        %6301 = vmatpush2.bf16.msra.mxu0 %v4624
        %6302 = vmatprep.subr.bf16.mxu0 %v4620
        %6303 = vmatpush2.bf16.msra.mxu0 %v4619
        %6304 = vmatprep.subr.bf16.mxu0 %v4615
        %6305 = vmatpush2.bf16.msra.mxu0 %v4614
        %6306 = vmatprep.subr.bf16.mxu0 %v4610
        %6307 = vmatpush2.bf16.msra.mxu0 %v4609
        %6308 = vmatprep.subr.bf16.mxu0 %v4605
        %6309 = vmatpush2.bf16.msra.mxu0 %v4604
        %6310 = vmatprep.subr.bf16.mxu0 %v4600
        %6311 = vmatpush2.bf16.msra.mxu0 %v4599
        %6312 = vmatprep.subr.bf16.mxu0 %v4595
        %6313 = vmatpush2.bf16.msra.mxu0 %v4594
        %6314 = vmatprep.subr.bf16.mxu0 %v4590
        %6315 = vmatpush2.bf16.msra.mxu0 %v4589
        %6316 = vmatprep.mubr.bf16.mxu0 %v1382
        %6317 = vmatmul.mubr.bf16.gmra.mxu0 %v1380
        %v6318 = vpop.f32.mrf.mxu0
        %v6319 = vadd.f32 %v6278, %v6318
        %v6320 = vpop.f32.mrf.mxu0
        %v6321 = vadd.f32 %v6280, %v6320
        %v6322 = vpop.f32.mrf.mxu0
        %v6323 = vpop.f32.mrf.mxu0
        %6324 = vdwg.mxu0
        %6325 = vmatprep.subr.bf16.mxu0 %v4665
        %6326 = vmatpush1.bf16.msra.mxu0 %v4664
        %6327 = vmatprep.subr.bf16.mxu0 %v4660
        %6328 = vmatpush1.bf16.msra.mxu0 %v4659
        %6329 = vmatprep.subr.bf16.mxu0 %v4655
        %6330 = vmatpush1.bf16.msra.mxu0 %v4654
        %6331 = vmatprep.subr.bf16.mxu0 %v4650
        %6332 = vmatpush1.bf16.msra.mxu0 %v4649
        %6333 = vmatprep.subr.bf16.mxu0 %v4645
        %6334 = vmatpush1.bf16.msra.mxu0 %v4644
        %6335 = vmatprep.subr.bf16.mxu0 %v4640
        %6336 = vmatpush1.bf16.msra.mxu0 %v4639
        %6337 = vmatprep.subr.bf16.mxu0 %v4635
        %6338 = vmatpush1.bf16.msra.mxu0 %v4634
        %6339 = vmatprep.subr.bf16.mxu0 %v4630
        %6340 = vmatpush1.bf16.msra.mxu0 %v4629
        %6341 = vmatprep.subr.bf16.mxu0 %v4705
        %6342 = vmatpush2.bf16.msra.mxu0 %v4704
        %6343 = vmatprep.subr.bf16.mxu0 %v4700
        %6344 = vmatpush2.bf16.msra.mxu0 %v4699
        %6345 = vmatprep.subr.bf16.mxu0 %v4695
        %6346 = vmatpush2.bf16.msra.mxu0 %v4694
        %6347 = vmatprep.subr.bf16.mxu0 %v4690
        %6348 = vmatpush2.bf16.msra.mxu0 %v4689
        %6349 = vmatprep.subr.bf16.mxu0 %v4685
        %6350 = vmatpush2.bf16.msra.mxu0 %v4684
        %6351 = vmatprep.subr.bf16.mxu0 %v4680
        %6352 = vmatpush2.bf16.msra.mxu0 %v4679
        %6353 = vmatprep.subr.bf16.mxu0 %v4675
        %6354 = vmatpush2.bf16.msra.mxu0 %v4674
        %6355 = vmatprep.subr.bf16.mxu0 %v4670
        %6356 = vmatpush2.bf16.msra.mxu0 %v4669
        %6357 = vmatprep.mubr.bf16.mxu0 %v1404
        %6358 = vmatmul.mubr.bf16.gmra.mxu0 %v1397
        %v6359 = vpop.f32.mrf.mxu0
        %v6360 = vadd.f32 %v6319, %v6359
        %v6361 = vpop.f32.mrf.mxu0
        %v6362 = vadd.f32 %v6321, %v6361
        %v6363 = vpop.f32.mrf.mxu0
        %v6364 = vpop.f32.mrf.mxu0
        %6365 = vdwg.mxu0
        %6366 = vmatprep.subr.bf16.mxu0 %v4745
        %6367 = vmatpush1.bf16.msra.mxu0 %v4744
        %6368 = vmatprep.subr.bf16.mxu0 %v4740
        %6369 = vmatpush1.bf16.msra.mxu0 %v4739
        %6370 = vmatprep.subr.bf16.mxu0 %v4735
        %6371 = vmatpush1.bf16.msra.mxu0 %v4734
        %6372 = vmatprep.subr.bf16.mxu0 %v4730
        %6373 = vmatpush1.bf16.msra.mxu0 %v4729
        %6374 = vmatprep.subr.bf16.mxu0 %v4725
        %6375 = vmatpush1.bf16.msra.mxu0 %v4724
        %6376 = vmatprep.subr.bf16.mxu0 %v4720
        %6377 = vmatpush1.bf16.msra.mxu0 %v4719
        %6378 = vmatprep.subr.bf16.mxu0 %v4715
        %6379 = vmatpush1.bf16.msra.mxu0 %v4714
        %6380 = vmatprep.subr.bf16.mxu0 %v4710
        %6381 = vmatpush1.bf16.msra.mxu0 %v4709
        %6382 = vmatprep.subr.bf16.mxu0 %v4785
        %6383 = vmatpush2.bf16.msra.mxu0 %v4784
        %6384 = vmatprep.subr.bf16.mxu0 %v4780
        %6385 = vmatpush2.bf16.msra.mxu0 %v4779
        %6386 = vmatprep.subr.bf16.mxu0 %v4775
        %6387 = vmatpush2.bf16.msra.mxu0 %v4774
        %6388 = vmatprep.subr.bf16.mxu0 %v4770
        %6389 = vmatpush2.bf16.msra.mxu0 %v4769
        %6390 = vmatprep.subr.bf16.mxu0 %v4765
        %6391 = vmatpush2.bf16.msra.mxu0 %v4764
        %6392 = vmatprep.subr.bf16.mxu0 %v4760
        %6393 = vmatpush2.bf16.msra.mxu0 %v4759
        %6394 = vmatprep.subr.bf16.mxu0 %v4755
        %6395 = vmatpush2.bf16.msra.mxu0 %v4754
        %6396 = vmatprep.subr.bf16.mxu0 %v4750
        %6397 = vmatpush2.bf16.msra.mxu0 %v4749
        %6398 = vmatprep.mubr.bf16.mxu0 %v1406
        %6399 = vmatmul.mubr.bf16.gmra.mxu0 %v1405
        %v6400 = vpop.f32.mrf.mxu0
        %v6401 = vadd.f32 %v6360, %v6400
        %v6402 = vpop.f32.mrf.mxu0
        %v6403 = vadd.f32 %v6362, %v6402
        %v6404 = vpop.f32.mrf.mxu0
        %v6405 = vpop.f32.mrf.mxu0
        %6406 = vdwg.mxu0
        %6407 = vmatprep.subr.bf16.mxu0 0
        %6408 = vmatpush1.bf16.msra.mxu0 %v4026
        %6409 = vmatprep.subr.bf16.mxu0 0
        %6410 = vmatpush1.bf16.msra.mxu0 %v4021
        %6411 = vmatprep.subr.bf16.mxu0 0
        %6412 = vmatpush1.bf16.msra.mxu0 %v4016
        %6413 = vmatprep.subr.bf16.mxu0 0
        %6414 = vmatpush1.bf16.msra.mxu0 %v4011
        %6415 = vmatprep.subr.bf16.mxu0 0
        %6416 = vmatpush1.bf16.msra.mxu0 %v4006
        %6417 = vmatprep.subr.bf16.mxu0 0
        %6418 = vmatpush1.bf16.msra.mxu0 %v4001
        %6419 = vmatprep.subr.bf16.mxu0 0
        %6420 = vmatpush1.bf16.msra.mxu0 %v3996
        %6421 = vmatprep.subr.bf16.mxu0 0
        %6422 = vmatpush1.bf16.msra.mxu0 %v3991
        %6423 = vmatprep.subr.bf16.mxu0 0
        %6424 = vmatpush2.bf16.msra.mxu0 %v4066
        %6425 = vmatprep.subr.bf16.mxu0 0
        %6426 = vmatpush2.bf16.msra.mxu0 %v4061
        %6427 = vmatprep.subr.bf16.mxu0 0
        %6428 = vmatpush2.bf16.msra.mxu0 %v4056
        %6429 = vmatprep.subr.bf16.mxu0 0
        %6430 = vmatpush2.bf16.msra.mxu0 %v4051
        %6431 = vmatprep.subr.bf16.mxu0 0
        %6432 = vmatpush2.bf16.msra.mxu0 %v4046
        %6433 = vmatprep.subr.bf16.mxu0 0
        %6434 = vmatpush2.bf16.msra.mxu0 %v4041
        %6435 = vmatprep.subr.bf16.mxu0 0
        %6436 = vmatpush2.bf16.msra.mxu0 %v4036
        %6437 = vmatprep.subr.bf16.mxu0 0
        %6438 = vmatpush2.bf16.msra.mxu0 %v4031
        %6439 = vmatprep.mubr.bf16.mxu0 %v1322
        %6440 = vmatmul.mubr.bf16.gmra.mxu0 %v1308
        %v6441 = vpop.f32.mrf.mxu0
        %v6442 = vadd.f32 %v1276, %v6441
        %v6443 = vpop.f32.mrf.mxu0
        %v6444 = vpop.f32.mrf.mxu0
        %v6445 = vpop.f32.mrf.mxu0
        %6446 = vdwg.mxu0
        %6447 = vmatprep.subr.bf16.mxu0 0
        %6448 = vmatpush1.bf16.msra.mxu0 %v4106
        %6449 = vmatprep.subr.bf16.mxu0 0
        %6450 = vmatpush1.bf16.msra.mxu0 %v4101
        %6451 = vmatprep.subr.bf16.mxu0 0
        %6452 = vmatpush1.bf16.msra.mxu0 %v4096
        %6453 = vmatprep.subr.bf16.mxu0 0
        %6454 = vmatpush1.bf16.msra.mxu0 %v4091
        %6455 = vmatprep.subr.bf16.mxu0 0
        %6456 = vmatpush1.bf16.msra.mxu0 %v4086
        %6457 = vmatprep.subr.bf16.mxu0 0
        %6458 = vmatpush1.bf16.msra.mxu0 %v4081
        %6459 = vmatprep.subr.bf16.mxu0 0
        %6460 = vmatpush1.bf16.msra.mxu0 %v4076
        %6461 = vmatprep.subr.bf16.mxu0 0
        %6462 = vmatpush1.bf16.msra.mxu0 %v4071
        %6463 = vmatprep.subr.bf16.mxu0 0
        %6464 = vmatpush2.bf16.msra.mxu0 %v4146
        %6465 = vmatprep.subr.bf16.mxu0 0
        %6466 = vmatpush2.bf16.msra.mxu0 %v4141
        %6467 = vmatprep.subr.bf16.mxu0 0
        %6468 = vmatpush2.bf16.msra.mxu0 %v4136
        %6469 = vmatprep.subr.bf16.mxu0 0
        %6470 = vmatpush2.bf16.msra.mxu0 %v4131
        %6471 = vmatprep.subr.bf16.mxu0 0
        %6472 = vmatpush2.bf16.msra.mxu0 %v4126
        %6473 = vmatprep.subr.bf16.mxu0 0
        %6474 = vmatpush2.bf16.msra.mxu0 %v4121
        %6475 = vmatprep.subr.bf16.mxu0 0
        %6476 = vmatpush2.bf16.msra.mxu0 %v4116
        %6477 = vmatprep.subr.bf16.mxu0 0
        %6478 = vmatpush2.bf16.msra.mxu0 %v4111
        %6479 = vmatprep.mubr.bf16.mxu0 %v1332
        %6480 = vmatmul.mubr.bf16.gmra.mxu0 %v1330
        %v6481 = vpop.f32.mrf.mxu0
        %v6482 = vadd.f32 %v6442, %v6481
        %v6483 = vpop.f32.mrf.mxu0
        %v6484 = vpop.f32.mrf.mxu0
        %v6485 = vpop.f32.mrf.mxu0
        %6486 = vdwg.mxu0
        %6487 = vmatprep.subr.bf16.mxu0 0
        %6488 = vmatpush1.bf16.msra.mxu0 %v4186
        %6489 = vmatprep.subr.bf16.mxu0 0
        %6490 = vmatpush1.bf16.msra.mxu0 %v4181
        %6491 = vmatprep.subr.bf16.mxu0 0
        %6492 = vmatpush1.bf16.msra.mxu0 %v4176
        %6493 = vmatprep.subr.bf16.mxu0 0
        %6494 = vmatpush1.bf16.msra.mxu0 %v4171
        %6495 = vmatprep.subr.bf16.mxu0 0
        %6496 = vmatpush1.bf16.msra.mxu0 %v4166
        %6497 = vmatprep.subr.bf16.mxu0 0
        %6498 = vmatpush1.bf16.msra.mxu0 %v4161
        %6499 = vmatprep.subr.bf16.mxu0 0
        %6500 = vmatpush1.bf16.msra.mxu0 %v4156
        %6501 = vmatprep.subr.bf16.mxu0 0
        %6502 = vmatpush1.bf16.msra.mxu0 %v4151
        %6503 = vmatprep.subr.bf16.mxu0 0
        %6504 = vmatpush2.bf16.msra.mxu0 %v4226
        %6505 = vmatprep.subr.bf16.mxu0 0
        %6506 = vmatpush2.bf16.msra.mxu0 %v4221
        %6507 = vmatprep.subr.bf16.mxu0 0
        %6508 = vmatpush2.bf16.msra.mxu0 %v4216
        %6509 = vmatprep.subr.bf16.mxu0 0
        %6510 = vmatpush2.bf16.msra.mxu0 %v4211
        %6511 = vmatprep.subr.bf16.mxu0 0
        %6512 = vmatpush2.bf16.msra.mxu0 %v4206
        %6513 = vmatprep.subr.bf16.mxu0 0
        %6514 = vmatpush2.bf16.msra.mxu0 %v4201
        %6515 = vmatprep.subr.bf16.mxu0 0
        %6516 = vmatpush2.bf16.msra.mxu0 %v4196
        %6517 = vmatprep.subr.bf16.mxu0 0
        %6518 = vmatpush2.bf16.msra.mxu0 %v4191
        %6519 = vmatprep.mubr.bf16.mxu0 %v1329
        %6520 = vmatmul.mubr.bf16.gmra.mxu0 %v1315
        %v6521 = vpop.f32.mrf.mxu0
        %v6522 = vadd.f32 %v6482, %v6521
        %v6523 = vpop.f32.mrf.mxu0
        %v6524 = vpop.f32.mrf.mxu0
        %v6525 = vpop.f32.mrf.mxu0
        %6526 = vdwg.mxu0
        %6527 = vmatprep.subr.bf16.mxu0 0
        %6528 = vmatpush1.bf16.msra.mxu0 %v4266
        %6529 = vmatprep.subr.bf16.mxu0 0
        %6530 = vmatpush1.bf16.msra.mxu0 %v4261
        %6531 = vmatprep.subr.bf16.mxu0 0
        %6532 = vmatpush1.bf16.msra.mxu0 %v4256
        %6533 = vmatprep.subr.bf16.mxu0 0
        %6534 = vmatpush1.bf16.msra.mxu0 %v4251
        %6535 = vmatprep.subr.bf16.mxu0 0
        %6536 = vmatpush1.bf16.msra.mxu0 %v4246
        %6537 = vmatprep.subr.bf16.mxu0 0
        %6538 = vmatpush1.bf16.msra.mxu0 %v4241
        %6539 = vmatprep.subr.bf16.mxu0 0
        %6540 = vmatpush1.bf16.msra.mxu0 %v4236
        %6541 = vmatprep.subr.bf16.mxu0 0
        %6542 = vmatpush1.bf16.msra.mxu0 %v4231
        %6543 = vmatprep.subr.bf16.mxu0 0
        %6544 = vmatpush2.bf16.msra.mxu0 %v4306
        %6545 = vmatprep.subr.bf16.mxu0 0
        %6546 = vmatpush2.bf16.msra.mxu0 %v4301
        %6547 = vmatprep.subr.bf16.mxu0 0
        %6548 = vmatpush2.bf16.msra.mxu0 %v4296
        %6549 = vmatprep.subr.bf16.mxu0 0
        %6550 = vmatpush2.bf16.msra.mxu0 %v4291
        %6551 = vmatprep.subr.bf16.mxu0 0
        %6552 = vmatpush2.bf16.msra.mxu0 %v4286
        %6553 = vmatprep.subr.bf16.mxu0 0
        %6554 = vmatpush2.bf16.msra.mxu0 %v4281
        %6555 = vmatprep.subr.bf16.mxu0 0
        %6556 = vmatpush2.bf16.msra.mxu0 %v4276
        %6557 = vmatprep.subr.bf16.mxu0 0
        %6558 = vmatpush2.bf16.msra.mxu0 %v4271
        %6559 = vmatprep.mubr.bf16.mxu0 %v1333
        %6560 = vmatmul.mubr.bf16.gmra.mxu0 %v1331
        %v6561 = vpop.f32.mrf.mxu0
        %v6562 = vadd.f32 %v6522, %v6561
        %v6563 = vpop.f32.mrf.mxu0
        %v6564 = vpop.f32.mrf.mxu0
        %v6565 = vpop.f32.mrf.mxu0
        %6566 = vdwg.mxu0
        %6567 = vmatprep.subr.bf16.mxu0 0
        %6568 = vmatpush1.bf16.msra.mxu0 %v4346
        %6569 = vmatprep.subr.bf16.mxu0 0
        %6570 = vmatpush1.bf16.msra.mxu0 %v4341
        %6571 = vmatprep.subr.bf16.mxu0 0
        %6572 = vmatpush1.bf16.msra.mxu0 %v4336
        %6573 = vmatprep.subr.bf16.mxu0 0
        %6574 = vmatpush1.bf16.msra.mxu0 %v4331
        %6575 = vmatprep.subr.bf16.mxu0 0
        %6576 = vmatpush1.bf16.msra.mxu0 %v4326
        %6577 = vmatprep.subr.bf16.mxu0 0
        %6578 = vmatpush1.bf16.msra.mxu0 %v4321
        %6579 = vmatprep.subr.bf16.mxu0 0
        %6580 = vmatpush1.bf16.msra.mxu0 %v4316
        %6581 = vmatprep.subr.bf16.mxu0 0
        %6582 = vmatpush1.bf16.msra.mxu0 %v4311
        %6583 = vmatprep.subr.bf16.mxu0 0
        %6584 = vmatpush2.bf16.msra.mxu0 %v4386
        %6585 = vmatprep.subr.bf16.mxu0 0
        %6586 = vmatpush2.bf16.msra.mxu0 %v4381
        %6587 = vmatprep.subr.bf16.mxu0 0
        %6588 = vmatpush2.bf16.msra.mxu0 %v4376
        %6589 = vmatprep.subr.bf16.mxu0 0
        %6590 = vmatpush2.bf16.msra.mxu0 %v4371
        %6591 = vmatprep.subr.bf16.mxu0 0
        %6592 = vmatpush2.bf16.msra.mxu0 %v4366
        %6593 = vmatprep.subr.bf16.mxu0 0
        %6594 = vmatpush2.bf16.msra.mxu0 %v4361
        %6595 = vmatprep.subr.bf16.mxu0 0
        %6596 = vmatpush2.bf16.msra.mxu0 %v4356
        %6597 = vmatprep.subr.bf16.mxu0 0
        %6598 = vmatpush2.bf16.msra.mxu0 %v4351
        %6599 = vmatprep.mubr.bf16.mxu0 %v1371
        %6600 = vmatmul.mubr.bf16.gmra.mxu0 %v1357
        %v6601 = vpop.f32.mrf.mxu0
        %v6602 = vadd.f32 %v6562, %v6601
        %v6603 = vpop.f32.mrf.mxu0
        %v6604 = vpop.f32.mrf.mxu0
        %v6605 = vpop.f32.mrf.mxu0
        %6606 = vdwg.mxu0
        %6607 = vmatprep.subr.bf16.mxu0 0
        %6608 = vmatpush1.bf16.msra.mxu0 %v4426
        %6609 = vmatprep.subr.bf16.mxu0 0
        %6610 = vmatpush1.bf16.msra.mxu0 %v4421
        %6611 = vmatprep.subr.bf16.mxu0 0
        %6612 = vmatpush1.bf16.msra.mxu0 %v4416
        %6613 = vmatprep.subr.bf16.mxu0 0
        %6614 = vmatpush1.bf16.msra.mxu0 %v4411
        %6615 = vmatprep.subr.bf16.mxu0 0
        %6616 = vmatpush1.bf16.msra.mxu0 %v4406
        %6617 = vmatprep.subr.bf16.mxu0 0
        %6618 = vmatpush1.bf16.msra.mxu0 %v4401
        %6619 = vmatprep.subr.bf16.mxu0 0
        %6620 = vmatpush1.bf16.msra.mxu0 %v4396
        %6621 = vmatprep.subr.bf16.mxu0 0
        %6622 = vmatpush1.bf16.msra.mxu0 %v4391
        %6623 = vmatprep.subr.bf16.mxu0 0
        %6624 = vmatpush2.bf16.msra.mxu0 %v4466
        %6625 = vmatprep.subr.bf16.mxu0 0
        %6626 = vmatpush2.bf16.msra.mxu0 %v4461
        %6627 = vmatprep.subr.bf16.mxu0 0
        %6628 = vmatpush2.bf16.msra.mxu0 %v4456
        %6629 = vmatprep.subr.bf16.mxu0 0
        %6630 = vmatpush2.bf16.msra.mxu0 %v4451
        %6631 = vmatprep.subr.bf16.mxu0 0
        %6632 = vmatpush2.bf16.msra.mxu0 %v4446
        %6633 = vmatprep.subr.bf16.mxu0 0
        %6634 = vmatpush2.bf16.msra.mxu0 %v4441
        %6635 = vmatprep.subr.bf16.mxu0 0
        %6636 = vmatpush2.bf16.msra.mxu0 %v4436
        %6637 = vmatprep.subr.bf16.mxu0 0
        %6638 = vmatpush2.bf16.msra.mxu0 %v4431
        %6639 = vmatprep.mubr.bf16.mxu0 %v1381
        %6640 = vmatmul.mubr.bf16.gmra.mxu0 %v1379
        %v6641 = vpop.f32.mrf.mxu0
        %v6642 = vadd.f32 %v6602, %v6641
        %v6643 = vpop.f32.mrf.mxu0
        %v6644 = vpop.f32.mrf.mxu0
        %v6645 = vpop.f32.mrf.mxu0
        %6646 = vdwg.mxu0
        %6647 = vmatprep.subr.bf16.mxu0 0
        %6648 = vmatpush1.bf16.msra.mxu0 %v4506
        %6649 = vmatprep.subr.bf16.mxu0 0
        %6650 = vmatpush1.bf16.msra.mxu0 %v4501
        %6651 = vmatprep.subr.bf16.mxu0 0
        %6652 = vmatpush1.bf16.msra.mxu0 %v4496
        %6653 = vmatprep.subr.bf16.mxu0 0
        %6654 = vmatpush1.bf16.msra.mxu0 %v4491
        %6655 = vmatprep.subr.bf16.mxu0 0
        %6656 = vmatpush1.bf16.msra.mxu0 %v4486
        %6657 = vmatprep.subr.bf16.mxu0 0
        %6658 = vmatpush1.bf16.msra.mxu0 %v4481
        %6659 = vmatprep.subr.bf16.mxu0 0
        %6660 = vmatpush1.bf16.msra.mxu0 %v4476
        %6661 = vmatprep.subr.bf16.mxu0 0
        %6662 = vmatpush1.bf16.msra.mxu0 %v4471
        %6663 = vmatprep.subr.bf16.mxu0 0
        %6664 = vmatpush2.bf16.msra.mxu0 %v4546
        %6665 = vmatprep.subr.bf16.mxu0 0
        %6666 = vmatpush2.bf16.msra.mxu0 %v4541
        %6667 = vmatprep.subr.bf16.mxu0 0
        %6668 = vmatpush2.bf16.msra.mxu0 %v4536
        %6669 = vmatprep.subr.bf16.mxu0 0
        %6670 = vmatpush2.bf16.msra.mxu0 %v4531
        %6671 = vmatprep.subr.bf16.mxu0 0
        %6672 = vmatpush2.bf16.msra.mxu0 %v4526
        %6673 = vmatprep.subr.bf16.mxu0 0
        %6674 = vmatpush2.bf16.msra.mxu0 %v4521
        %6675 = vmatprep.subr.bf16.mxu0 0
        %6676 = vmatpush2.bf16.msra.mxu0 %v4516
        %6677 = vmatprep.subr.bf16.mxu0 0
        %6678 = vmatpush2.bf16.msra.mxu0 %v4511
        %6679 = vmatprep.mubr.bf16.mxu0 %v1378
        %6680 = vmatmul.mubr.bf16.gmra.mxu0 %v1364
        %v6681 = vpop.f32.mrf.mxu0
        %v6682 = vadd.f32 %v6642, %v6681
        %v6683 = vpop.f32.mrf.mxu0
        %v6684 = vpop.f32.mrf.mxu0
        %v6685 = vpop.f32.mrf.mxu0
        %6686 = vdwg.mxu0
        %6687 = vmatprep.subr.bf16.mxu0 0
        %6688 = vmatpush1.bf16.msra.mxu0 %v4586
        %6689 = vmatprep.subr.bf16.mxu0 0
        %6690 = vmatpush1.bf16.msra.mxu0 %v4581
        %6691 = vmatprep.subr.bf16.mxu0 0
        %6692 = vmatpush1.bf16.msra.mxu0 %v4576
        %6693 = vmatprep.subr.bf16.mxu0 0
        %6694 = vmatpush1.bf16.msra.mxu0 %v4571
        %6695 = vmatprep.subr.bf16.mxu0 0
        %6696 = vmatpush1.bf16.msra.mxu0 %v4566
        %6697 = vmatprep.subr.bf16.mxu0 0
        %6698 = vmatpush1.bf16.msra.mxu0 %v4561
        %6699 = vmatprep.subr.bf16.mxu0 0
        %6700 = vmatpush1.bf16.msra.mxu0 %v4556
        %6701 = vmatprep.subr.bf16.mxu0 0
        %6702 = vmatpush1.bf16.msra.mxu0 %v4551
        %6703 = vmatprep.subr.bf16.mxu0 0
        %6704 = vmatpush2.bf16.msra.mxu0 %v4626
        %6705 = vmatprep.subr.bf16.mxu0 0
        %6706 = vmatpush2.bf16.msra.mxu0 %v4621
        %6707 = vmatprep.subr.bf16.mxu0 0
        %6708 = vmatpush2.bf16.msra.mxu0 %v4616
        %6709 = vmatprep.subr.bf16.mxu0 0
        %6710 = vmatpush2.bf16.msra.mxu0 %v4611
        %6711 = vmatprep.subr.bf16.mxu0 0
        %6712 = vmatpush2.bf16.msra.mxu0 %v4606
        %6713 = vmatprep.subr.bf16.mxu0 0
        %6714 = vmatpush2.bf16.msra.mxu0 %v4601
        %6715 = vmatprep.subr.bf16.mxu0 0
        %6716 = vmatpush2.bf16.msra.mxu0 %v4596
        %6717 = vmatprep.subr.bf16.mxu0 0
        %6718 = vmatpush2.bf16.msra.mxu0 %v4591
        %6719 = vmatprep.mubr.bf16.mxu0 %v1382
        %6720 = vmatmul.mubr.bf16.gmra.mxu0 %v1380
        %v6721 = vpop.f32.mrf.mxu0
        %v6722 = vadd.f32 %v6682, %v6721
        %v6723 = vpop.f32.mrf.mxu0
        %v6724 = vpop.f32.mrf.mxu0
        %v6725 = vpop.f32.mrf.mxu0
        %6726 = vdwg.mxu0
        %6727 = vmatprep.subr.bf16.mxu0 0
        %6728 = vmatpush1.bf16.msra.mxu0 %v4666
        %6729 = vmatprep.subr.bf16.mxu0 0
        %6730 = vmatpush1.bf16.msra.mxu0 %v4661
        %6731 = vmatprep.subr.bf16.mxu0 0
        %6732 = vmatpush1.bf16.msra.mxu0 %v4656
        %6733 = vmatprep.subr.bf16.mxu0 0
        %6734 = vmatpush1.bf16.msra.mxu0 %v4651
        %6735 = vmatprep.subr.bf16.mxu0 0
        %6736 = vmatpush1.bf16.msra.mxu0 %v4646
        %6737 = vmatprep.subr.bf16.mxu0 0
        %6738 = vmatpush1.bf16.msra.mxu0 %v4641
        %6739 = vmatprep.subr.bf16.mxu0 0
        %6740 = vmatpush1.bf16.msra.mxu0 %v4636
        %6741 = vmatprep.subr.bf16.mxu0 0
        %6742 = vmatpush1.bf16.msra.mxu0 %v4631
        %6743 = vmatprep.subr.bf16.mxu0 0
        %6744 = vmatpush2.bf16.msra.mxu0 %v4706
        %6745 = vmatprep.subr.bf16.mxu0 0
        %6746 = vmatpush2.bf16.msra.mxu0 %v4701
        %6747 = vmatprep.subr.bf16.mxu0 0
        %6748 = vmatpush2.bf16.msra.mxu0 %v4696
        %6749 = vmatprep.subr.bf16.mxu0 0
        %6750 = vmatpush2.bf16.msra.mxu0 %v4691
        %6751 = vmatprep.subr.bf16.mxu0 0
        %6752 = vmatpush2.bf16.msra.mxu0 %v4686
        %6753 = vmatprep.subr.bf16.mxu0 0
        %6754 = vmatpush2.bf16.msra.mxu0 %v4681
        %6755 = vmatprep.subr.bf16.mxu0 0
        %6756 = vmatpush2.bf16.msra.mxu0 %v4676
        %6757 = vmatprep.subr.bf16.mxu0 0
        %6758 = vmatpush2.bf16.msra.mxu0 %v4671
        %6759 = vmatprep.mubr.bf16.mxu0 %v1404
        %6760 = vmatmul.mubr.bf16.gmra.mxu0 %v1397
        %v6761 = vpop.f32.mrf.mxu0
        %v6762 = vadd.f32 %v6722, %v6761
        %v6763 = vpop.f32.mrf.mxu0
        %v6764 = vpop.f32.mrf.mxu0
        %v6765 = vpop.f32.mrf.mxu0
        %6766 = vdwg.mxu0
        %6767 = vmatprep.subr.bf16.mxu0 0
        %6768 = vmatpush1.bf16.msra.mxu0 %v4746
        %6769 = vmatprep.subr.bf16.mxu0 0
        %6770 = vmatpush1.bf16.msra.mxu0 %v4741
        %6771 = vmatprep.subr.bf16.mxu0 0
        %6772 = vmatpush1.bf16.msra.mxu0 %v4736
        %6773 = vmatprep.subr.bf16.mxu0 0
        %6774 = vmatpush1.bf16.msra.mxu0 %v4731
        %6775 = vmatprep.subr.bf16.mxu0 0
        %6776 = vmatpush1.bf16.msra.mxu0 %v4726
        %6777 = vmatprep.subr.bf16.mxu0 0
        %6778 = vmatpush1.bf16.msra.mxu0 %v4721
        %6779 = vmatprep.subr.bf16.mxu0 0
        %6780 = vmatpush1.bf16.msra.mxu0 %v4716
        %6781 = vmatprep.subr.bf16.mxu0 0
        %6782 = vmatpush1.bf16.msra.mxu0 %v4711
        %6783 = vmatprep.subr.bf16.mxu0 0
        %6784 = vmatpush2.bf16.msra.mxu0 %v4786
        %6785 = vmatprep.subr.bf16.mxu0 0
        %6786 = vmatpush2.bf16.msra.mxu0 %v4781
        %6787 = vmatprep.subr.bf16.mxu0 0
        %6788 = vmatpush2.bf16.msra.mxu0 %v4776
        %6789 = vmatprep.subr.bf16.mxu0 0
        %6790 = vmatpush2.bf16.msra.mxu0 %v4771
        %6791 = vmatprep.subr.bf16.mxu0 0
        %6792 = vmatpush2.bf16.msra.mxu0 %v4766
        %6793 = vmatprep.subr.bf16.mxu0 0
        %6794 = vmatpush2.bf16.msra.mxu0 %v4761
        %6795 = vmatprep.subr.bf16.mxu0 0
        %6796 = vmatpush2.bf16.msra.mxu0 %v4756
        %6797 = vmatprep.subr.bf16.mxu0 0
        %6798 = vmatpush2.bf16.msra.mxu0 %v4751
        %6799 = vmatprep.mubr.bf16.mxu0 %v1406
        %6800 = vmatmul.mubr.bf16.gmra.mxu0 %v1405
        %v6801 = vpop.f32.mrf.mxu0
        %v6802 = vadd.f32 %v6762, %v6801
        %v6803 = vpop.f32.mrf.mxu0
        %v6804 = vpop.f32.mrf.mxu0
        %v6805 = vpop.f32.mrf.mxu0
        %6806 = vdwg.mxu0
        %v6807 = vmax.f32 %v5991, 0.0
        %v6808 = vmax.f32 %v5993, 0.0
        %v6809 = vmax.f32 %v6401, 0.0
        %v6810 = vmax.f32 %v6403, 0.0
        %v6811 = vmax.f32 %v6802, 0.0
        %v6812 = vpack.c.bf16 %v6807, %v6807
        %v6813 = vpack.c.bf16 %v6808, %v6808
        %v6814 = vpack.c.bf16 %v6809, %v6809
        %v6815 = vpack.c.bf16 %v6810, %v6810
        %v6816 = vpack.c.bf16 %v6811, %v6811
        %v6817 = vld [vmem:[%s253] sm:$0xf]
        %v6818 = vld [vmem:[%s253 + $0x4] sm:$0xf]
        %v6819 = vld [vmem:[%s253 + $0x8] sm:$0xf]
        %v6820 = vld [vmem:[%s253 + $0xc] sm:$0xf]
        %v6821 = vld [vmem:[%s253 + $0x10] sm:$0xf]
        %v6822 = vld [vmem:[%s253 + $0x14] sm:$0xf]
        %v6823 = vld [vmem:[%s253 + $0x18] sm:$0xf]
        %v6824 = vld [vmem:[%s253 + $0x1c] sm:$0xf]
        %v6825 = vld [vmem:[%s253 + $0x20] sm:$0xf]
        %v6826 = vld [vmem:[%s253 + $0x24] sm:$0xf]
        %v6827 = vld [vmem:[%s253 + $0x28] sm:$0xf]
        %v6828 = vld [vmem:[%s253 + $0x2c] sm:$0xf]
        %v6829 = vld [vmem:[%s253 + $0x30] sm:$0xf]
        %v6830 = vld [vmem:[%s253 + $0x34] sm:$0xf]
        %v6831 = vld [vmem:[%s253 + $0x38] sm:$0xf]
        %v6832 = vld [vmem:[%s253 + $0x3c] sm:$0xf]
        %v6833 = vld [vmem:[%s253 + $0x40] sm:$0xf]
        %v6834 = vld [vmem:[%s253 + $0x44] sm:$0xf]
        %v6835 = vld [vmem:[%s253 + $0x48] sm:$0xf]
        %v6836 = vld [vmem:[%s253 + $0x4c] sm:$0xf]
        %v6837 = vld [vmem:[%s253 + $0x50] sm:$0xf]
        %v6838 = vld [vmem:[%s253 + $0x54] sm:$0xf]
        %v6839 = vld [vmem:[%s253 + $0x58] sm:$0xf]
        %v6840 = vld [vmem:[%s253 + $0x5c] sm:$0xf]
        %v6841 = vld [vmem:[%s253 + $0x60] sm:$0xf]
        %v6842 = vld [vmem:[%s253 + $0x64] sm:$0xf]
        %v6843 = vld [vmem:[%s253 + $0x68] sm:$0xf]
        %v6844 = vld [vmem:[%s253 + $0x6c] sm:$0xf]
        %v6845 = vld [vmem:[%s253 + $0x70] sm:$0xf]
        %v6846 = vld [vmem:[%s253 + $0x74] sm:$0xf]
        %v6847 = vld [vmem:[%s253 + $0x78] sm:$0xf]
        %v6848 = vld [vmem:[%s253 + $0x7c] sm:$0xf]
        %v6849 = vld [vmem:[%s253 + $0x80] sm:$0xf]
        %v6850 = vld [vmem:[%s253 + $0x84] sm:$0xf]
        %v6851 = vld [vmem:[%s253 + $0x88] sm:$0xf]
        %v6852 = vld [vmem:[%s253 + $0x8c] sm:$0xf]
        %v6853 = vld [vmem:[%s253 + $0x90] sm:$0xf]
        %v6854 = vld [vmem:[%s253 + $0x94] sm:$0xf]
        %v6855 = vld [vmem:[%s253 + $0x98] sm:$0xf]
        %v6856 = vld [vmem:[%s253 + $0x9c] sm:$0xf]
        %v6857 = vld [vmem:[%s253 + $0xa0] sm:$0xf]
        %v6858 = vld [vmem:[%s253 + $0xa4] sm:$0xf]
        %v6859 = vld [vmem:[%s253 + $0xa8] sm:$0xf]
        %v6860 = vld [vmem:[%s253 + $0xac] sm:$0xf]
        %v6861 = vld [vmem:[%s253 + $0xb0] sm:$0xf]
        %v6862 = vld [vmem:[%s253 + $0xb4] sm:$0xf]
        %v6863 = vld [vmem:[%s253 + $0xb8] sm:$0xf]
        %v6864 = vld [vmem:[%s253 + $0xbc] sm:$0xf]
        %v6865 = vld [vmem:[%s253 + $0xc0] sm:$0xf]
        %v6866 = vld [vmem:[%s253 + $0xc4] sm:$0xf]
        %v6867 = vld [vmem:[%s253 + $0xc8] sm:$0xf]
        %v6868 = vld [vmem:[%s253 + $0xcc] sm:$0xf]
        %v6869 = vld [vmem:[%s253 + $0xd0] sm:$0xf]
        %v6870 = vld [vmem:[%s253 + $0xd4] sm:$0xf]
        %v6871 = vld [vmem:[%s253 + $0xd8] sm:$0xf]
        %v6872 = vld [vmem:[%s253 + $0xdc] sm:$0xf]
        %v6873 = vld [vmem:[%s253 + $0xe0] sm:$0xf]
        %v6874 = vld [vmem:[%s253 + $0xe4] sm:$0xf]
        %v6875 = vld [vmem:[%s253 + $0xe8] sm:$0xf]
        %v6876 = vld [vmem:[%s253 + $0xec] sm:$0xf]
        %v6877 = vld [vmem:[%s253 + $0xf0] sm:$0xf]
        %v6878 = vld [vmem:[%s253 + $0xf4] sm:$0xf]
        %v6879 = vld [vmem:[%s253 + $0xf8] sm:$0xf]
        %v6880 = vld [vmem:[%s253 + $0xfc] sm:$0xf]
        %v6881 = vld [vmem:[%s253 + $0x100] sm:$0xf]
        %v6882 = vld [vmem:[%s253 + $0x104] sm:$0xf]
        %v6883 = vld [vmem:[%s253 + $0x108] sm:$0xf]
        %v6884 = vld [vmem:[%s253 + $0x10c] sm:$0xf]
        %v6885 = vld [vmem:[%s253 + $0x110] sm:$0xf]
        %v6886 = vld [vmem:[%s253 + $0x114] sm:$0xf]
        %v6887 = vld [vmem:[%s253 + $0x118] sm:$0xf]
        %v6888 = vld [vmem:[%s253 + $0x11c] sm:$0xf]
        %v6889 = vld [vmem:[%s253 + $0x120] sm:$0xf]
        %v6890 = vld [vmem:[%s253 + $0x124] sm:$0xf]
        %v6891 = vld [vmem:[%s253 + $0x128] sm:$0xf]
        %v6892 = vld [vmem:[%s253 + $0x12c] sm:$0xf]
        %v6893 = vld [vmem:[%s253 + $0x130] sm:$0xf]
        %v6894 = vld [vmem:[%s253 + $0x134] sm:$0xf]
        %v6895 = vld [vmem:[%s253 + $0x138] sm:$0xf]
        %v6896 = vld [vmem:[%s253 + $0x13c] sm:$0xf]
        %v6977 = vunpack.c.l.b16 %v6817
        %v6978 = vunpack.c.l.b16 %v6818
        %v6979 = vunpack.c.l.b16 %v6819
        %v6980 = vunpack.c.l.b16 %v6820
        %v6981 = vunpack.c.l.b16 %v6821
        %v6982 = vunpack.c.l.b16 %v6822
        %v6983 = vunpack.c.l.b16 %v6823
        %v6984 = vunpack.c.l.b16 %v6824
        %v6985 = vunpack.c.l.b16 %v6825
        %v6986 = vunpack.c.l.b16 %v6826
        %v6987 = vunpack.c.l.b16 %v6827
        %v6988 = vunpack.c.l.b16 %v6828
        %v6989 = vunpack.c.l.b16 %v6829
        %v6990 = vunpack.c.l.b16 %v6830
        %v6991 = vunpack.c.l.b16 %v6831
        %v6992 = vunpack.c.l.b16 %v6832
        %v6993 = vunpack.c.l.b16 %v6833
        %v6994 = vunpack.c.l.b16 %v6834
        %v6995 = vunpack.c.l.b16 %v6835
        %v6996 = vunpack.c.l.b16 %v6836
        %v6997 = vunpack.c.l.b16 %v6837
        %v6998 = vunpack.c.l.b16 %v6838
        %v6999 = vunpack.c.l.b16 %v6839
        %v7000 = vunpack.c.l.b16 %v6840
        %v7001 = vunpack.c.l.b16 %v6841
        %v7002 = vunpack.c.l.b16 %v6842
        %v7003 = vunpack.c.l.b16 %v6843
        %v7004 = vunpack.c.l.b16 %v6844
        %v7005 = vunpack.c.l.b16 %v6845
        %v7006 = vunpack.c.l.b16 %v6846
        %v7007 = vunpack.c.l.b16 %v6847
        %v7008 = vunpack.c.l.b16 %v6848
        %v7009 = vunpack.c.l.b16 %v6849
        %v7010 = vunpack.c.l.b16 %v6850
        %v7011 = vunpack.c.l.b16 %v6851
        %v7012 = vunpack.c.l.b16 %v6852
        %v7013 = vunpack.c.l.b16 %v6853
        %v7014 = vunpack.c.l.b16 %v6854
        %v7015 = vunpack.c.l.b16 %v6855
        %v7016 = vunpack.c.l.b16 %v6856
        %v7017 = vunpack.c.l.b16 %v6857
        %v7018 = vunpack.c.l.b16 %v6858
        %v7019 = vunpack.c.l.b16 %v6859
        %v7020 = vunpack.c.l.b16 %v6860
        %v7021 = vunpack.c.l.b16 %v6861
        %v7022 = vunpack.c.l.b16 %v6862
        %v7023 = vunpack.c.l.b16 %v6863
        %v7024 = vunpack.c.l.b16 %v6864
        %v7025 = vunpack.c.l.b16 %v6865
        %v7026 = vunpack.c.l.b16 %v6866
        %v7027 = vunpack.c.l.b16 %v6867
        %v7028 = vunpack.c.l.b16 %v6868
        %v7029 = vunpack.c.l.b16 %v6869
        %v7030 = vunpack.c.l.b16 %v6870
        %v7031 = vunpack.c.l.b16 %v6871
        %v7032 = vunpack.c.l.b16 %v6872
        %v7033 = vunpack.c.l.b16 %v6873
        %v7034 = vunpack.c.l.b16 %v6874
        %v7035 = vunpack.c.l.b16 %v6875
        %v7036 = vunpack.c.l.b16 %v6876
        %v7037 = vunpack.c.l.b16 %v6877
        %v7038 = vunpack.c.l.b16 %v6878
        %v7039 = vunpack.c.l.b16 %v6879
        %v7040 = vunpack.c.l.b16 %v6880
        %v7041 = vunpack.c.l.b16 %v6881
        %v7042 = vunpack.c.l.b16 %v6882
        %v7043 = vunpack.c.l.b16 %v6883
        %v7044 = vunpack.c.l.b16 %v6884
        %v7045 = vunpack.c.l.b16 %v6885
        %v7046 = vunpack.c.l.b16 %v6886
        %v7047 = vunpack.c.l.b16 %v6887
        %v7048 = vunpack.c.l.b16 %v6888
        %v7049 = vunpack.c.l.b16 %v6889
        %v7050 = vunpack.c.l.b16 %v6890
        %v7051 = vunpack.c.l.b16 %v6891
        %v7052 = vunpack.c.l.b16 %v6892
        %v7053 = vunpack.c.l.b16 %v6893
        %v7054 = vunpack.c.l.b16 %v6894
        %v7055 = vunpack.c.l.b16 %v6895
        %v7056 = vunpack.c.l.b16 %v6896
        %v7057 = vpack.c.b16 %v6978, %v6977
        %v7058 = vpack.c.b16 %v6980, %v6979
        %v7059 = vpack.c.b16 %v6982, %v6981
        %v7060 = vpack.c.b16 %v6984, %v6983
        %v7061 = vpack.c.b16 %v6986, %v6985
        %v7062 = vpack.c.b16 %v6988, %v6987
        %v7063 = vpack.c.b16 %v6990, %v6989
        %v7064 = vpack.c.b16 %v6992, %v6991
        %v7065 = vpack.c.b16 %v6994, %v6993
        %v7066 = vpack.c.b16 %v6996, %v6995
        %v7067 = vpack.c.b16 %v6998, %v6997
        %v7068 = vpack.c.b16 %v7000, %v6999
        %v7069 = vpack.c.b16 %v7002, %v7001
        %v7070 = vpack.c.b16 %v7004, %v7003
        %v7071 = vpack.c.b16 %v7006, %v7005
        %v7072 = vpack.c.b16 %v7008, %v7007
        %v7073 = vpack.c.b16 %v7010, %v7009
        %v7074 = vpack.c.b16 %v7012, %v7011
        %v7075 = vpack.c.b16 %v7014, %v7013
        %v7076 = vpack.c.b16 %v7016, %v7015
        %v7077 = vpack.c.b16 %v7018, %v7017
        %v7078 = vpack.c.b16 %v7020, %v7019
        %v7079 = vpack.c.b16 %v7022, %v7021
        %v7080 = vpack.c.b16 %v7024, %v7023
        %v7081 = vpack.c.b16 %v7026, %v7025
        %v7082 = vpack.c.b16 %v7028, %v7027
        %v7083 = vpack.c.b16 %v7030, %v7029
        %v7084 = vpack.c.b16 %v7032, %v7031
        %v7085 = vpack.c.b16 %v7034, %v7033
        %v7086 = vpack.c.b16 %v7036, %v7035
        %v7087 = vpack.c.b16 %v7038, %v7037
        %v7088 = vpack.c.b16 %v7040, %v7039
        %v7089 = vpack.c.b16 %v7042, %v7041
        %v7090 = vpack.c.b16 %v7044, %v7043
        %v7091 = vpack.c.b16 %v7046, %v7045
        %v7092 = vpack.c.b16 %v7048, %v7047
        %v7093 = vpack.c.b16 %v7050, %v7049
        %v7094 = vpack.c.b16 %v7052, %v7051
        %v7095 = vpack.c.b16 %v7054, %v7053
        %v7096 = vpack.c.b16 %v7056, %v7055
        %7137 = vmatprep.subr.bf16.mxu0 0
        %7138 = vmatpush1.bf16.msra.mxu0 %v7064
        %7139 = vmatprep.subr.bf16.mxu0 0
        %7140 = vmatpush1.bf16.msra.mxu0 %v7063
        %7141 = vmatprep.subr.bf16.mxu0 0
        %7142 = vmatpush1.bf16.msra.mxu0 %v7062
        %7143 = vmatprep.subr.bf16.mxu0 0
        %7144 = vmatpush1.bf16.msra.mxu0 %v7061
        %7145 = vmatprep.subr.bf16.mxu0 0
        %7146 = vmatpush1.bf16.msra.mxu0 %v7060
        %7147 = vmatprep.subr.bf16.mxu0 0
        %7148 = vmatpush1.bf16.msra.mxu0 %v7059
        %7149 = vmatprep.subr.bf16.mxu0 0
        %7150 = vmatpush1.bf16.msra.mxu0 %v7058
        %7151 = vmatprep.subr.bf16.mxu0 0
        %7152 = vmatpush1.bf16.msra.mxu0 %v7057
        %7153 = vmatprep.subr.bf16.mxu0 0
        %7154 = vmatpush2.bf16.msra.mxu0 %v7072
        %7155 = vmatprep.subr.bf16.mxu0 0
        %7156 = vmatpush2.bf16.msra.mxu0 %v7071
        %7157 = vmatprep.subr.bf16.mxu0 0
        %7158 = vmatpush2.bf16.msra.mxu0 %v7070
        %7159 = vmatprep.subr.bf16.mxu0 0
        %7160 = vmatpush2.bf16.msra.mxu0 %v7069
        %7161 = vmatprep.subr.bf16.mxu0 0
        %7162 = vmatpush2.bf16.msra.mxu0 %v7068
        %7163 = vmatprep.subr.bf16.mxu0 0
        %7164 = vmatpush2.bf16.msra.mxu0 %v7067
        %7165 = vmatprep.subr.bf16.mxu0 0
        %7166 = vmatpush2.bf16.msra.mxu0 %v7066
        %7167 = vmatprep.subr.bf16.mxu0 0
        %7168 = vmatpush2.bf16.msra.mxu0 %v7065
        %7169 = vmatprep.mubr.bf16.mxu0 %v6813
        %7170 = vmatmul.mubr.bf16.gmra.mxu0 %v6812
        %v7171 = vpop.f32.mrf.mxu0
        %v7172 = vadd.f32 0.0, %v7171
        %v7173 = vpop.f32.mrf.mxu0
        %v7174 = vpop.f32.mrf.mxu0
        %v7175 = vpop.f32.mrf.mxu0
        %7176 = vdwg.mxu0
        %7177 = vmatprep.subr.bf16.mxu0 0
        %7178 = vmatpush1.bf16.msra.mxu0 %v7080
        %7179 = vmatprep.subr.bf16.mxu0 0
        %7180 = vmatpush1.bf16.msra.mxu0 %v7079
        %7181 = vmatprep.subr.bf16.mxu0 0
        %7182 = vmatpush1.bf16.msra.mxu0 %v7078
        %7183 = vmatprep.subr.bf16.mxu0 0
        %7184 = vmatpush1.bf16.msra.mxu0 %v7077
        %7185 = vmatprep.subr.bf16.mxu0 0
        %7186 = vmatpush1.bf16.msra.mxu0 %v7076
        %7187 = vmatprep.subr.bf16.mxu0 0
        %7188 = vmatpush1.bf16.msra.mxu0 %v7075
        %7189 = vmatprep.subr.bf16.mxu0 0
        %7190 = vmatpush1.bf16.msra.mxu0 %v7074
        %7191 = vmatprep.subr.bf16.mxu0 0
        %7192 = vmatpush1.bf16.msra.mxu0 %v7073
        %7193 = vmatprep.subr.bf16.mxu0 0
        %7194 = vmatpush2.bf16.msra.mxu0 %v7088
        %7195 = vmatprep.subr.bf16.mxu0 0
        %7196 = vmatpush2.bf16.msra.mxu0 %v7087
        %7197 = vmatprep.subr.bf16.mxu0 0
        %7198 = vmatpush2.bf16.msra.mxu0 %v7086
        %7199 = vmatprep.subr.bf16.mxu0 0
        %7200 = vmatpush2.bf16.msra.mxu0 %v7085
        %7201 = vmatprep.subr.bf16.mxu0 0
        %7202 = vmatpush2.bf16.msra.mxu0 %v7084
        %7203 = vmatprep.subr.bf16.mxu0 0
        %7204 = vmatpush2.bf16.msra.mxu0 %v7083
        %7205 = vmatprep.subr.bf16.mxu0 0
        %7206 = vmatpush2.bf16.msra.mxu0 %v7082
        %7207 = vmatprep.subr.bf16.mxu0 0
        %7208 = vmatpush2.bf16.msra.mxu0 %v7081
        %7209 = vmatprep.mubr.bf16.mxu0 %v6815
        %7210 = vmatmul.mubr.bf16.gmra.mxu0 %v6814
        %v7211 = vpop.f32.mrf.mxu0
        %v7212 = vadd.f32 %v7172, %v7211
        %v7213 = vpop.f32.mrf.mxu0
        %v7214 = vpop.f32.mrf.mxu0
        %v7215 = vpop.f32.mrf.mxu0
        %7216 = vdwg.mxu0
        %7217 = vmatprep.subr.bf16.mxu0 0
        %7218 = vmatpush1.bf16.msra.mxu0 %v7096
        %7219 = vmatprep.subr.bf16.mxu0 0
        %7220 = vmatpush1.bf16.msra.mxu0 %v7095
        %7221 = vmatprep.subr.bf16.mxu0 0
        %7222 = vmatpush1.bf16.msra.mxu0 %v7094
        %7223 = vmatprep.subr.bf16.mxu0 0
        %7224 = vmatpush1.bf16.msra.mxu0 %v7093
        %7225 = vmatprep.subr.bf16.mxu0 0
        %7226 = vmatpush1.bf16.msra.mxu0 %v7092
        %7227 = vmatprep.subr.bf16.mxu0 0
        %7228 = vmatpush1.bf16.msra.mxu0 %v7091
        %7229 = vmatprep.subr.bf16.mxu0 0
        %7230 = vmatpush1.bf16.msra.mxu0 %v7090
        %7231 = vmatprep.subr.bf16.mxu0 0
        %7232 = vmatpush1.bf16.msra.mxu0 %v7089
        %7233 = vmatprep.subr.bf16.mxu0 0
        %7234 = vmatpush2.bf16.msra.mxu0 0
        %7235 = vmatprep.subr.bf16.mxu0 0
        %7236 = vmatpush2.bf16.msra.mxu0 0
        %7237 = vmatprep.subr.bf16.mxu0 0
        %7238 = vmatpush2.bf16.msra.mxu0 0
        %7239 = vmatprep.subr.bf16.mxu0 0
        %7240 = vmatpush2.bf16.msra.mxu0 0
        %7241 = vmatprep.subr.bf16.mxu0 0
        %7242 = vmatpush2.bf16.msra.mxu0 0
        %7243 = vmatprep.subr.bf16.mxu0 0
        %7244 = vmatpush2.bf16.msra.mxu0 0
        %7245 = vmatprep.subr.bf16.mxu0 0
        %7246 = vmatpush2.bf16.msra.mxu0 0
        %7247 = vmatprep.subr.bf16.mxu0 0
        %7248 = vmatpush2.bf16.msra.mxu0 0
        %7249 = vmatprep.mubr.bf16.mxu0 0
        %7250 = vmatmul.mubr.bf16.gmra.mxu0 %v6816
        %v7251 = vpop.f32.mrf.mxu0
        %v7252 = vadd.f32 %v7212, %v7251
        %v7253 = vpop.f32.mrf.mxu0
        %v7254 = vpop.f32.mrf.mxu0
        %v7255 = vpop.f32.mrf.mxu0
        %7256 = vdwg.mxu0
        %7257 = vst [vmem:[%s290] sm:$0x3] %v7252
        %p7258 = scmp.lt.s32.totalorder %s21, 1
        %s7259 = scalar_select %p7258, %s21, 1
        %s7260 = smul.addr %s7259, 2
        %s7261 = scalar_lea.vmem %s4, %s7260
        // Predicated region
        $region49: #{ecg_classifier.1} parent=35 // pred_check
          %p7262 = pneg %p138
        $region50: #{ecg_classifier.1} parent=35 // pred_check_branch
          %7264 = sbr.rel (%p7262) target = $region52
        $region51: #{ecg_classifier.1} parent=35 // pred_region
          _
        $region52: #{ecg_classifier.1} parent=35 // pred_fallthru
          _
      $region36: #{ecg_classifier.1} parent=5 // pred_fallthru
        _
      %p7265 = scmp.le.s32.totalorder 2, %s16
      // Predicated region
      $region53: #{ecg_classifier.1} parent=5 // pred_check
        %p7266 = pneg %p7265
      $region54: #{ecg_classifier.1} parent=5 // pred_check_branch
        %7268 = sbr.rel (%p7266) target = $region56
      $region55: #{ecg_classifier.1} parent=5 // pred_region
        %s7269 = ssub.s32 %s16, 2
        // Predicated region
        $region57: #{ecg_classifier.1} parent=55 // pred_check
          %p7270 = pneg %p144
        $region58: #{ecg_classifier.1} parent=55 // pred_check_branch
          %7272 = sbr.rel (%p7270) target = $region60
        $region59: #{ecg_classifier.1} parent=55 // pred_region
          %p7273 = scmp.lt.s32.totalorder %s22, 1
          %s7274 = scalar_select %p7273, %s22, 1
          %s7275 = smul.addr %s7274, 2
          %s7276 = scalar_lea.vmem %s4, %s7275
        $region60: #{ecg_classifier.1} parent=55 // pred_fallthru
          _
      $region56: #{ecg_classifier.1} parent=5 // pred_fallthru
        _
    $region6: #{ecg_classifier.1} parent=1 // loop_footer
      %s20 = sadd.s32 1, %s16
    $region7: #{ecg_classifier.1} parent=1 // loop_footer_branch
      %15 = sbr.rel target = $region3
    $region8: #{ecg_classifier.1} parent=1 // loop_exit
      _
    %7277 = vsyncpa [#allocation3], 1
    %s7278 = scalar_lea.sflag [#allocation3], 1
    %7279 = vsyncpa %s7278, 1
    %7280 = vsyncpa [#allocation5], 1
    %s7281 = scalar_lea.sflag [#allocation5], 1
    %7282 = vsyncpa %s7281, 1

</llo_original>
